<compile_context>
chip_gen: v7x
topology: tpu7x:2x2x1
jax: 0.10.0
libtpu: 0.0.40
codegen_flags: <defaults>
</compile_context>

<pallas_src>
import functools
import numpy as np

import jax
import jax.numpy as jnp
from jax.experimental import pallas as pl
from jax.experimental.pallas import tpu as pltpu

PROJ_DIM = 32
PROJ_PAD = 128          # lane-dense padded projection width (cols >= PROJ_DIM are zero)
HIDDEN = 512
NUM_ANCHORS = 10
TEMPERATURE = 0.5

_VMEM_LIMIT = 32 * 1024 * 1024   # explicit scoped-VMEM budget, safe on v5e/v6e/v7x


# ----------------------------------------------------------------------------
# Pallas kernel 1: fused (x @ W + b) [+ ReLU], tiled over M and N (bf16 MXU).
# ----------------------------------------------------------------------------
def _linear_kernel(x_ref, w_ref, b_ref, o_ref, *, relu):
    x = x_ref[...].astype(jnp.bfloat16)                     # bf16 MXU operands
    acc = jnp.dot(x, w_ref[...], preferred_element_type=jnp.float32)
    acc = acc + b_ref[...]                                  # f32 epilogue (v5e-safe)
    if relu:
        acc = jnp.maximum(acc, 0.0)
    o_ref[...] = acc.astype(o_ref.dtype)


def _pick_tile(m, cap):
    if m <= cap:
        return m
    for t in (cap, 256, 128, 64, 32, 16, 8):
        if t <= cap and m % t == 0:
            return t
    return m   # fallback: whole dim resident


def linear(x, w_bf16, b, relu=False):
    """y = x @ w + b (optionally ReLU).  x:(M,K) f32, w:(K,N) bf16, b:(N,) f32."""
    M, K = x.shape
    N = w_bf16.shape[1]
    tm = _pick_tile(M, 512)
    tn = _pick_tile(N, 512)
    grid = (M // tm, N // tn)
    b2 = b.reshape(1, N).astype(jnp.float32)
    return pl.pallas_call(
        functools.partial(_linear_kernel, relu=relu),
        out_shape=jax.ShapeDtypeStruct((M, N), jnp.float32),
        grid=grid,
        in_specs=[
            pl.BlockSpec((tm, K), lambda i, j: (i, 0)),
            pl.BlockSpec((K, tn), lambda i, j: (0, j)),
            pl.BlockSpec((1, tn), lambda i, j: (0, j)),
        ],
        out_specs=pl.BlockSpec((tm, tn), lambda i, j: (i, j)),
        compiler_params=pltpu.CompilerParams(
            dimension_semantics=("parallel", "parallel"),
            vmem_limit_bytes=_VMEM_LIMIT,
        ),
    )(x.astype(jnp.float32), w_bf16, b2)


# ----------------------------------------------------------------------------
# Pallas kernel 2: fused 2-layer MLP / 1x1-conv proj head
#   y = relu(x @ w1 + b1) @ w2 + b2, intermediate kept in VMEM scratch.
# ----------------------------------------------------------------------------
def _mlp2_kernel(x_ref, w1_ref, b1_ref, w2_ref, b2_ref, o_ref, h_ref):
    x = x_ref[...].astype(jnp.bfloat16)
    h = jnp.dot(x, w1_ref[...], preferred_element_type=jnp.float32) + b1_ref[...]
    h_ref[...] = jnp.maximum(h, 0.0)                        # (tm, H) f32, stays in VMEM
    o = jnp.dot(h_ref[...].astype(jnp.bfloat16), w2_ref[...],
                preferred_element_type=jnp.float32) + b2_ref[...]
    o_ref[...] = o.astype(o_ref.dtype)


def mlp_head(x, w1, b1, w2, b2, tm=256):
    """x:(M,K) f32 -> relu(x@w1+b1) @ w2 + b2 in one pallas_call (grid over M)."""
    M, K = x.shape
    H = w1.shape[1]
    N = w2.shape[1]
    m_pad = ((M + tm - 1) // tm) * tm
    if m_pad != M:
        x = jnp.pad(x, ((0, m_pad - M), (0, 0)))
    out = pl.pallas_call(
        _mlp2_kernel,
        out_shape=jax.ShapeDtypeStruct((m_pad, N), jnp.float32),
        grid=(m_pad // tm,),
        in_specs=[
            pl.BlockSpec((tm, K), lambda i: (i, 0)),
            pl.BlockSpec((K, H), lambda i: (0, 0)),
            pl.BlockSpec((1, H), lambda i: (0, 0)),
            pl.BlockSpec((H, N), lambda i: (0, 0)),
            pl.BlockSpec((1, N), lambda i: (0, 0)),
        ],
        out_specs=pl.BlockSpec((tm, N), lambda i: (i, 0)),
        scratch_shapes=[pltpu.VMEM((tm, H), jnp.float32)],
        compiler_params=pltpu.CompilerParams(
            dimension_semantics=("parallel",),
            vmem_limit_bytes=_VMEM_LIMIT,
        ),
    )(x.astype(jnp.float32), w1, b1.reshape(1, H).astype(jnp.float32),
      w2, b2.reshape(1, N).astype(jnp.float32))
    return out[:M] if m_pad != M else out


# ----------------------------------------------------------------------------
# Pallas kernel 3: fused AdaptiveAvgPool + Linear(2048,512) + ReLU + Linear(512,D)
# ----------------------------------------------------------------------------
def _pool_mlp_kernel(x_ref, w1_ref, b1_ref, w2_ref, b2_ref, o_ref):
    pooled = jnp.mean(x_ref[...], axis=1)                   # (B, P, K) -> (B, K), f32
    h = jnp.dot(pooled.astype(jnp.bfloat16), w1_ref[...],
                preferred_element_type=jnp.float32) + b1_ref[...]
    h = jnp.maximum(h, 0.0)
    o = jnp.dot(h.astype(jnp.bfloat16), w2_ref[...],
                preferred_element_type=jnp.float32) + b2_ref[...]
    o_ref[...] = o.astype(o_ref.dtype)


def pool_mlp_head(feat, w1, b1, w2, b2):
    """feat:(B,P,2048) -> mean over P -> fc1 -> ReLU -> fc2, one pallas_call."""
    B, P, K = feat.shape
    H = w1.shape[1]
    N = w2.shape[1]
    return pl.pallas_call(
        _pool_mlp_kernel,
        out_shape=jax.ShapeDtypeStruct((B, N), jnp.float32),
        compiler_params=pltpu.CompilerParams(vmem_limit_bytes=_VMEM_LIMIT),
    )(feat.astype(jnp.float32), w1, b1.reshape(1, H).astype(jnp.float32),
      w2, b2.reshape(1, N).astype(jnp.float32))


# ----------------------------------------------------------------------------
# Pallas kernel 4: normalization + similarity map + anchor-based NT-Xent loss.
# Inputs are zero-padded to PROJ_PAD lanes (padding does not affect norms/dots);
# all math stays f32 (v5e-safe), loss returned as a lane-dense (1,128) row.
# ----------------------------------------------------------------------------
def _sim_loss_kernel(zi_ref, zj_ref, za_ref, loss_ref, sim_ref, *, temperature):
    eps = jnp.float32(1e-12)
    inv_t = jnp.float32(1.0 / temperature)

    zi = zi_ref[...]                                        # (B, Dp) f32
    zj = zj_ref[...]
    za = za_ref[...]                                        # (B, A, Dp) f32
    B = zi.shape[0]

    zin = zi / jnp.maximum(jnp.sqrt(jnp.sum(zi * zi, axis=1, keepdims=True)), eps)
    zjn = zj / jnp.maximum(jnp.sqrt(jnp.sum(zj * zj, axis=1, keepdims=True)), eps)
    zan = za / jnp.maximum(jnp.sqrt(jnp.sum(za * za, axis=2, keepdims=True)), eps)

    # similarity_map = sum over dim=1 of z_i_norm.unsqueeze(2)*z_j_norm.unsqueeze(1)
    #                = (sum_d z_i_norm[b,d]) * z_j_norm[b,:]
    sim_ref[...] = (jnp.sum(zin, axis=1, keepdims=True) * zjn).astype(sim_ref.dtype)

    pos = jnp.sum(zin * zjn, axis=1, keepdims=True) * inv_t                  # (B, 1)
    inter = jax.lax.dot_general(
        zin, zjn, (((1,), (1,)), ((), ())), preferred_element_type=jnp.float32
    ) * inv_t                                                                # (B, B)
    row = jax.lax.broadcasted_iota(jnp.int32, (B, B), 0)
    col = jax.lax.broadcasted_iota(jnp.int32, (B, B), 1)
    inter_m = jnp.where(row == col, jnp.float32(-1e30), inter)
    # TODO(synk): at larger B/A this broadcast+reduce should become a batched dot_general.
    anch = jnp.sum(zin[:, None, :] * zan, axis=2) * inv_t                    # (B, A)

    # cross-entropy with label 0 (the positive), via stable logsumexp
    m = jnp.maximum(
        pos,
        jnp.maximum(jnp.max(inter_m, axis=1, keepdims=True),
                    jnp.max(anch, axis=1, keepdims=True)),
    )
    sumexp = (jnp.exp(pos - m)
              + jnp.sum(jnp.exp(inter_m - m), axis=1, keepdims=True)
              + jnp.sum(jnp.exp(anch - m), axis=1, keepdims=True))
    loss_b = jnp.log(sumexp) + m - pos                                       # (B, 1)
    loss_row = jnp.sum(loss_b, axis=0, keepdims=True) / jnp.float32(B)       # (1, 1)
    loss_ref[...] = jnp.broadcast_to(loss_row, loss_ref.shape)               # lane-dense store


def sim_loss(z_i, z_j, z_a, temperature=TEMPERATURE):
    B, Dp = z_i.shape
    loss_pad, sim_pad = pl.pallas_call(
        functools.partial(_sim_loss_kernel, temperature=temperature),
        out_shape=(
            jax.ShapeDtypeStruct((1, 128), jnp.float32),
            jax.ShapeDtypeStruct((B, Dp), jnp.float32),
        ),
        compiler_params=pltpu.CompilerParams(vmem_limit_bytes=_VMEM_LIMIT),
    )(z_i.astype(jnp.float32), z_j.astype(jnp.float32), z_a.astype(jnp.float32))
    return loss_pad[0, 0], sim_pad


# ----------------------------------------------------------------------------
# Parameters (deterministic init).  MXU weights stored as bf16; the PROJ_DIM
# output matrices are zero-padded to PROJ_PAD columns for lane-dense stores.
# ----------------------------------------------------------------------------
def init_params(key):
    ks = jax.random.split(key, 8)

    def w(k, shape, scale=0.02):
        return (scale * jax.random.normal(k, shape, jnp.float32)).astype(jnp.bfloat16)

    def w_out(k, in_dim, scale=0.02):
        real = scale * jax.random.normal(k, (in_dim, PROJ_DIM), jnp.float32)
        return jnp.pad(real, ((0, 0), (0, PROJ_PAD - PROJ_DIM))).astype(jnp.bfloat16)

    return {
        # pipeline1: ResNet50 backbone stand-in (stride 32, 2048ch) + projection MLP
        "p1_backbone_w": w(ks[0], (32 * 32 * 3, 2048)),
        "p1_backbone_b": jnp.zeros((2048,), jnp.float32),
        "p1_fc1_w": w(ks[1], (2048, HIDDEN)),
        "p1_fc1_b": jnp.zeros((HIDDEN,), jnp.float32),
        "p1_fc2_w": w_out(ks[2], HIDDEN),
        "p1_fc2_b": jnp.zeros((PROJ_PAD,), jnp.float32),
        # pipeline2: FPN stand-in (stride-4 patch embed, 256ch) + 1x1-conv proj head
        "p2_fpn_w": w(ks[3], (4 * 4 * 3, 256)),
        "p2_fpn_b": jnp.zeros((256,), jnp.float32),
        "p2_ph1_w": w(ks[4], (256, HIDDEN)),
        "p2_ph1_b": jnp.zeros((HIDDEN,), jnp.float32),
        "p2_ph2_w": w_out(ks[5], HIDDEN),
        "p2_ph2_b": jnp.zeros((PROJ_PAD,), jnp.float32),
    }


# ----------------------------------------------------------------------------
# Pipeline 1: ResNetEncoder  (backbone stand-in -> fused avgpool+MLP head)
# ----------------------------------------------------------------------------
def _patchify(x_nhwc, p):
    B, H, W, C = x_nhwc.shape
    x = x_nhwc.reshape(B, H // p, p, W // p, p, C)
    x = x.transpose(0, 1, 3, 2, 4, 5)
    return x.reshape(B * (H // p) * (W // p), p * p * C)


def resnet_encoder(params, x_nhwc):
    B, H, W, C = x_nhwc.shape
    p = 32
    patches = _patchify(x_nhwc, p)                                     # (B*h*w, 3072)
    feat = linear(patches, params["p1_backbone_w"], params["p1_backbone_b"], relu=True)
    feat = feat.reshape(B, (H // p) * (W // p), 2048)
    # AdaptiveAvgPool2d((1,1)) + Flatten + Linear + ReLU + Linear, fused in one kernel
    z = pool_mlp_head(feat, params["p1_fc1_w"], params["p1_fc1_b"],
                      params["p1_fc2_w"], params["p1_fc2_b"])          # (B, PROJ_PAD)
    return z


# ----------------------------------------------------------------------------
# Pipeline 2: FPNEncoder (FPN stand-in -> fused proj_head -> pos/neg sampling)
# ----------------------------------------------------------------------------
def fpn_backbone_levels(params, x_nhwc):
    B, H, W, C = x_nhwc.shape
    patches = _patchify(x_nhwc, 4)                                     # stride-4 level
    f0 = linear(patches, params["p2_fpn_w"], params["p2_fpn_b"], relu=True)
    f0 = f0.reshape(B, H // 4, W // 4, 256)
    levels = [f0]
    f = f0
    for _ in range(4):                                                 # strides 8,16,32,64
        b, h, w, c = f.shape
        f = f.reshape(b, h // 2, 2, w // 2, 2, c).mean(axis=(2, 4))
        levels.append(f)
    return levels


def _sample_indices(level_shapes, row_offsets, crop_coords, img_w, B):
    """Host-side pos/neg flat-row indices.  Depends only on crop_coords and the
    static level geometry, so no device feature maps are synced to the host."""
    pos_idx, neg_idx = [], []
    cc = np.asarray(crop_coords, dtype=np.float64)
    for li, (h, w) in enumerate(level_shapes):
        gy, gx = np.meshgrid(np.arange(h, dtype=np.float64),
                             np.arange(w, dtype=np.float64), indexing="ij")
        scale = img_w / h                                              # matches torch: x.shape[-1] / h
        gxs, gys = gx * scale, gy * scale
        for b in range(B):
            y, x_coord, h_crop, w_crop = cc[b]
            cx = x_coord + w_crop / 2.0
            cy = y + h_crop / 2.0
            dist = (gxs - cx) ** 2 + (gys - cy) ** 2
            idx = int(np.argmin(dist.reshape(-1)))
            py, px = idx // w, idx % w
            base = row_offsets[li] + b * h * w
            pos_idx.append(base + py * w + px)

            thr = dist[py, px] * 2.0
            valid = np.argwhere(dist > thr)                            # (n, 2) rows of (y, x)
            if len(valid) == 0:
                # TODO(synk): torch.randint over an empty index set would raise; fall back to all cells.
                valid = np.argwhere(dist >= 0)
            rng = np.random.default_rng(1000 * li + b)                 # deterministic stand-in for torch RNG
            if len(valid) >= NUM_ANCHORS:
                sel = rng.permutation(len(valid))[:NUM_ANCHORS]
            else:
                sel = rng.integers(0, len(valid), size=NUM_ANCHORS)
            for s in sel:
                ny, nx = valid[s]
                neg_idx.append(base + int(ny) * w + int(nx))
    return np.asarray(pos_idx, np.int32), np.asarray(neg_idx, np.int32)


def fpn_encoder_forward(params, x_nhwc, crop_coords):
    B, H, W, _ = x_nhwc.shape
    levels = fpn_backbone_levels(params, x_nhwc)
    level_shapes = [(lv.shape[1], lv.shape[2]) for lv in levels]
    sizes = [B * h * w for (h, w) in level_shapes]
    row_offsets = [0]
    for s in sizes[:-1]:
        row_offsets.append(row_offsets[-1] + s)

    # One fused, lane-dense proj-head pass over ALL levels' pixels at once.
    slab = jnp.concatenate([lv.reshape(-1, 256) for lv in levels], axis=0)   # (sum_l B*H*W, 256)
    proj = mlp_head(slab, params["p2_ph1_w"], params["p2_ph1_b"],
                    params["p2_ph2_w"], params["p2_ph2_b"])                  # (sum, PROJ_PAD)

    # Per-level projected feature maps (output parity), padded channels sliced away.
    reduced_fpn = []
    for (h, w), off, sz in zip(level_shapes, row_offsets, sizes):
        reduced_fpn.append(proj[off:off + sz, :PROJ_DIM].reshape(B, h, w, PROJ_DIM))

    # Host-side index selection (crop_coords only), device-side gather of D-wide rows.
    pos_idx, neg_idx = _sample_indices(level_shapes, row_offsets, crop_coords, W, B)
    pos = jnp.take(proj, jnp.asarray(pos_idx), axis=0)                       # (L*B, PROJ_PAD)
    neg = jnp.take(proj, jnp.asarray(neg_idx), axis=0)                       # (L*B*A, PROJ_PAD)

    z_j = jnp.mean(pos.reshape(B, -1, PROJ_PAD), axis=1)                     # same .view as torch
    z_a = jnp.mean(neg.reshape(B, -1, NUM_ANCHORS, PROJ_PAD), axis=1)        # (B, A, PROJ_PAD)
    return z_j, z_a, reduced_fpn


# ----------------------------------------------------------------------------
# UnsupervisedDetector training-mode forward
# ----------------------------------------------------------------------------
def unsupervised_detector_forward(params, batch):
    x_i = jnp.transpose(batch["image_crop"], (0, 2, 3, 1))             # NCHW -> NHWC
    x_j = jnp.transpose(batch["image_original"], (0, 2, 3, 1))

    z_i = resnet_encoder(params, x_i)                                  # pipeline 1, (B, PROJ_PAD)
    z_j, z_a, fpn_feats = fpn_encoder_forward(params, x_j, batch["crop_coords"])

    loss, sim_pad = sim_loss(z_i, z_j, z_a)                            # Pallas loss kernel
    fpn_feats = [jnp.transpose(f, (0, 3, 1, 2)) for f in fpn_feats]    # back to NCHW for parity

    return {
        "loss": loss,
        "similarity_map": sim_pad[:, :PROJ_DIM],                       # (B, PROJ_DIM)
        "fpn_features": fpn_feats,
        "resnet_features": z_i[:, :PROJ_DIM],
    }


if __name__ == "__main__":
    key = jax.random.PRNGKey(0)
    pkey, k1, k2 = jax.random.split(key, 3)
    params = init_params(pkey)

    batch = {
        "image_crop": jax.random.normal(k1, (2, 3, 64, 64), jnp.float32),        # NCHW
        "image_original": jax.random.normal(k2, (2, 3, 128, 128), jnp.float32),   # NCHW
        "crop_coords": jnp.array([[20.0, 30.0, 40.0, 50.0],
                                  [60.0, 10.0, 30.0, 30.0]], jnp.float32),        # (y, x, h, w)
    }

    out = unsupervised_detector_forward(params, batch)
    out = jax.block_until_ready(out)
    assert out["loss"].shape == ()
    assert out["similarity_map"].shape == (2, PROJ_DIM)
    assert out["resnet_features"].shape == (2, PROJ_DIM)
    assert len(out["fpn_features"]) == 5
    assert out["fpn_features"][0].shape == (2, PROJ_DIM, 32, 32)
    print("KERNEL_OK")
</pallas_src>

<mosaic_0001>
module attributes {stable_mosaic.version = 11 : i64} {
  func.func @_linear_kernel(%arg0: i32, %arg1: i32, %arg2: memref<8x3072xf32, #tpu.memory_space<vmem>>, %arg3: memref<3072x512xbf16, #tpu.memory_space<vmem>>, %arg4: memref<1x512xf32, #tpu.memory_space<vmem>>, %arg5: memref<8x512xf32, #tpu.memory_space<vmem>>) attributes {dimension_semantics = [#tpu.dimension_semantics<parallel>, #tpu.dimension_semantics<parallel>], iteration_bounds = array<i64: 1, 4>, scalar_prefetch = 0 : i64, scratch_operands = 0 : i64, tpu.core_type = #tpu.core_type<tc>, window_params = [{transform_indices = @transform_0, window_bounds = array<i64: 8, 3072>}, {transform_indices = @transform_1, window_bounds = array<i64: 3072, 512>}, {transform_indices = @transform_2, window_bounds = array<i64: 1, 512>}, {transform_indices = @transform_3, window_bounds = array<i64: 8, 512>}]} {
    %c0 = arith.constant 0 : index
    %c0_0 = arith.constant 0 : index
    %0 = vector.load %arg2[%c0, %c0_0] : memref<8x3072xf32, #tpu.memory_space<vmem>>, vector<8x3072xf32>
    %1 = arith.truncf %0 : vector<8x3072xf32> to vector<8x3072xbf16>
    %c0_1 = arith.constant 0 : index
    %c0_2 = arith.constant 0 : index
    %2 = vector.load %arg3[%c0_1, %c0_2] : memref<3072x512xbf16, #tpu.memory_space<vmem>>, vector<3072x512xbf16>
    %cst = arith.constant dense<0.000000e+00> : vector<8x512xf32>
    %3 = tpu.matmul %1, %2, %cst {dimension_numbers = #tpu.dot_dimension_numbers<[1], [0], [0], [1], [0, 0, 1, 1], [], []>} : vector<8x3072xbf16>, vector<3072x512xbf16>, vector<8x512xf32> -> vector<8x512xf32>
    %c0_3 = arith.constant 0 : index
    %c0_4 = arith.constant 0 : index
    %4 = vector.load %arg4[%c0_3, %c0_4] : memref<1x512xf32, #tpu.memory_space<vmem>>, vector<1x512xf32>
    %5 = vector.broadcast %4 : vector<1x512xf32> to vector<8x512xf32>
    %6 = arith.addf %3, %5 : vector<8x512xf32>
    %cst_5 = arith.constant 0.000000e+00 : f32
    %7 = vector.broadcast %cst_5 : f32 to vector<8x512xf32>
    %8 = arith.maximumf %6, %7 : vector<8x512xf32>
    %c0_6 = arith.constant 0 : index
    %c0_7 = arith.constant 0 : index
    %9 = vector.load %arg5[%c0_6, %c0_7] : memref<8x512xf32, #tpu.memory_space<vmem>>, vector<8x512xf32>
    tpu.vector_store %arg5[%c0_6, %c0_7], %8 {strides = array<i32>} : memref<8x512xf32, #tpu.memory_space<vmem>>, vector<8x512xf32>,
    return
  }
  func.func @transform_0(%arg0: i32, %arg1: i32) -> (i32, i32) {
    %c0_i32 = arith.constant 0 : i32
    %c0_i32_0 = arith.constant 0 : i32
    return %arg0, %c0_i32 : i32, i32
  }
  func.func @transform_1(%arg0: i32, %arg1: i32) -> (i32, i32) {
    %c0_i32 = arith.constant 0 : i32
    %c0_i32_0 = arith.constant 0 : i32
    return %c0_i32, %arg1 : i32, i32
  }
  func.func @transform_2(%arg0: i32, %arg1: i32) -> (i32, i32) {
    %c0_i32 = arith.constant 0 : i32
    %c0_i32_0 = arith.constant 0 : i32
    return %c0_i32, %arg1 : i32, i32
  }
  func.func @transform_3(%arg0: i32, %arg1: i32) -> (i32, i32) {
    %c0_i32 = arith.constant 0 : i32
    return %arg0, %arg1 : i32, i32
  }
}

</mosaic_0001>

<llo_original>
// kernel: tpu_custom_call.1
$region0: #{tpu_custom_call.1}
  #allocation0 [shape = 'u32[]', space=smem, size = 0x4, offset = 0x4, fixed_abs, tag = 'smem constant byte address 0x4 - core index']
  #allocation1 [shape = 'u32[144,128]{1,0:T(1,128)}', space=vmem, size = 0x12000, scoped, tag = 'internal scratch']
  %s0 = inlined_call_operand.hbm [shape: f32[8,3072], index: 0, kind: input, shape index: {}]
  %s1 = inlined_call_operand.hbm [shape: bf16[3072,2048], index: 1, kind: input, shape index: {}]
  %s2 = inlined_call_operand.hbm [shape: f32[1,2048], index: 2, kind: input, shape index: {}]
  %s3 = inlined_call_operand.hbm [shape: f32[8,2048], index: 3, kind: output, shape index: {}]
  %s4 = sld [smem:[#allocation0]]
  $region57: #{tpu_custom_call.1} parent=0
    _
  %s6 = ssub.s32 1, %s4
  %s7 = scalar_select 0, %s6, %s4
  $region1: #{tpu_custom_call.1} parent=0
    #allocation2 [shape = 'u8[98304]{0}', space=vmem, size = 0x18000, scoped, tag = 'input window, operand 0, single buffered']
    #allocation3 [shape = 's32[2]{0}', space=sflag, size = 0x8, scoped, tag = 'scoped memory for tpu_custom_call.1']
    #allocation4 [shape = 's32[2]{0}', space=sflag, size = 0x8, scoped, tag = 'scoped memory for tpu_custom_call.1']
    #allocation5 [shape = 'u8[6291456]{0}', space=vmem, size = 0x600000, scoped, tag = 'input window, operand 1']
    #allocation6 [shape = 's32[2]{0}', space=sflag, size = 0x8, scoped, tag = 'scoped memory for tpu_custom_call.1']
    #allocation7 [shape = 'u8[4096]{0}', space=vmem, size = 0x1000, scoped, tag = 'input window, operand 2']
    #allocation8 [shape = 'u8[32768]{0}', space=vmem, size = 0x8000, scoped, tag = 'output window, operand 0']
    %8 = vsyncpa [#allocation3], 0
    %9 = vsyncpa [#allocation6], 0
    %s10 = scalar_lea.sflag [#allocation6], 1
    %11 = vsyncpa %s10, 0
    %12 = vsyncpa [#allocation4], 0
    %s13 = scalar_lea.sflag [#allocation4], 1
    %14 = vsyncpa %s13, 0
    loop: start=0, step=1, limit=6
    $region2: #{tpu_custom_call.1} parent=1 // loop_pre_header
      _
    $region3: #{tpu_custom_call.1} parent=1 // loop_header
      %s16 = sphi 0, %s20
      %p17 = scmp.ge.s32.totalorder %s16, 6
      %s23 = sphi 0, %s35
      %s24 = sphi 0, %s31
      %s25 = sphi 0, %s23
      %s26 = sphi 0, %s24
      %s27 = sphi 0, %s25
      %s28 = sphi 0, %s26
      %s38 = sphi 0, %s40
      %s41 = sphi 0, %s38
      %s42 = sphi 0, %s41
      %s58 = sphi 0, %s42
      %s64 = sphi 0, %s66
      %s67 = sphi 0, %s64
      %s68 = sphi 0, %s67
      %s84 = sphi 0, %s68
      %s90 = sphi 0, %s92
      %s93 = sphi 0, %s90
      %s94 = sphi 0, %s93
      %s110 = sphi 0, %s94
      %s118 = sphi 0, %s120
      %s121 = sphi 0, %s118
      %s122 = sphi 0, %s121
      %s138 = sphi 0, %s122
    $region4: #{tpu_custom_call.1} parent=1 // loop_header_branch
      %19 = sbr.rel (%p17) target = $region8
    $region5: #{tpu_custom_call.1} parent=1 // loop_body
      %s21 = ssub.s32 %s16, 1
      %s22 = ssub.s32 %s16, 2
      %s29 = sadd.s32 1, %s24
      %p30 = scmp.ge.s32.totalorder %s29, 4
      %s31 = scalar_select %p30, 0, %s29
      %s32 = sadd.s32 1, %s23
      %s33 = scalar_select %p30, %s32, %s23
      %p34 = scmp.ge.s32.totalorder %s33, 1
      %s35 = scalar_select %p34, 0, %s33
      %s36 = ssub.s32 %s23, %s35
      %p37 = scmp.eq.s32.totalorder %s36, 0
      %s39 = sadd.s32 %s38, 1
      %s40 = scalar_select %p37, %s38, %s39
      %p43 = pneg %p37
      %p44 = scmp.eq.s32.totalorder %s16, 3
      %p45 = por %p43, %p44
      %p46 = scmp.ne.s32.totalorder %s38, %s41
      %p47 = scmp.eq.s32.totalorder %s16, 0
      %p48 = por %p46, %p47
      %p49 = scmp.ne.s32.totalorder %s38, %s41
      %p50 = scmp.eq.s32.totalorder %s21, 3
      %p51 = por %p49, %p50
      %p52 = scmp.ne.s32.totalorder %s41, %s42
      %p53 = scmp.eq.s32.totalorder %s21, 0
      %p54 = por %p52, %p53
      %p55 = scmp.ne.s32.totalorder %s41, %s42
      %p56 = scmp.eq.s32.totalorder %s22, 3
      %p57 = por %p55, %p56
      %p59 = scmp.ne.s32.totalorder %s42, %s58
      %p60 = scmp.eq.s32.totalorder %s22, 0
      %p61 = por %p59, %p60
      %s62 = ssub.s32 %s24, %s31
      %p63 = scmp.eq.s32.totalorder %s62, 0
      %s65 = sadd.s32 %s64, 1
      %s66 = scalar_select %p63, %s64, %s65
      %p69 = pneg %p63
      %p70 = scmp.eq.s32.totalorder %s16, 3
      %p71 = por %p69, %p70
      %p72 = scmp.ne.s32.totalorder %s64, %s67
      %p73 = scmp.eq.s32.totalorder %s16, 0
      %p74 = por %p72, %p73
      %p75 = scmp.ne.s32.totalorder %s64, %s67
      %p76 = scmp.eq.s32.totalorder %s21, 3
      %p77 = por %p75, %p76
      %p78 = scmp.ne.s32.totalorder %s67, %s68
      %p79 = scmp.eq.s32.totalorder %s21, 0
      %p80 = por %p78, %p79
      %p81 = scmp.ne.s32.totalorder %s67, %s68
      %p82 = scmp.eq.s32.totalorder %s22, 3
      %p83 = por %p81, %p82
      %p85 = scmp.ne.s32.totalorder %s68, %s84
      %p86 = scmp.eq.s32.totalorder %s22, 0
      %p87 = por %p85, %p86
      %s88 = ssub.s32 %s24, %s31
      %p89 = scmp.eq.s32.totalorder %s88, 0
      %s91 = sadd.s32 %s90, 1
      %s92 = scalar_select %p89, %s90, %s91
      %p95 = pneg %p89
      %p96 = scmp.eq.s32.totalorder %s16, 3
      %p97 = por %p95, %p96
      %p98 = scmp.ne.s32.totalorder %s90, %s93
      %p99 = scmp.eq.s32.totalorder %s16, 0
      %p100 = por %p98, %p99
      %p101 = scmp.ne.s32.totalorder %s90, %s93
      %p102 = scmp.eq.s32.totalorder %s21, 3
      %p103 = por %p101, %p102
      %p104 = scmp.ne.s32.totalorder %s93, %s94
      %p105 = scmp.eq.s32.totalorder %s21, 0
      %p106 = por %p104, %p105
      %p107 = scmp.ne.s32.totalorder %s93, %s94
      %p108 = scmp.eq.s32.totalorder %s22, 3
      %p109 = por %p107, %p108
      %p111 = scmp.ne.s32.totalorder %s94, %s110
      %p112 = scmp.eq.s32.totalorder %s22, 0
      %p113 = por %p111, %p112
      %s114 = ssub.s32 %s23, %s35
      %s115 = ssub.s32 %s24, %s31
      %s116 = sor.u32 %s114, %s115
      %p117 = scmp.eq.s32.totalorder %s116, 0
      %s119 = sadd.s32 %s118, 1
      %s120 = scalar_select %p117, %s118, %s119
      %p123 = pneg %p117
      %p124 = scmp.eq.s32.totalorder %s16, 3
      %p125 = por %p123, %p124
      %p126 = scmp.ne.s32.totalorder %s118, %s121
      %p127 = scmp.eq.s32.totalorder %s16, 0
      %p128 = por %p126, %p127
      %p129 = scmp.ne.s32.totalorder %s118, %s121
      %p130 = scmp.eq.s32.totalorder %s21, 3
      %p131 = por %p129, %p130
      %p132 = scmp.ne.s32.totalorder %s121, %s122
      %p133 = scmp.eq.s32.totalorder %s21, 0
      %p134 = por %p132, %p133
      %p135 = scmp.ne.s32.totalorder %s121, %s122
      %p136 = scmp.eq.s32.totalorder %s22, 3
      %p137 = por %p135, %p136
      %p139 = scmp.ne.s32.totalorder %s122, %s138
      %p140 = scmp.eq.s32.totalorder %s22, 0
      %p141 = por %p139, %p140
      %p142 = scmp.le.s32.totalorder 1, %s16
      %p143 = scmp.lt.s32.totalorder %s16, 5
      %p144 = pnand %p142, %p143
      %p145 = pneg %p144
      // Predicated region
      $region9: #{tpu_custom_call.1} parent=5 // pred_check
        _
      $region10: #{tpu_custom_call.1} parent=5 // pred_check_branch
        %147 = sbr.rel (%p144) target = $region12
      $region11: #{tpu_custom_call.1} parent=5 // pred_region
        %s148 = ssub.s32 %s16, 1
        // Predicated region
        $region13: #{tpu_custom_call.1} parent=11 // pred_check
          %p149 = pneg %p54
        $region14: #{tpu_custom_call.1} parent=11 // pred_check_branch
          %151 = sbr.rel (%p149) target = $region16
        $region15: #{tpu_custom_call.1} parent=11 // pred_region
          %s153 = ssub.s32 3072, 3072
          %154 = vsyncadd [#allocation3], %s153
          %s155 = smul.addr %s25, 24
          %s156 = smul.addr %s155, 128
          %s157 = scalar_lea.hbm %s0, %s156
          %s159 = sshll.u32 [#allocation2], 4
          %s160 = int_to_ptr.vmem [resolvable:$true] %s159
          %162 = dma.hbm_to_vmem [thread:$0]  %s157, 3072, %s160, [#allocation3]
        $region16: #{tpu_custom_call.1} parent=11 // pred_fallthru
          _
      $region12: #{tpu_custom_call.1} parent=5 // pred_fallthru
        _
      %p163 = scmp.lt.s32.totalorder %s16, 4
      // Predicated region
      $region17: #{tpu_custom_call.1} parent=5 // pred_check
        %p164 = pneg %p163
      $region18: #{tpu_custom_call.1} parent=5 // pred_check_branch
        %166 = sbr.rel (%p164) target = $region20
      $region19: #{tpu_custom_call.1} parent=5 // pred_region
        // Predicated region
        $region21: #{tpu_custom_call.1} parent=19 // pred_check
          %p167 = pneg %p74
        $region22: #{tpu_custom_call.1} parent=19 // pred_check_branch
          %169 = sbr.rel (%p167) target = $region24
        $region23: #{tpu_custom_call.1} parent=19 // pred_region
          %s170 = sand.u32 %s16, 1
          %s171 = scalar_lea.sflag [#allocation6], %s170
          %s172 = sand.u32 %s64, 1
          %s173 = smul.addr %s172, 6144
          %s174 = scalar_lea.vmem [#allocation5], %s173
          %s175 = smul.u32 4, %s24
          %s177 = ssub.s32 98304, 98304
          %178 = vsyncadd %s171, %s177
          %s179 = smul.addr %s175, 64
          %s180 = scalar_lea.hbm %s1, %s179
          %s181 = sshll.u32 %s174, 4
          %s182 = int_to_ptr.vmem [resolvable:$true] %s181
          %187 = dma.hbm_to_vmem [thread:$0]  %s180, 98304, %s182, %s171, 1024, 256, 16
        $region24: #{tpu_custom_call.1} parent=19 // pred_fallthru
          _
        // Predicated region
        $region25: #{tpu_custom_call.1} parent=19 // pred_check
          %p188 = pneg %p100
        $region26: #{tpu_custom_call.1} parent=19 // pred_check_branch
          %190 = sbr.rel (%p188) target = $region28
        $region27: #{tpu_custom_call.1} parent=19 // pred_region
          %s191 = sand.u32 %s16, 1
          %s192 = scalar_lea.sflag [#allocation6], %s191
          %s193 = sand.u32 %s90, 1
          %s194 = smul.addr %s193, 4
          %s195 = scalar_lea.vmem [#allocation7], %s194
          %s196 = smul.u32 4, %s24
          %s198 = ssub.s32 64, 64
          %199 = vsyncadd %s192, %s198
          %s200 = smul.addr %s196, 16
          %s201 = scalar_lea.hbm %s2, %s200
          %s203 = sshll.u32 %s195, 4
          %s204 = int_to_ptr.vmem [resolvable:$true] %s203
          %206 = dma.hbm_to_vmem [thread:$0]  %s201, 64, %s204, %s192
        $region28: #{tpu_custom_call.1} parent=19 // pred_fallthru
          _
      $region20: #{tpu_custom_call.1} parent=5 // pred_fallthru
        _
      %p207 = scmp.le.s32.totalorder 1, %s16
      %p208 = scmp.lt.s32.totalorder %s16, 5
      %p209 = pnand %p207, %p208
      %p210 = pneg %p209
      // Predicated region
      $region29: #{tpu_custom_call.1} parent=5 // pred_check
        _
      $region30: #{tpu_custom_call.1} parent=5 // pred_check_branch
        %212 = sbr.rel (%p209) target = $region32
      $region31: #{tpu_custom_call.1} parent=5 // pred_region
        %s213 = ssub.s32 %s16, 1
        // Predicated region
        $region33: #{tpu_custom_call.1} parent=31 // pred_check
          %p214 = pneg %p54
        $region34: #{tpu_custom_call.1} parent=31 // pred_check_branch
          %216 = sbr.rel (%p214) target = $region36
        $region35: #{tpu_custom_call.1} parent=31 // pred_region
          %217 = dma.done [#allocation3], 3072
        $region36: #{tpu_custom_call.1} parent=31 // pred_fallthru
          _
        %s218 = sand.u32 %s21, 1
        %s219 = scalar_lea.sflag [#allocation6], %s218
        %s220 = sand.u32 %s67, 1
        %s221 = smul.addr %s220, 6144
        %s222 = scalar_lea.vmem [#allocation5], %s221
        // Predicated region
        $region37: #{tpu_custom_call.1} parent=31 // pred_check
          %p223 = pneg %p80
        $region38: #{tpu_custom_call.1} parent=31 // pred_check_branch
          %225 = sbr.rel (%p223) target = $region40
        $region39: #{tpu_custom_call.1} parent=31 // pred_region
          %226 = dma.done %s219, 98304
        $region40: #{tpu_custom_call.1} parent=31 // pred_fallthru
          _
        %s227 = sand.u32 %s21, 1
        %s228 = scalar_lea.sflag [#allocation6], %s227
        %s229 = sand.u32 %s93, 1
        %s230 = smul.addr %s229, 4
        %s231 = scalar_lea.vmem [#allocation7], %s230
        // Predicated region
        $region41: #{tpu_custom_call.1} parent=31 // pred_check
          %p232 = pneg %p106
        $region42: #{tpu_custom_call.1} parent=31 // pred_check_branch
          %234 = sbr.rel (%p232) target = $region44
        $region43: #{tpu_custom_call.1} parent=31 // pred_region
          %235 = dma.done %s228, 64
        $region44: #{tpu_custom_call.1} parent=31 // pred_fallthru
          _
        %p236 = pneg %p54
        %p237 = pneg %p51
        %s238 = sand.u32 %s21, 1
        %s239 = scalar_lea.sflag [#allocation6], %s238
        %s240 = sand.u32 %s67, 1
        %s241 = smul.addr %s240, 6144
        %s242 = scalar_lea.vmem [#allocation5], %s241
        %p243 = pneg %p80
        %p244 = pneg %p77
        %s245 = sand.u32 %s21, 1
        %s246 = scalar_lea.sflag [#allocation6], %s245
        %s247 = sand.u32 %s93, 1
        %s248 = smul.addr %s247, 4
        %s249 = scalar_lea.vmem [#allocation7], %s248
        %p250 = pneg %p106
        %p251 = pneg %p103
        %p252 = pneg %p134
        %p253 = pneg %p131
        %s254 = sand.u32 %s121, 1
        %s255 = scalar_lea.sflag [#allocation4], %s254
        %s256 = sand.u32 %s121, 1
        %s257 = smul.addr %s256, 32
        %s258 = scalar_lea.vmem [#allocation8], %s257
        %s259 = smul.u32 4, %s26
        %s260 = smul.u32 4, %s26
        %s261 = smul.u32 4, %s26
        %v262 = vld [vmem:[#allocation2] sm:$0xff]
        %v263 = vld [vmem:[#allocation2 + $0x8] sm:$0xff]
        %v264 = vld [vmem:[#allocation2 + $0x10] sm:$0xff]
        %v265 = vld [vmem:[#allocation2 + $0x18] sm:$0xff]
        %v266 = vld [vmem:[#allocation2 + $0x20] sm:$0xff]
        %v267 = vld [vmem:[#allocation2 + $0x28] sm:$0xff]
        %v268 = vld [vmem:[#allocation2 + $0x30] sm:$0xff]
        %v269 = vld [vmem:[#allocation2 + $0x38] sm:$0xff]
        %v270 = vld [vmem:[#allocation2 + $0x40] sm:$0xff]
        %v271 = vld [vmem:[#allocation2 + $0x48] sm:$0xff]
        %v272 = vld [vmem:[#allocation2 + $0x50] sm:$0xff]
        %v273 = vld [vmem:[#allocation2 + $0x58] sm:$0xff]
        %v274 = vld [vmem:[#allocation2 + $0x60] sm:$0xff]
        %v275 = vld [vmem:[#allocation2 + $0x68] sm:$0xff]
        %v276 = vld [vmem:[#allocation2 + $0x70] sm:$0xff]
        %v277 = vld [vmem:[#allocation2 + $0x78] sm:$0xff]
        %v278 = vld [vmem:[#allocation2 + $0x80] sm:$0xff]
        %v279 = vld [vmem:[#allocation2 + $0x88] sm:$0xff]
        %v280 = vld [vmem:[#allocation2 + $0x90] sm:$0xff]
        %v281 = vld [vmem:[#allocation2 + $0x98] sm:$0xff]
        %v282 = vld [vmem:[#allocation2 + $0xa0] sm:$0xff]
        %v283 = vld [vmem:[#allocation2 + $0xa8] sm:$0xff]
        %v284 = vld [vmem:[#allocation2 + $0xb0] sm:$0xff]
        %v285 = vld [vmem:[#allocation2 + $0xb8] sm:$0xff]
        %v286 = vpack.c.bf16 %v262, %v262
        %v287 = vpack.c.bf16 %v263, %v263
        %v288 = vpack.c.bf16 %v264, %v264
        %v289 = vpack.c.bf16 %v265, %v265
        %v290 = vpack.c.bf16 %v266, %v266
        %v291 = vpack.c.bf16 %v267, %v267
        %v292 = vpack.c.bf16 %v268, %v268
        %v293 = vpack.c.bf16 %v269, %v269
        %v294 = vpack.c.bf16 %v270, %v270
        %v295 = vpack.c.bf16 %v271, %v271
        %v296 = vpack.c.bf16 %v272, %v272
        %v297 = vpack.c.bf16 %v273, %v273
        %v298 = vpack.c.bf16 %v274, %v274
        %v299 = vpack.c.bf16 %v275, %v275
        %v300 = vpack.c.bf16 %v276, %v276
        %v301 = vpack.c.bf16 %v277, %v277
        %v302 = vpack.c.bf16 %v278, %v278
        %v303 = vpack.c.bf16 %v279, %v279
        %v304 = vpack.c.bf16 %v280, %v280
        %v305 = vpack.c.bf16 %v281, %v281
        %v306 = vpack.c.bf16 %v282, %v282
        %v307 = vpack.c.bf16 %v283, %v283
        %v308 = vpack.c.bf16 %v284, %v284
        %v309 = vpack.c.bf16 %v285, %v285
        %v310 = vld [vmem:[%s222] sm:$0xff]
        %v311 = vld [vmem:[%s222 + $0x8] sm:$0xff]
        %v312 = vld [vmem:[%s222 + $0x10] sm:$0xff]
        %v313 = vld [vmem:[%s222 + $0x18] sm:$0xff]
        %v314 = vld [vmem:[%s222 + $0x20] sm:$0xff]
        %v315 = vld [vmem:[%s222 + $0x28] sm:$0xff]
        %v316 = vld [vmem:[%s222 + $0x30] sm:$0xff]
        %v317 = vld [vmem:[%s222 + $0x38] sm:$0xff]
        %v318 = vld [vmem:[%s222 + $0x40] sm:$0xff]
        %v319 = vld [vmem:[%s222 + $0x48] sm:$0xff]
        %v320 = vld [vmem:[%s222 + $0x50] sm:$0xff]
        %v321 = vld [vmem:[%s222 + $0x58] sm:$0xff]
        %v322 = vld [vmem:[%s222 + $0x60] sm:$0xff]
        %v323 = vld [vmem:[%s222 + $0x68] sm:$0xff]
        %v324 = vld [vmem:[%s222 + $0x70] sm:$0xff]
        %v325 = vld [vmem:[%s222 + $0x78] sm:$0xff]
        %v326 = vld [vmem:[%s222 + $0x80] sm:$0xff]
        %v327 = vld [vmem:[%s222 + $0x88] sm:$0xff]
        %v328 = vld [vmem:[%s222 + $0x90] sm:$0xff]
        %v329 = vld [vmem:[%s222 + $0x98] sm:$0xff]
        %v330 = vld [vmem:[%s222 + $0xa0] sm:$0xff]
        %v331 = vld [vmem:[%s222 + $0xa8] sm:$0xff]
        %v332 = vld [vmem:[%s222 + $0xb0] sm:$0xff]
        %v333 = vld [vmem:[%s222 + $0xb8] sm:$0xff]
        %v334 = vld [vmem:[%s222 + $0xc0] sm:$0xff]
        %v335 = vld [vmem:[%s222 + $0xc8] sm:$0xff]
        %v336 = vld [vmem:[%s222 + $0xd0] sm:$0xff]
        %v337 = vld [vmem:[%s222 + $0xd8] sm:$0xff]
        %v338 = vld [vmem:[%s222 + $0xe0] sm:$0xff]
        %v339 = vld [vmem:[%s222 + $0xe8] sm:$0xff]
        %v340 = vld [vmem:[%s222 + $0xf0] sm:$0xff]
        %v341 = vld [vmem:[%s222 + $0xf8] sm:$0xff]
        %v342 = vld [vmem:[%s222 + $0x100] sm:$0xff]
        %v343 = vld [vmem:[%s222 + $0x108] sm:$0xff]
        %v344 = vld [vmem:[%s222 + $0x110] sm:$0xff]
        %v345 = vld [vmem:[%s222 + $0x118] sm:$0xff]
        %v346 = vld [vmem:[%s222 + $0x120] sm:$0xff]
        %v347 = vld [vmem:[%s222 + $0x128] sm:$0xff]
        %v348 = vld [vmem:[%s222 + $0x130] sm:$0xff]
        %v349 = vld [vmem:[%s222 + $0x138] sm:$0xff]
        %v350 = vld [vmem:[%s222 + $0x140] sm:$0xff]
        %v351 = vld [vmem:[%s222 + $0x148] sm:$0xff]
        %v352 = vld [vmem:[%s222 + $0x150] sm:$0xff]
        %v353 = vld [vmem:[%s222 + $0x158] sm:$0xff]
        %v354 = vld [vmem:[%s222 + $0x160] sm:$0xff]
        %v355 = vld [vmem:[%s222 + $0x168] sm:$0xff]
        %v356 = vld [vmem:[%s222 + $0x170] sm:$0xff]
        %v357 = vld [vmem:[%s222 + $0x178] sm:$0xff]
        %v358 = vld [vmem:[%s222 + $0x180] sm:$0xff]
        %v359 = vld [vmem:[%s222 + $0x188] sm:$0xff]
        %v360 = vld [vmem:[%s222 + $0x190] sm:$0xff]
        %v361 = vld [vmem:[%s222 + $0x198] sm:$0xff]
        %v362 = vld [vmem:[%s222 + $0x1a0] sm:$0xff]
        %v363 = vld [vmem:[%s222 + $0x1a8] sm:$0xff]
        %v364 = vld [vmem:[%s222 + $0x1b0] sm:$0xff]
        %v365 = vld [vmem:[%s222 + $0x1b8] sm:$0xff]
        %v366 = vld [vmem:[%s222 + $0x1c0] sm:$0xff]
        %v367 = vld [vmem:[%s222 + $0x1c8] sm:$0xff]
        %v368 = vld [vmem:[%s222 + $0x1d0] sm:$0xff]
        %v369 = vld [vmem:[%s222 + $0x1d8] sm:$0xff]
        %v370 = vld [vmem:[%s222 + $0x1e0] sm:$0xff]
        %v371 = vld [vmem:[%s222 + $0x1e8] sm:$0xff]
        %v372 = vld [vmem:[%s222 + $0x1f0] sm:$0xff]
        %v373 = vld [vmem:[%s222 + $0x1f8] sm:$0xff]
        %v374 = vld [vmem:[%s222 + $0x200] sm:$0xff]
        %v375 = vld [vmem:[%s222 + $0x208] sm:$0xff]
        %v376 = vld [vmem:[%s222 + $0x210] sm:$0xff]
        %v377 = vld [vmem:[%s222 + $0x218] sm:$0xff]
        %v378 = vld [vmem:[%s222 + $0x220] sm:$0xff]
        %v379 = vld [vmem:[%s222 + $0x228] sm:$0xff]
        %v380 = vld [vmem:[%s222 + $0x230] sm:$0xff]
        %v381 = vld [vmem:[%s222 + $0x238] sm:$0xff]
        %v382 = vld [vmem:[%s222 + $0x240] sm:$0xff]
        %v383 = vld [vmem:[%s222 + $0x248] sm:$0xff]
        %v384 = vld [vmem:[%s222 + $0x250] sm:$0xff]
        %v385 = vld [vmem:[%s222 + $0x258] sm:$0xff]
        %v386 = vld [vmem:[%s222 + $0x260] sm:$0xff]
        %v387 = vld [vmem:[%s222 + $0x268] sm:$0xff]
        %v388 = vld [vmem:[%s222 + $0x270] sm:$0xff]
        %v389 = vld [vmem:[%s222 + $0x278] sm:$0xff]
        %v390 = vld [vmem:[%s222 + $0x280] sm:$0xff]
        %v391 = vld [vmem:[%s222 + $0x288] sm:$0xff]
        %v392 = vld [vmem:[%s222 + $0x290] sm:$0xff]
        %v393 = vld [vmem:[%s222 + $0x298] sm:$0xff]
        %v394 = vld [vmem:[%s222 + $0x2a0] sm:$0xff]
        %v395 = vld [vmem:[%s222 + $0x2a8] sm:$0xff]
        %v396 = vld [vmem:[%s222 + $0x2b0] sm:$0xff]
        %v397 = vld [vmem:[%s222 + $0x2b8] sm:$0xff]
        %v398 = vld [vmem:[%s222 + $0x2c0] sm:$0xff]
        %v399 = vld [vmem:[%s222 + $0x2c8] sm:$0xff]
        %v400 = vld [vmem:[%s222 + $0x2d0] sm:$0xff]
        %v401 = vld [vmem:[%s222 + $0x2d8] sm:$0xff]
        %v402 = vld [vmem:[%s222 + $0x2e0] sm:$0xff]
        %v403 = vld [vmem:[%s222 + $0x2e8] sm:$0xff]
        %v404 = vld [vmem:[%s222 + $0x2f0] sm:$0xff]
        %v405 = vld [vmem:[%s222 + $0x2f8] sm:$0xff]
        %v406 = vld [vmem:[%s222 + $0x300] sm:$0xff]
        %v407 = vld [vmem:[%s222 + $0x308] sm:$0xff]
        %v408 = vld [vmem:[%s222 + $0x310] sm:$0xff]
        %v409 = vld [vmem:[%s222 + $0x318] sm:$0xff]
        %v410 = vld [vmem:[%s222 + $0x320] sm:$0xff]
        %v411 = vld [vmem:[%s222 + $0x328] sm:$0xff]
        %v412 = vld [vmem:[%s222 + $0x330] sm:$0xff]
        %v413 = vld [vmem:[%s222 + $0x338] sm:$0xff]
        %v414 = vld [vmem:[%s222 + $0x340] sm:$0xff]
        %v415 = vld [vmem:[%s222 + $0x348] sm:$0xff]
        %v416 = vld [vmem:[%s222 + $0x350] sm:$0xff]
        %v417 = vld [vmem:[%s222 + $0x358] sm:$0xff]
        %v418 = vld [vmem:[%s222 + $0x360] sm:$0xff]
        %v419 = vld [vmem:[%s222 + $0x368] sm:$0xff]
        %v420 = vld [vmem:[%s222 + $0x370] sm:$0xff]
        %v421 = vld [vmem:[%s222 + $0x378] sm:$0xff]
        %v422 = vld [vmem:[%s222 + $0x380] sm:$0xff]
        %v423 = vld [vmem:[%s222 + $0x388] sm:$0xff]
        %v424 = vld [vmem:[%s222 + $0x390] sm:$0xff]
        %v425 = vld [vmem:[%s222 + $0x398] sm:$0xff]
        %v426 = vld [vmem:[%s222 + $0x3a0] sm:$0xff]
        %v427 = vld [vmem:[%s222 + $0x3a8] sm:$0xff]
        %v428 = vld [vmem:[%s222 + $0x3b0] sm:$0xff]
        %v429 = vld [vmem:[%s222 + $0x3b8] sm:$0xff]
        %v430 = vld [vmem:[%s222 + $0x3c0] sm:$0xff]
        %v431 = vld [vmem:[%s222 + $0x3c8] sm:$0xff]
        %v432 = vld [vmem:[%s222 + $0x3d0] sm:$0xff]
        %v433 = vld [vmem:[%s222 + $0x3d8] sm:$0xff]
        %v434 = vld [vmem:[%s222 + $0x3e0] sm:$0xff]
        %v435 = vld [vmem:[%s222 + $0x3e8] sm:$0xff]
        %v436 = vld [vmem:[%s222 + $0x3f0] sm:$0xff]
        %v437 = vld [vmem:[%s222 + $0x3f8] sm:$0xff]
        %v438 = vld [vmem:[%s222 + $0x400] sm:$0xff]
        %v439 = vld [vmem:[%s222 + $0x408] sm:$0xff]
        %v440 = vld [vmem:[%s222 + $0x410] sm:$0xff]
        %v441 = vld [vmem:[%s222 + $0x418] sm:$0xff]
        %v442 = vld [vmem:[%s222 + $0x420] sm:$0xff]
        %v443 = vld [vmem:[%s222 + $0x428] sm:$0xff]
        %v444 = vld [vmem:[%s222 + $0x430] sm:$0xff]
        %v445 = vld [vmem:[%s222 + $0x438] sm:$0xff]
        %v446 = vld [vmem:[%s222 + $0x440] sm:$0xff]
        %v447 = vld [vmem:[%s222 + $0x448] sm:$0xff]
        %v448 = vld [vmem:[%s222 + $0x450] sm:$0xff]
        %v449 = vld [vmem:[%s222 + $0x458] sm:$0xff]
        %v450 = vld [vmem:[%s222 + $0x460] sm:$0xff]
        %v451 = vld [vmem:[%s222 + $0x468] sm:$0xff]
        %v452 = vld [vmem:[%s222 + $0x470] sm:$0xff]
        %v453 = vld [vmem:[%s222 + $0x478] sm:$0xff]
        %v454 = vld [vmem:[%s222 + $0x480] sm:$0xff]
        %v455 = vld [vmem:[%s222 + $0x488] sm:$0xff]
        %v456 = vld [vmem:[%s222 + $0x490] sm:$0xff]
        %v457 = vld [vmem:[%s222 + $0x498] sm:$0xff]
        %v458 = vld [vmem:[%s222 + $0x4a0] sm:$0xff]
        %v459 = vld [vmem:[%s222 + $0x4a8] sm:$0xff]
        %v460 = vld [vmem:[%s222 + $0x4b0] sm:$0xff]
        %v461 = vld [vmem:[%s222 + $0x4b8] sm:$0xff]
        %v462 = vld [vmem:[%s222 + $0x4c0] sm:$0xff]
        %v463 = vld [vmem:[%s222 + $0x4c8] sm:$0xff]
        %v464 = vld [vmem:[%s222 + $0x4d0] sm:$0xff]
        %v465 = vld [vmem:[%s222 + $0x4d8] sm:$0xff]
        %v466 = vld [vmem:[%s222 + $0x4e0] sm:$0xff]
        %v467 = vld [vmem:[%s222 + $0x4e8] sm:$0xff]
        %v468 = vld [vmem:[%s222 + $0x4f0] sm:$0xff]
        %v469 = vld [vmem:[%s222 + $0x4f8] sm:$0xff]
        %v470 = vld [vmem:[%s222 + $0x500] sm:$0xff]
        %v471 = vld [vmem:[%s222 + $0x508] sm:$0xff]
        %v472 = vld [vmem:[%s222 + $0x510] sm:$0xff]
        %v473 = vld [vmem:[%s222 + $0x518] sm:$0xff]
        %v474 = vld [vmem:[%s222 + $0x520] sm:$0xff]
        %v475 = vld [vmem:[%s222 + $0x528] sm:$0xff]
        %v476 = vld [vmem:[%s222 + $0x530] sm:$0xff]
        %v477 = vld [vmem:[%s222 + $0x538] sm:$0xff]
        %v478 = vld [vmem:[%s222 + $0x540] sm:$0xff]
        %v479 = vld [vmem:[%s222 + $0x548] sm:$0xff]
        %v480 = vld [vmem:[%s222 + $0x550] sm:$0xff]
        %v481 = vld [vmem:[%s222 + $0x558] sm:$0xff]
        %v482 = vld [vmem:[%s222 + $0x560] sm:$0xff]
        %v483 = vld [vmem:[%s222 + $0x568] sm:$0xff]
        %v484 = vld [vmem:[%s222 + $0x570] sm:$0xff]
        %v485 = vld [vmem:[%s222 + $0x578] sm:$0xff]
        %v486 = vld [vmem:[%s222 + $0x580] sm:$0xff]
        %v487 = vld [vmem:[%s222 + $0x588] sm:$0xff]
        %v488 = vld [vmem:[%s222 + $0x590] sm:$0xff]
        %v489 = vld [vmem:[%s222 + $0x598] sm:$0xff]
        %v490 = vld [vmem:[%s222 + $0x5a0] sm:$0xff]
        %v491 = vld [vmem:[%s222 + $0x5a8] sm:$0xff]
        %v492 = vld [vmem:[%s222 + $0x5b0] sm:$0xff]
        %v493 = vld [vmem:[%s222 + $0x5b8] sm:$0xff]
        %v494 = vld [vmem:[%s222 + $0x5c0] sm:$0xff]
        %v495 = vld [vmem:[%s222 + $0x5c8] sm:$0xff]
        %v496 = vld [vmem:[%s222 + $0x5d0] sm:$0xff]
        %v497 = vld [vmem:[%s222 + $0x5d8] sm:$0xff]
        %v498 = vld [vmem:[%s222 + $0x5e0] sm:$0xff]
        %v499 = vld [vmem:[%s222 + $0x5e8] sm:$0xff]
        %v500 = vld [vmem:[%s222 + $0x5f0] sm:$0xff]
        %v501 = vld [vmem:[%s222 + $0x5f8] sm:$0xff]
        %v502 = vld [vmem:[%s222 + $0x600] sm:$0xff]
        %v503 = vld [vmem:[%s222 + $0x608] sm:$0xff]
        %v504 = vld [vmem:[%s222 + $0x610] sm:$0xff]
        %v505 = vld [vmem:[%s222 + $0x618] sm:$0xff]
        %v506 = vld [vmem:[%s222 + $0x620] sm:$0xff]
        %v507 = vld [vmem:[%s222 + $0x628] sm:$0xff]
        %v508 = vld [vmem:[%s222 + $0x630] sm:$0xff]
        %v509 = vld [vmem:[%s222 + $0x638] sm:$0xff]
        %v510 = vld [vmem:[%s222 + $0x640] sm:$0xff]
        %v511 = vld [vmem:[%s222 + $0x648] sm:$0xff]
        %v512 = vld [vmem:[%s222 + $0x650] sm:$0xff]
        %v513 = vld [vmem:[%s222 + $0x658] sm:$0xff]
        %v514 = vld [vmem:[%s222 + $0x660] sm:$0xff]
        %v515 = vld [vmem:[%s222 + $0x668] sm:$0xff]
        %v516 = vld [vmem:[%s222 + $0x670] sm:$0xff]
        %v517 = vld [vmem:[%s222 + $0x678] sm:$0xff]
        %v518 = vld [vmem:[%s222 + $0x680] sm:$0xff]
        %v519 = vld [vmem:[%s222 + $0x688] sm:$0xff]
        %v520 = vld [vmem:[%s222 + $0x690] sm:$0xff]
        %v521 = vld [vmem:[%s222 + $0x698] sm:$0xff]
        %v522 = vld [vmem:[%s222 + $0x6a0] sm:$0xff]
        %v523 = vld [vmem:[%s222 + $0x6a8] sm:$0xff]
        %v524 = vld [vmem:[%s222 + $0x6b0] sm:$0xff]
        %v525 = vld [vmem:[%s222 + $0x6b8] sm:$0xff]
        %v526 = vld [vmem:[%s222 + $0x6c0] sm:$0xff]
        %v527 = vld [vmem:[%s222 + $0x6c8] sm:$0xff]
        %v528 = vld [vmem:[%s222 + $0x6d0] sm:$0xff]
        %v529 = vld [vmem:[%s222 + $0x6d8] sm:$0xff]
        %v530 = vld [vmem:[%s222 + $0x6e0] sm:$0xff]
        %v531 = vld [vmem:[%s222 + $0x6e8] sm:$0xff]
        %v532 = vld [vmem:[%s222 + $0x6f0] sm:$0xff]
        %v533 = vld [vmem:[%s222 + $0x6f8] sm:$0xff]
        %v534 = vld [vmem:[%s222 + $0x700] sm:$0xff]
        %v535 = vld [vmem:[%s222 + $0x708] sm:$0xff]
        %v536 = vld [vmem:[%s222 + $0x710] sm:$0xff]
        %v537 = vld [vmem:[%s222 + $0x718] sm:$0xff]
        %v538 = vld [vmem:[%s222 + $0x720] sm:$0xff]
        %v539 = vld [vmem:[%s222 + $0x728] sm:$0xff]
        %v540 = vld [vmem:[%s222 + $0x730] sm:$0xff]
        %v541 = vld [vmem:[%s222 + $0x738] sm:$0xff]
        %v542 = vld [vmem:[%s222 + $0x740] sm:$0xff]
        %v543 = vld [vmem:[%s222 + $0x748] sm:$0xff]
        %v544 = vld [vmem:[%s222 + $0x750] sm:$0xff]
        %v545 = vld [vmem:[%s222 + $0x758] sm:$0xff]
        %v546 = vld [vmem:[%s222 + $0x760] sm:$0xff]
        %v547 = vld [vmem:[%s222 + $0x768] sm:$0xff]
        %v548 = vld [vmem:[%s222 + $0x770] sm:$0xff]
        %v549 = vld [vmem:[%s222 + $0x778] sm:$0xff]
        %v550 = vld [vmem:[%s222 + $0x780] sm:$0xff]
        %v551 = vld [vmem:[%s222 + $0x788] sm:$0xff]
        %v552 = vld [vmem:[%s222 + $0x790] sm:$0xff]
        %v553 = vld [vmem:[%s222 + $0x798] sm:$0xff]
        %v554 = vld [vmem:[%s222 + $0x7a0] sm:$0xff]
        %v555 = vld [vmem:[%s222 + $0x7a8] sm:$0xff]
        %v556 = vld [vmem:[%s222 + $0x7b0] sm:$0xff]
        %v557 = vld [vmem:[%s222 + $0x7b8] sm:$0xff]
        %v558 = vld [vmem:[%s222 + $0x7c0] sm:$0xff]
        %v559 = vld [vmem:[%s222 + $0x7c8] sm:$0xff]
        %v560 = vld [vmem:[%s222 + $0x7d0] sm:$0xff]
        %v561 = vld [vmem:[%s222 + $0x7d8] sm:$0xff]
        %v562 = vld [vmem:[%s222 + $0x7e0] sm:$0xff]
        %v563 = vld [vmem:[%s222 + $0x7e8] sm:$0xff]
        %v564 = vld [vmem:[%s222 + $0x7f0] sm:$0xff]
        %v565 = vld [vmem:[%s222 + $0x7f8] sm:$0xff]
        %v566 = vld [vmem:[%s222 + $0x800] sm:$0xff]
        %v567 = vld [vmem:[%s222 + $0x808] sm:$0xff]
        %v568 = vld [vmem:[%s222 + $0x810] sm:$0xff]
        %v569 = vld [vmem:[%s222 + $0x818] sm:$0xff]
        %v570 = vld [vmem:[%s222 + $0x820] sm:$0xff]
        %v571 = vld [vmem:[%s222 + $0x828] sm:$0xff]
        %v572 = vld [vmem:[%s222 + $0x830] sm:$0xff]
        %v573 = vld [vmem:[%s222 + $0x838] sm:$0xff]
        %v574 = vld [vmem:[%s222 + $0x840] sm:$0xff]
        %v575 = vld [vmem:[%s222 + $0x848] sm:$0xff]
        %v576 = vld [vmem:[%s222 + $0x850] sm:$0xff]
        %v577 = vld [vmem:[%s222 + $0x858] sm:$0xff]
        %v578 = vld [vmem:[%s222 + $0x860] sm:$0xff]
        %v579 = vld [vmem:[%s222 + $0x868] sm:$0xff]
        %v580 = vld [vmem:[%s222 + $0x870] sm:$0xff]
        %v581 = vld [vmem:[%s222 + $0x878] sm:$0xff]
        %v582 = vld [vmem:[%s222 + $0x880] sm:$0xff]
        %v583 = vld [vmem:[%s222 + $0x888] sm:$0xff]
        %v584 = vld [vmem:[%s222 + $0x890] sm:$0xff]
        %v585 = vld [vmem:[%s222 + $0x898] sm:$0xff]
        %v586 = vld [vmem:[%s222 + $0x8a0] sm:$0xff]
        %v587 = vld [vmem:[%s222 + $0x8a8] sm:$0xff]
        %v588 = vld [vmem:[%s222 + $0x8b0] sm:$0xff]
        %v589 = vld [vmem:[%s222 + $0x8b8] sm:$0xff]
        %v590 = vld [vmem:[%s222 + $0x8c0] sm:$0xff]
        %v591 = vld [vmem:[%s222 + $0x8c8] sm:$0xff]
        %v592 = vld [vmem:[%s222 + $0x8d0] sm:$0xff]
        %v593 = vld [vmem:[%s222 + $0x8d8] sm:$0xff]
        %v594 = vld [vmem:[%s222 + $0x8e0] sm:$0xff]
        %v595 = vld [vmem:[%s222 + $0x8e8] sm:$0xff]
        %v596 = vld [vmem:[%s222 + $0x8f0] sm:$0xff]
        %v597 = vld [vmem:[%s222 + $0x8f8] sm:$0xff]
        %v598 = vld [vmem:[%s222 + $0x900] sm:$0xff]
        %v599 = vld [vmem:[%s222 + $0x908] sm:$0xff]
        %v600 = vld [vmem:[%s222 + $0x910] sm:$0xff]
        %v601 = vld [vmem:[%s222 + $0x918] sm:$0xff]
        %v602 = vld [vmem:[%s222 + $0x920] sm:$0xff]
        %v603 = vld [vmem:[%s222 + $0x928] sm:$0xff]
        %v604 = vld [vmem:[%s222 + $0x930] sm:$0xff]
        %v605 = vld [vmem:[%s222 + $0x938] sm:$0xff]
        %v606 = vld [vmem:[%s222 + $0x940] sm:$0xff]
        %v607 = vld [vmem:[%s222 + $0x948] sm:$0xff]
        %v608 = vld [vmem:[%s222 + $0x950] sm:$0xff]
        %v609 = vld [vmem:[%s222 + $0x958] sm:$0xff]
        %v610 = vld [vmem:[%s222 + $0x960] sm:$0xff]
        %v611 = vld [vmem:[%s222 + $0x968] sm:$0xff]
        %v612 = vld [vmem:[%s222 + $0x970] sm:$0xff]
        %v613 = vld [vmem:[%s222 + $0x978] sm:$0xff]
        %v614 = vld [vmem:[%s222 + $0x980] sm:$0xff]
        %v615 = vld [vmem:[%s222 + $0x988] sm:$0xff]
        %v616 = vld [vmem:[%s222 + $0x990] sm:$0xff]
        %v617 = vld [vmem:[%s222 + $0x998] sm:$0xff]
        %v618 = vld [vmem:[%s222 + $0x9a0] sm:$0xff]
        %v619 = vld [vmem:[%s222 + $0x9a8] sm:$0xff]
        %v620 = vld [vmem:[%s222 + $0x9b0] sm:$0xff]
        %v621 = vld [vmem:[%s222 + $0x9b8] sm:$0xff]
        %v622 = vld [vmem:[%s222 + $0x9c0] sm:$0xff]
        %v623 = vld [vmem:[%s222 + $0x9c8] sm:$0xff]
        %v624 = vld [vmem:[%s222 + $0x9d0] sm:$0xff]
        %v625 = vld [vmem:[%s222 + $0x9d8] sm:$0xff]
        %v626 = vld [vmem:[%s222 + $0x9e0] sm:$0xff]
        %v627 = vld [vmem:[%s222 + $0x9e8] sm:$0xff]
        %v628 = vld [vmem:[%s222 + $0x9f0] sm:$0xff]
        %v629 = vld [vmem:[%s222 + $0x9f8] sm:$0xff]
        %v630 = vld [vmem:[%s222 + $0xa00] sm:$0xff]
        %v631 = vld [vmem:[%s222 + $0xa08] sm:$0xff]
        %v632 = vld [vmem:[%s222 + $0xa10] sm:$0xff]
        %v633 = vld [vmem:[%s222 + $0xa18] sm:$0xff]
        %v634 = vld [vmem:[%s222 + $0xa20] sm:$0xff]
        %v635 = vld [vmem:[%s222 + $0xa28] sm:$0xff]
        %v636 = vld [vmem:[%s222 + $0xa30] sm:$0xff]
        %v637 = vld [vmem:[%s222 + $0xa38] sm:$0xff]
        %v638 = vld [vmem:[%s222 + $0xa40] sm:$0xff]
        %v639 = vld [vmem:[%s222 + $0xa48] sm:$0xff]
        %v640 = vld [vmem:[%s222 + $0xa50] sm:$0xff]
        %v641 = vld [vmem:[%s222 + $0xa58] sm:$0xff]
        %v642 = vld [vmem:[%s222 + $0xa60] sm:$0xff]
        %v643 = vld [vmem:[%s222 + $0xa68] sm:$0xff]
        %v644 = vld [vmem:[%s222 + $0xa70] sm:$0xff]
        %v645 = vld [vmem:[%s222 + $0xa78] sm:$0xff]
        %v646 = vld [vmem:[%s222 + $0xa80] sm:$0xff]
        %v647 = vld [vmem:[%s222 + $0xa88] sm:$0xff]
        %v648 = vld [vmem:[%s222 + $0xa90] sm:$0xff]
        %v649 = vld [vmem:[%s222 + $0xa98] sm:$0xff]
        %v650 = vld [vmem:[%s222 + $0xaa0] sm:$0xff]
        %v651 = vld [vmem:[%s222 + $0xaa8] sm:$0xff]
        %v652 = vld [vmem:[%s222 + $0xab0] sm:$0xff]
        %v653 = vld [vmem:[%s222 + $0xab8] sm:$0xff]
        %v654 = vld [vmem:[%s222 + $0xac0] sm:$0xff]
        %v655 = vld [vmem:[%s222 + $0xac8] sm:$0xff]
        %v656 = vld [vmem:[%s222 + $0xad0] sm:$0xff]
        %v657 = vld [vmem:[%s222 + $0xad8] sm:$0xff]
        %v658 = vld [vmem:[%s222 + $0xae0] sm:$0xff]
        %v659 = vld [vmem:[%s222 + $0xae8] sm:$0xff]
        %v660 = vld [vmem:[%s222 + $0xaf0] sm:$0xff]
        %v661 = vld [vmem:[%s222 + $0xaf8] sm:$0xff]
        %v662 = vld [vmem:[%s222 + $0xb00] sm:$0xff]
        %v663 = vld [vmem:[%s222 + $0xb08] sm:$0xff]
        %v664 = vld [vmem:[%s222 + $0xb10] sm:$0xff]
        %v665 = vld [vmem:[%s222 + $0xb18] sm:$0xff]
        %v666 = vld [vmem:[%s222 + $0xb20] sm:$0xff]
        %v667 = vld [vmem:[%s222 + $0xb28] sm:$0xff]
        %v668 = vld [vmem:[%s222 + $0xb30] sm:$0xff]
        %v669 = vld [vmem:[%s222 + $0xb38] sm:$0xff]
        %v670 = vld [vmem:[%s222 + $0xb40] sm:$0xff]
        %v671 = vld [vmem:[%s222 + $0xb48] sm:$0xff]
        %v672 = vld [vmem:[%s222 + $0xb50] sm:$0xff]
        %v673 = vld [vmem:[%s222 + $0xb58] sm:$0xff]
        %v674 = vld [vmem:[%s222 + $0xb60] sm:$0xff]
        %v675 = vld [vmem:[%s222 + $0xb68] sm:$0xff]
        %v676 = vld [vmem:[%s222 + $0xb70] sm:$0xff]
        %v677 = vld [vmem:[%s222 + $0xb78] sm:$0xff]
        %v678 = vld [vmem:[%s222 + $0xb80] sm:$0xff]
        %v679 = vld [vmem:[%s222 + $0xb88] sm:$0xff]
        %v680 = vld [vmem:[%s222 + $0xb90] sm:$0xff]
        %v681 = vld [vmem:[%s222 + $0xb98] sm:$0xff]
        %v682 = vld [vmem:[%s222 + $0xba0] sm:$0xff]
        %v683 = vld [vmem:[%s222 + $0xba8] sm:$0xff]
        %v684 = vld [vmem:[%s222 + $0xbb0] sm:$0xff]
        %v685 = vld [vmem:[%s222 + $0xbb8] sm:$0xff]
        %v686 = vld [vmem:[%s222 + $0xbc0] sm:$0xff]
        %v687 = vld [vmem:[%s222 + $0xbc8] sm:$0xff]
        %v688 = vld [vmem:[%s222 + $0xbd0] sm:$0xff]
        %v689 = vld [vmem:[%s222 + $0xbd8] sm:$0xff]
        %v690 = vld [vmem:[%s222 + $0xbe0] sm:$0xff]
        %v691 = vld [vmem:[%s222 + $0xbe8] sm:$0xff]
        %v692 = vld [vmem:[%s222 + $0xbf0] sm:$0xff]
        %v693 = vld [vmem:[%s222 + $0xbf8] sm:$0xff]
        %v694 = vld [vmem:[%s222 + $0xc00] sm:$0xff]
        %v695 = vld [vmem:[%s222 + $0xc08] sm:$0xff]
        %v696 = vld [vmem:[%s222 + $0xc10] sm:$0xff]
        %v697 = vld [vmem:[%s222 + $0xc18] sm:$0xff]
        %v698 = vld [vmem:[%s222 + $0xc20] sm:$0xff]
        %v699 = vld [vmem:[%s222 + $0xc28] sm:$0xff]
        %v700 = vld [vmem:[%s222 + $0xc30] sm:$0xff]
        %v701 = vld [vmem:[%s222 + $0xc38] sm:$0xff]
        %v702 = vld [vmem:[%s222 + $0xc40] sm:$0xff]
        %v703 = vld [vmem:[%s222 + $0xc48] sm:$0xff]
        %v704 = vld [vmem:[%s222 + $0xc50] sm:$0xff]
        %v705 = vld [vmem:[%s222 + $0xc58] sm:$0xff]
        %v706 = vld [vmem:[%s222 + $0xc60] sm:$0xff]
        %v707 = vld [vmem:[%s222 + $0xc68] sm:$0xff]
        %v708 = vld [vmem:[%s222 + $0xc70] sm:$0xff]
        %v709 = vld [vmem:[%s222 + $0xc78] sm:$0xff]
        %v710 = vld [vmem:[%s222 + $0xc80] sm:$0xff]
        %v711 = vld [vmem:[%s222 + $0xc88] sm:$0xff]
        %v712 = vld [vmem:[%s222 + $0xc90] sm:$0xff]
        %v713 = vld [vmem:[%s222 + $0xc98] sm:$0xff]
        %v714 = vld [vmem:[%s222 + $0xca0] sm:$0xff]
        %v715 = vld [vmem:[%s222 + $0xca8] sm:$0xff]
        %v716 = vld [vmem:[%s222 + $0xcb0] sm:$0xff]
        %v717 = vld [vmem:[%s222 + $0xcb8] sm:$0xff]
        %v718 = vld [vmem:[%s222 + $0xcc0] sm:$0xff]
        %v719 = vld [vmem:[%s222 + $0xcc8] sm:$0xff]
        %v720 = vld [vmem:[%s222 + $0xcd0] sm:$0xff]
        %v721 = vld [vmem:[%s222 + $0xcd8] sm:$0xff]
        %v722 = vld [vmem:[%s222 + $0xce0] sm:$0xff]
        %v723 = vld [vmem:[%s222 + $0xce8] sm:$0xff]
        %v724 = vld [vmem:[%s222 + $0xcf0] sm:$0xff]
        %v725 = vld [vmem:[%s222 + $0xcf8] sm:$0xff]
        %v726 = vld [vmem:[%s222 + $0xd00] sm:$0xff]
        %v727 = vld [vmem:[%s222 + $0xd08] sm:$0xff]
        %v728 = vld [vmem:[%s222 + $0xd10] sm:$0xff]
        %v729 = vld [vmem:[%s222 + $0xd18] sm:$0xff]
        %v730 = vld [vmem:[%s222 + $0xd20] sm:$0xff]
        %v731 = vld [vmem:[%s222 + $0xd28] sm:$0xff]
        %v732 = vld [vmem:[%s222 + $0xd30] sm:$0xff]
        %v733 = vld [vmem:[%s222 + $0xd38] sm:$0xff]
        %v734 = vld [vmem:[%s222 + $0xd40] sm:$0xff]
        %v735 = vld [vmem:[%s222 + $0xd48] sm:$0xff]
        %v736 = vld [vmem:[%s222 + $0xd50] sm:$0xff]
        %v737 = vld [vmem:[%s222 + $0xd58] sm:$0xff]
        %v738 = vld [vmem:[%s222 + $0xd60] sm:$0xff]
        %v739 = vld [vmem:[%s222 + $0xd68] sm:$0xff]
        %v740 = vld [vmem:[%s222 + $0xd70] sm:$0xff]
        %v741 = vld [vmem:[%s222 + $0xd78] sm:$0xff]
        %v742 = vld [vmem:[%s222 + $0xd80] sm:$0xff]
        %v743 = vld [vmem:[%s222 + $0xd88] sm:$0xff]
        %v744 = vld [vmem:[%s222 + $0xd90] sm:$0xff]
        %v745 = vld [vmem:[%s222 + $0xd98] sm:$0xff]
        %v746 = vld [vmem:[%s222 + $0xda0] sm:$0xff]
        %v747 = vld [vmem:[%s222 + $0xda8] sm:$0xff]
        %v748 = vld [vmem:[%s222 + $0xdb0] sm:$0xff]
        %v749 = vld [vmem:[%s222 + $0xdb8] sm:$0xff]
        %v750 = vld [vmem:[%s222 + $0xdc0] sm:$0xff]
        %v751 = vld [vmem:[%s222 + $0xdc8] sm:$0xff]
        %v752 = vld [vmem:[%s222 + $0xdd0] sm:$0xff]
        %v753 = vld [vmem:[%s222 + $0xdd8] sm:$0xff]
        %v754 = vld [vmem:[%s222 + $0xde0] sm:$0xff]
        %v755 = vld [vmem:[%s222 + $0xde8] sm:$0xff]
        %v756 = vld [vmem:[%s222 + $0xdf0] sm:$0xff]
        %v757 = vld [vmem:[%s222 + $0xdf8] sm:$0xff]
        %v758 = vld [vmem:[%s222 + $0xe00] sm:$0xff]
        %v759 = vld [vmem:[%s222 + $0xe08] sm:$0xff]
        %v760 = vld [vmem:[%s222 + $0xe10] sm:$0xff]
        %v761 = vld [vmem:[%s222 + $0xe18] sm:$0xff]
        %v762 = vld [vmem:[%s222 + $0xe20] sm:$0xff]
        %v763 = vld [vmem:[%s222 + $0xe28] sm:$0xff]
        %v764 = vld [vmem:[%s222 + $0xe30] sm:$0xff]
        %v765 = vld [vmem:[%s222 + $0xe38] sm:$0xff]
        %v766 = vld [vmem:[%s222 + $0xe40] sm:$0xff]
        %v767 = vld [vmem:[%s222 + $0xe48] sm:$0xff]
        %v768 = vld [vmem:[%s222 + $0xe50] sm:$0xff]
        %v769 = vld [vmem:[%s222 + $0xe58] sm:$0xff]
        %v770 = vld [vmem:[%s222 + $0xe60] sm:$0xff]
        %v771 = vld [vmem:[%s222 + $0xe68] sm:$0xff]
        %v772 = vld [vmem:[%s222 + $0xe70] sm:$0xff]
        %v773 = vld [vmem:[%s222 + $0xe78] sm:$0xff]
        %v774 = vld [vmem:[%s222 + $0xe80] sm:$0xff]
        %v775 = vld [vmem:[%s222 + $0xe88] sm:$0xff]
        %v776 = vld [vmem:[%s222 + $0xe90] sm:$0xff]
        %v777 = vld [vmem:[%s222 + $0xe98] sm:$0xff]
        %v778 = vld [vmem:[%s222 + $0xea0] sm:$0xff]
        %v779 = vld [vmem:[%s222 + $0xea8] sm:$0xff]
        %v780 = vld [vmem:[%s222 + $0xeb0] sm:$0xff]
        %v781 = vld [vmem:[%s222 + $0xeb8] sm:$0xff]
        %v782 = vld [vmem:[%s222 + $0xec0] sm:$0xff]
        %v783 = vld [vmem:[%s222 + $0xec8] sm:$0xff]
        %v784 = vld [vmem:[%s222 + $0xed0] sm:$0xff]
        %v785 = vld [vmem:[%s222 + $0xed8] sm:$0xff]
        %v786 = vld [vmem:[%s222 + $0xee0] sm:$0xff]
        %v787 = vld [vmem:[%s222 + $0xee8] sm:$0xff]
        %v788 = vld [vmem:[%s222 + $0xef0] sm:$0xff]
        %v789 = vld [vmem:[%s222 + $0xef8] sm:$0xff]
        %v790 = vld [vmem:[%s222 + $0xf00] sm:$0xff]
        %v791 = vld [vmem:[%s222 + $0xf08] sm:$0xff]
        %v792 = vld [vmem:[%s222 + $0xf10] sm:$0xff]
        %v793 = vld [vmem:[%s222 + $0xf18] sm:$0xff]
        %v794 = vld [vmem:[%s222 + $0xf20] sm:$0xff]
        %v795 = vld [vmem:[%s222 + $0xf28] sm:$0xff]
        %v796 = vld [vmem:[%s222 + $0xf30] sm:$0xff]
        %v797 = vld [vmem:[%s222 + $0xf38] sm:$0xff]
        %v798 = vld [vmem:[%s222 + $0xf40] sm:$0xff]
        %v799 = vld [vmem:[%s222 + $0xf48] sm:$0xff]
        %v800 = vld [vmem:[%s222 + $0xf50] sm:$0xff]
        %v801 = vld [vmem:[%s222 + $0xf58] sm:$0xff]
        %v802 = vld [vmem:[%s222 + $0xf60] sm:$0xff]
        %v803 = vld [vmem:[%s222 + $0xf68] sm:$0xff]
        %v804 = vld [vmem:[%s222 + $0xf70] sm:$0xff]
        %v805 = vld [vmem:[%s222 + $0xf78] sm:$0xff]
        %v806 = vld [vmem:[%s222 + $0xf80] sm:$0xff]
        %v807 = vld [vmem:[%s222 + $0xf88] sm:$0xff]
        %v808 = vld [vmem:[%s222 + $0xf90] sm:$0xff]
        %v809 = vld [vmem:[%s222 + $0xf98] sm:$0xff]
        %v810 = vld [vmem:[%s222 + $0xfa0] sm:$0xff]
        %v811 = vld [vmem:[%s222 + $0xfa8] sm:$0xff]
        %v812 = vld [vmem:[%s222 + $0xfb0] sm:$0xff]
        %v813 = vld [vmem:[%s222 + $0xfb8] sm:$0xff]
        %v814 = vld [vmem:[%s222 + $0xfc0] sm:$0xff]
        %v815 = vld [vmem:[%s222 + $0xfc8] sm:$0xff]
        %v816 = vld [vmem:[%s222 + $0xfd0] sm:$0xff]
        %v817 = vld [vmem:[%s222 + $0xfd8] sm:$0xff]
        %v818 = vld [vmem:[%s222 + $0xfe0] sm:$0xff]
        %v819 = vld [vmem:[%s222 + $0xfe8] sm:$0xff]
        %v820 = vld [vmem:[%s222 + $0xff0] sm:$0xff]
        %v821 = vld [vmem:[%s222 + $0xff8] sm:$0xff]
        %v822 = vld [vmem:[%s222 + $0x1000] sm:$0xff]
        %v823 = vld [vmem:[%s222 + $0x1008] sm:$0xff]
        %v824 = vld [vmem:[%s222 + $0x1010] sm:$0xff]
        %v825 = vld [vmem:[%s222 + $0x1018] sm:$0xff]
        %v826 = vld [vmem:[%s222 + $0x1020] sm:$0xff]
        %v827 = vld [vmem:[%s222 + $0x1028] sm:$0xff]
        %v828 = vld [vmem:[%s222 + $0x1030] sm:$0xff]
        %v829 = vld [vmem:[%s222 + $0x1038] sm:$0xff]
        %v830 = vld [vmem:[%s222 + $0x1040] sm:$0xff]
        %v831 = vld [vmem:[%s222 + $0x1048] sm:$0xff]
        %v832 = vld [vmem:[%s222 + $0x1050] sm:$0xff]
        %v833 = vld [vmem:[%s222 + $0x1058] sm:$0xff]
        %v834 = vld [vmem:[%s222 + $0x1060] sm:$0xff]
        %v835 = vld [vmem:[%s222 + $0x1068] sm:$0xff]
        %v836 = vld [vmem:[%s222 + $0x1070] sm:$0xff]
        %v837 = vld [vmem:[%s222 + $0x1078] sm:$0xff]
        %v838 = vld [vmem:[%s222 + $0x1080] sm:$0xff]
        %v839 = vld [vmem:[%s222 + $0x1088] sm:$0xff]
        %v840 = vld [vmem:[%s222 + $0x1090] sm:$0xff]
        %v841 = vld [vmem:[%s222 + $0x1098] sm:$0xff]
        %v842 = vld [vmem:[%s222 + $0x10a0] sm:$0xff]
        %v843 = vld [vmem:[%s222 + $0x10a8] sm:$0xff]
        %v844 = vld [vmem:[%s222 + $0x10b0] sm:$0xff]
        %v845 = vld [vmem:[%s222 + $0x10b8] sm:$0xff]
        %v846 = vld [vmem:[%s222 + $0x10c0] sm:$0xff]
        %v847 = vld [vmem:[%s222 + $0x10c8] sm:$0xff]
        %v848 = vld [vmem:[%s222 + $0x10d0] sm:$0xff]
        %v849 = vld [vmem:[%s222 + $0x10d8] sm:$0xff]
        %v850 = vld [vmem:[%s222 + $0x10e0] sm:$0xff]
        %v851 = vld [vmem:[%s222 + $0x10e8] sm:$0xff]
        %v852 = vld [vmem:[%s222 + $0x10f0] sm:$0xff]
        %v853 = vld [vmem:[%s222 + $0x10f8] sm:$0xff]
        %v854 = vld [vmem:[%s222 + $0x1100] sm:$0xff]
        %v855 = vld [vmem:[%s222 + $0x1108] sm:$0xff]
        %v856 = vld [vmem:[%s222 + $0x1110] sm:$0xff]
        %v857 = vld [vmem:[%s222 + $0x1118] sm:$0xff]
        %v858 = vld [vmem:[%s222 + $0x1120] sm:$0xff]
        %v859 = vld [vmem:[%s222 + $0x1128] sm:$0xff]
        %v860 = vld [vmem:[%s222 + $0x1130] sm:$0xff]
        %v861 = vld [vmem:[%s222 + $0x1138] sm:$0xff]
        %v862 = vld [vmem:[%s222 + $0x1140] sm:$0xff]
        %v863 = vld [vmem:[%s222 + $0x1148] sm:$0xff]
        %v864 = vld [vmem:[%s222 + $0x1150] sm:$0xff]
        %v865 = vld [vmem:[%s222 + $0x1158] sm:$0xff]
        %v866 = vld [vmem:[%s222 + $0x1160] sm:$0xff]
        %v867 = vld [vmem:[%s222 + $0x1168] sm:$0xff]
        %v868 = vld [vmem:[%s222 + $0x1170] sm:$0xff]
        %v869 = vld [vmem:[%s222 + $0x1178] sm:$0xff]
        %v870 = vld [vmem:[%s222 + $0x1180] sm:$0xff]
        %v871 = vld [vmem:[%s222 + $0x1188] sm:$0xff]
        %v872 = vld [vmem:[%s222 + $0x1190] sm:$0xff]
        %v873 = vld [vmem:[%s222 + $0x1198] sm:$0xff]
        %v874 = vld [vmem:[%s222 + $0x11a0] sm:$0xff]
        %v875 = vld [vmem:[%s222 + $0x11a8] sm:$0xff]
        %v876 = vld [vmem:[%s222 + $0x11b0] sm:$0xff]
        %v877 = vld [vmem:[%s222 + $0x11b8] sm:$0xff]
        %v878 = vld [vmem:[%s222 + $0x11c0] sm:$0xff]
        %v879 = vld [vmem:[%s222 + $0x11c8] sm:$0xff]
        %v880 = vld [vmem:[%s222 + $0x11d0] sm:$0xff]
        %v881 = vld [vmem:[%s222 + $0x11d8] sm:$0xff]
        %v882 = vld [vmem:[%s222 + $0x11e0] sm:$0xff]
        %v883 = vld [vmem:[%s222 + $0x11e8] sm:$0xff]
        %v884 = vld [vmem:[%s222 + $0x11f0] sm:$0xff]
        %v885 = vld [vmem:[%s222 + $0x11f8] sm:$0xff]
        %v886 = vld [vmem:[%s222 + $0x1200] sm:$0xff]
        %v887 = vld [vmem:[%s222 + $0x1208] sm:$0xff]
        %v888 = vld [vmem:[%s222 + $0x1210] sm:$0xff]
        %v889 = vld [vmem:[%s222 + $0x1218] sm:$0xff]
        %v890 = vld [vmem:[%s222 + $0x1220] sm:$0xff]
        %v891 = vld [vmem:[%s222 + $0x1228] sm:$0xff]
        %v892 = vld [vmem:[%s222 + $0x1230] sm:$0xff]
        %v893 = vld [vmem:[%s222 + $0x1238] sm:$0xff]
        %v894 = vld [vmem:[%s222 + $0x1240] sm:$0xff]
        %v895 = vld [vmem:[%s222 + $0x1248] sm:$0xff]
        %v896 = vld [vmem:[%s222 + $0x1250] sm:$0xff]
        %v897 = vld [vmem:[%s222 + $0x1258] sm:$0xff]
        %v898 = vld [vmem:[%s222 + $0x1260] sm:$0xff]
        %v899 = vld [vmem:[%s222 + $0x1268] sm:$0xff]
        %v900 = vld [vmem:[%s222 + $0x1270] sm:$0xff]
        %v901 = vld [vmem:[%s222 + $0x1278] sm:$0xff]
        %v902 = vld [vmem:[%s222 + $0x1280] sm:$0xff]
        %v903 = vld [vmem:[%s222 + $0x1288] sm:$0xff]
        %v904 = vld [vmem:[%s222 + $0x1290] sm:$0xff]
        %v905 = vld [vmem:[%s222 + $0x1298] sm:$0xff]
        %v906 = vld [vmem:[%s222 + $0x12a0] sm:$0xff]
        %v907 = vld [vmem:[%s222 + $0x12a8] sm:$0xff]
        %v908 = vld [vmem:[%s222 + $0x12b0] sm:$0xff]
        %v909 = vld [vmem:[%s222 + $0x12b8] sm:$0xff]
        %v910 = vld [vmem:[%s222 + $0x12c0] sm:$0xff]
        %v911 = vld [vmem:[%s222 + $0x12c8] sm:$0xff]
        %v912 = vld [vmem:[%s222 + $0x12d0] sm:$0xff]
        %v913 = vld [vmem:[%s222 + $0x12d8] sm:$0xff]
        %v914 = vld [vmem:[%s222 + $0x12e0] sm:$0xff]
        %v915 = vld [vmem:[%s222 + $0x12e8] sm:$0xff]
        %v916 = vld [vmem:[%s222 + $0x12f0] sm:$0xff]
        %v917 = vld [vmem:[%s222 + $0x12f8] sm:$0xff]
        %v918 = vld [vmem:[%s222 + $0x1300] sm:$0xff]
        %v919 = vld [vmem:[%s222 + $0x1308] sm:$0xff]
        %v920 = vld [vmem:[%s222 + $0x1310] sm:$0xff]
        %v921 = vld [vmem:[%s222 + $0x1318] sm:$0xff]
        %v922 = vld [vmem:[%s222 + $0x1320] sm:$0xff]
        %v923 = vld [vmem:[%s222 + $0x1328] sm:$0xff]
        %v924 = vld [vmem:[%s222 + $0x1330] sm:$0xff]
        %v925 = vld [vmem:[%s222 + $0x1338] sm:$0xff]
        %v926 = vld [vmem:[%s222 + $0x1340] sm:$0xff]
        %v927 = vld [vmem:[%s222 + $0x1348] sm:$0xff]
        %v928 = vld [vmem:[%s222 + $0x1350] sm:$0xff]
        %v929 = vld [vmem:[%s222 + $0x1358] sm:$0xff]
        %v930 = vld [vmem:[%s222 + $0x1360] sm:$0xff]
        %v931 = vld [vmem:[%s222 + $0x1368] sm:$0xff]
        %v932 = vld [vmem:[%s222 + $0x1370] sm:$0xff]
        %v933 = vld [vmem:[%s222 + $0x1378] sm:$0xff]
        %v934 = vld [vmem:[%s222 + $0x1380] sm:$0xff]
        %v935 = vld [vmem:[%s222 + $0x1388] sm:$0xff]
        %v936 = vld [vmem:[%s222 + $0x1390] sm:$0xff]
        %v937 = vld [vmem:[%s222 + $0x1398] sm:$0xff]
        %v938 = vld [vmem:[%s222 + $0x13a0] sm:$0xff]
        %v939 = vld [vmem:[%s222 + $0x13a8] sm:$0xff]
        %v940 = vld [vmem:[%s222 + $0x13b0] sm:$0xff]
        %v941 = vld [vmem:[%s222 + $0x13b8] sm:$0xff]
        %v942 = vld [vmem:[%s222 + $0x13c0] sm:$0xff]
        %v943 = vld [vmem:[%s222 + $0x13c8] sm:$0xff]
        %v944 = vld [vmem:[%s222 + $0x13d0] sm:$0xff]
        %v945 = vld [vmem:[%s222 + $0x13d8] sm:$0xff]
        %v946 = vld [vmem:[%s222 + $0x13e0] sm:$0xff]
        %v947 = vld [vmem:[%s222 + $0x13e8] sm:$0xff]
        %v948 = vld [vmem:[%s222 + $0x13f0] sm:$0xff]
        %v949 = vld [vmem:[%s222 + $0x13f8] sm:$0xff]
        %v950 = vld [vmem:[%s222 + $0x1400] sm:$0xff]
        %v951 = vld [vmem:[%s222 + $0x1408] sm:$0xff]
        %v952 = vld [vmem:[%s222 + $0x1410] sm:$0xff]
        %v953 = vld [vmem:[%s222 + $0x1418] sm:$0xff]
        %v954 = vld [vmem:[%s222 + $0x1420] sm:$0xff]
        %v955 = vld [vmem:[%s222 + $0x1428] sm:$0xff]
        %v956 = vld [vmem:[%s222 + $0x1430] sm:$0xff]
        %v957 = vld [vmem:[%s222 + $0x1438] sm:$0xff]
        %v958 = vld [vmem:[%s222 + $0x1440] sm:$0xff]
        %v959 = vld [vmem:[%s222 + $0x1448] sm:$0xff]
        %v960 = vld [vmem:[%s222 + $0x1450] sm:$0xff]
        %v961 = vld [vmem:[%s222 + $0x1458] sm:$0xff]
        %v962 = vld [vmem:[%s222 + $0x1460] sm:$0xff]
        %v963 = vld [vmem:[%s222 + $0x1468] sm:$0xff]
        %v964 = vld [vmem:[%s222 + $0x1470] sm:$0xff]
        %v965 = vld [vmem:[%s222 + $0x1478] sm:$0xff]
        %v966 = vld [vmem:[%s222 + $0x1480] sm:$0xff]
        %v967 = vld [vmem:[%s222 + $0x1488] sm:$0xff]
        %v968 = vld [vmem:[%s222 + $0x1490] sm:$0xff]
        %v969 = vld [vmem:[%s222 + $0x1498] sm:$0xff]
        %v970 = vld [vmem:[%s222 + $0x14a0] sm:$0xff]
        %v971 = vld [vmem:[%s222 + $0x14a8] sm:$0xff]
        %v972 = vld [vmem:[%s222 + $0x14b0] sm:$0xff]
        %v973 = vld [vmem:[%s222 + $0x14b8] sm:$0xff]
        %v974 = vld [vmem:[%s222 + $0x14c0] sm:$0xff]
        %v975 = vld [vmem:[%s222 + $0x14c8] sm:$0xff]
        %v976 = vld [vmem:[%s222 + $0x14d0] sm:$0xff]
        %v977 = vld [vmem:[%s222 + $0x14d8] sm:$0xff]
        %v978 = vld [vmem:[%s222 + $0x14e0] sm:$0xff]
        %v979 = vld [vmem:[%s222 + $0x14e8] sm:$0xff]
        %v980 = vld [vmem:[%s222 + $0x14f0] sm:$0xff]
        %v981 = vld [vmem:[%s222 + $0x14f8] sm:$0xff]
        %v982 = vld [vmem:[%s222 + $0x1500] sm:$0xff]
        %v983 = vld [vmem:[%s222 + $0x1508] sm:$0xff]
        %v984 = vld [vmem:[%s222 + $0x1510] sm:$0xff]
        %v985 = vld [vmem:[%s222 + $0x1518] sm:$0xff]
        %v986 = vld [vmem:[%s222 + $0x1520] sm:$0xff]
        %v987 = vld [vmem:[%s222 + $0x1528] sm:$0xff]
        %v988 = vld [vmem:[%s222 + $0x1530] sm:$0xff]
        %v989 = vld [vmem:[%s222 + $0x1538] sm:$0xff]
        %v990 = vld [vmem:[%s222 + $0x1540] sm:$0xff]
        %v991 = vld [vmem:[%s222 + $0x1548] sm:$0xff]
        %v992 = vld [vmem:[%s222 + $0x1550] sm:$0xff]
        %v993 = vld [vmem:[%s222 + $0x1558] sm:$0xff]
        %v994 = vld [vmem:[%s222 + $0x1560] sm:$0xff]
        %v995 = vld [vmem:[%s222 + $0x1568] sm:$0xff]
        %v996 = vld [vmem:[%s222 + $0x1570] sm:$0xff]
        %v997 = vld [vmem:[%s222 + $0x1578] sm:$0xff]
        %v998 = vld [vmem:[%s222 + $0x1580] sm:$0xff]
        %v999 = vld [vmem:[%s222 + $0x1588] sm:$0xff]
        %v1000 = vld [vmem:[%s222 + $0x1590] sm:$0xff]
        %v1001 = vld [vmem:[%s222 + $0x1598] sm:$0xff]
        %v1002 = vld [vmem:[%s222 + $0x15a0] sm:$0xff]
        %v1003 = vld [vmem:[%s222 + $0x15a8] sm:$0xff]
        %v1004 = vld [vmem:[%s222 + $0x15b0] sm:$0xff]
        %v1005 = vld [vmem:[%s222 + $0x15b8] sm:$0xff]
        %v1006 = vld [vmem:[%s222 + $0x15c0] sm:$0xff]
        %v1007 = vld [vmem:[%s222 + $0x15c8] sm:$0xff]
        %v1008 = vld [vmem:[%s222 + $0x15d0] sm:$0xff]
        %v1009 = vld [vmem:[%s222 + $0x15d8] sm:$0xff]
        %v1010 = vld [vmem:[%s222 + $0x15e0] sm:$0xff]
        %v1011 = vld [vmem:[%s222 + $0x15e8] sm:$0xff]
        %v1012 = vld [vmem:[%s222 + $0x15f0] sm:$0xff]
        %v1013 = vld [vmem:[%s222 + $0x15f8] sm:$0xff]
        %v1014 = vld [vmem:[%s222 + $0x1600] sm:$0xff]
        %v1015 = vld [vmem:[%s222 + $0x1608] sm:$0xff]
        %v1016 = vld [vmem:[%s222 + $0x1610] sm:$0xff]
        %v1017 = vld [vmem:[%s222 + $0x1618] sm:$0xff]
        %v1018 = vld [vmem:[%s222 + $0x1620] sm:$0xff]
        %v1019 = vld [vmem:[%s222 + $0x1628] sm:$0xff]
        %v1020 = vld [vmem:[%s222 + $0x1630] sm:$0xff]
        %v1021 = vld [vmem:[%s222 + $0x1638] sm:$0xff]
        %v1022 = vld [vmem:[%s222 + $0x1640] sm:$0xff]
        %v1023 = vld [vmem:[%s222 + $0x1648] sm:$0xff]
        %v1024 = vld [vmem:[%s222 + $0x1650] sm:$0xff]
        %v1025 = vld [vmem:[%s222 + $0x1658] sm:$0xff]
        %v1026 = vld [vmem:[%s222 + $0x1660] sm:$0xff]
        %v1027 = vld [vmem:[%s222 + $0x1668] sm:$0xff]
        %v1028 = vld [vmem:[%s222 + $0x1670] sm:$0xff]
        %v1029 = vld [vmem:[%s222 + $0x1678] sm:$0xff]
        %v1030 = vld [vmem:[%s222 + $0x1680] sm:$0xff]
        %v1031 = vld [vmem:[%s222 + $0x1688] sm:$0xff]
        %v1032 = vld [vmem:[%s222 + $0x1690] sm:$0xff]
        %v1033 = vld [vmem:[%s222 + $0x1698] sm:$0xff]
        %v1034 = vld [vmem:[%s222 + $0x16a0] sm:$0xff]
        %v1035 = vld [vmem:[%s222 + $0x16a8] sm:$0xff]
        %v1036 = vld [vmem:[%s222 + $0x16b0] sm:$0xff]
        %v1037 = vld [vmem:[%s222 + $0x16b8] sm:$0xff]
        %v1038 = vld [vmem:[%s222 + $0x16c0] sm:$0xff]
        %v1039 = vld [vmem:[%s222 + $0x16c8] sm:$0xff]
        %v1040 = vld [vmem:[%s222 + $0x16d0] sm:$0xff]
        %v1041 = vld [vmem:[%s222 + $0x16d8] sm:$0xff]
        %v1042 = vld [vmem:[%s222 + $0x16e0] sm:$0xff]
        %v1043 = vld [vmem:[%s222 + $0x16e8] sm:$0xff]
        %v1044 = vld [vmem:[%s222 + $0x16f0] sm:$0xff]
        %v1045 = vld [vmem:[%s222 + $0x16f8] sm:$0xff]
        %v1046 = vld [vmem:[%s222 + $0x1700] sm:$0xff]
        %v1047 = vld [vmem:[%s222 + $0x1708] sm:$0xff]
        %v1048 = vld [vmem:[%s222 + $0x1710] sm:$0xff]
        %v1049 = vld [vmem:[%s222 + $0x1718] sm:$0xff]
        %v1050 = vld [vmem:[%s222 + $0x1720] sm:$0xff]
        %v1051 = vld [vmem:[%s222 + $0x1728] sm:$0xff]
        %v1052 = vld [vmem:[%s222 + $0x1730] sm:$0xff]
        %v1053 = vld [vmem:[%s222 + $0x1738] sm:$0xff]
        %v1054 = vld [vmem:[%s222 + $0x1740] sm:$0xff]
        %v1055 = vld [vmem:[%s222 + $0x1748] sm:$0xff]
        %v1056 = vld [vmem:[%s222 + $0x1750] sm:$0xff]
        %v1057 = vld [vmem:[%s222 + $0x1758] sm:$0xff]
        %v1058 = vld [vmem:[%s222 + $0x1760] sm:$0xff]
        %v1059 = vld [vmem:[%s222 + $0x1768] sm:$0xff]
        %v1060 = vld [vmem:[%s222 + $0x1770] sm:$0xff]
        %v1061 = vld [vmem:[%s222 + $0x1778] sm:$0xff]
        %v1062 = vld [vmem:[%s222 + $0x1780] sm:$0xff]
        %v1063 = vld [vmem:[%s222 + $0x1788] sm:$0xff]
        %v1064 = vld [vmem:[%s222 + $0x1790] sm:$0xff]
        %v1065 = vld [vmem:[%s222 + $0x1798] sm:$0xff]
        %v1066 = vld [vmem:[%s222 + $0x17a0] sm:$0xff]
        %v1067 = vld [vmem:[%s222 + $0x17a8] sm:$0xff]
        %v1068 = vld [vmem:[%s222 + $0x17b0] sm:$0xff]
        %v1069 = vld [vmem:[%s222 + $0x17b8] sm:$0xff]
        %v1070 = vld [vmem:[%s222 + $0x17c0] sm:$0xff]
        %v1071 = vld [vmem:[%s222 + $0x17c8] sm:$0xff]
        %v1072 = vld [vmem:[%s222 + $0x17d0] sm:$0xff]
        %v1073 = vld [vmem:[%s222 + $0x17d8] sm:$0xff]
        %v1074 = vld [vmem:[%s222 + $0x17e0] sm:$0xff]
        %v1075 = vld [vmem:[%s222 + $0x17e8] sm:$0xff]
        %v1076 = vld [vmem:[%s222 + $0x17f0] sm:$0xff]
        %v1077 = vld [vmem:[%s222 + $0x17f8] sm:$0xff]
        %v1078 = vld [vmem:[%s231] sm:$0xf]
        %v1080 = vlaneseq
        %v1081 = vshrl.u32 %v1080, 7
        %v1082 = vsub.s32 0, %v1081
        %v1083 = vrot.slane %v1078, %v1082
        %v1084 = vlaneseq
        %v1085 = vshrl.u32 %v1084, 7
        %v1086 = vsub.s32 1, %v1085
        %v1087 = vrot.slane %v1078, %v1086
        %v1088 = vlaneseq
        %v1089 = vshrl.u32 %v1088, 7
        %v1090 = vsub.s32 2, %v1089
        %v1091 = vrot.slane %v1078, %v1090
        %v1092 = vlaneseq
        %v1093 = vshrl.u32 %v1092, 7
        %v1094 = vsub.s32 3, %v1093
        %v1095 = vrot.slane %v1078, %v1094
        %v1868 = vunpack.c.l.b16 %v310
        %v1869 = vunpack.c.h.b16 %v310
        %v1870 = vunpack.c.l.b16 %v311
        %v1871 = vunpack.c.h.b16 %v311
        %v1872 = vunpack.c.l.b16 %v312
        %v1873 = vunpack.c.h.b16 %v312
        %v1874 = vunpack.c.l.b16 %v313
        %v1875 = vunpack.c.h.b16 %v313
        %v1876 = vunpack.c.l.b16 %v314
        %v1877 = vunpack.c.h.b16 %v314
        %v1878 = vunpack.c.l.b16 %v315
        %v1879 = vunpack.c.h.b16 %v315
        %v1880 = vunpack.c.l.b16 %v316
        %v1881 = vunpack.c.h.b16 %v316
        %v1882 = vunpack.c.l.b16 %v317
        %v1883 = vunpack.c.h.b16 %v317
        %v1884 = vunpack.c.l.b16 %v318
        %v1885 = vunpack.c.h.b16 %v318
        %v1886 = vunpack.c.l.b16 %v319
        %v1887 = vunpack.c.h.b16 %v319
        %v1888 = vunpack.c.l.b16 %v320
        %v1889 = vunpack.c.h.b16 %v320
        %v1890 = vunpack.c.l.b16 %v321
        %v1891 = vunpack.c.h.b16 %v321
        %v1892 = vunpack.c.l.b16 %v322
        %v1893 = vunpack.c.h.b16 %v322
        %v1894 = vunpack.c.l.b16 %v323
        %v1895 = vunpack.c.h.b16 %v323
        %v1896 = vunpack.c.l.b16 %v324
        %v1897 = vunpack.c.h.b16 %v324
        %v1898 = vunpack.c.l.b16 %v325
        %v1899 = vunpack.c.h.b16 %v325
        %v1900 = vunpack.c.l.b16 %v326
        %v1901 = vunpack.c.h.b16 %v326
        %v1902 = vunpack.c.l.b16 %v327
        %v1903 = vunpack.c.h.b16 %v327
        %v1904 = vunpack.c.l.b16 %v328
        %v1905 = vunpack.c.h.b16 %v328
        %v1906 = vunpack.c.l.b16 %v329
        %v1907 = vunpack.c.h.b16 %v329
        %v1908 = vunpack.c.l.b16 %v330
        %v1909 = vunpack.c.h.b16 %v330
        %v1910 = vunpack.c.l.b16 %v331
        %v1911 = vunpack.c.h.b16 %v331
        %v1912 = vunpack.c.l.b16 %v332
        %v1913 = vunpack.c.h.b16 %v332
        %v1914 = vunpack.c.l.b16 %v333
        %v1915 = vunpack.c.h.b16 %v333
        %v1916 = vunpack.c.l.b16 %v334
        %v1917 = vunpack.c.h.b16 %v334
        %v1918 = vunpack.c.l.b16 %v335
        %v1919 = vunpack.c.h.b16 %v335
        %v1920 = vunpack.c.l.b16 %v336
        %v1921 = vunpack.c.h.b16 %v336
        %v1922 = vunpack.c.l.b16 %v337
        %v1923 = vunpack.c.h.b16 %v337
        %v1924 = vunpack.c.l.b16 %v338
        %v1925 = vunpack.c.h.b16 %v338
        %v1926 = vunpack.c.l.b16 %v339
        %v1927 = vunpack.c.h.b16 %v339
        %v1928 = vunpack.c.l.b16 %v340
        %v1929 = vunpack.c.h.b16 %v340
        %v1930 = vunpack.c.l.b16 %v341
        %v1931 = vunpack.c.h.b16 %v341
        %v1932 = vunpack.c.l.b16 %v342
        %v1933 = vunpack.c.h.b16 %v342
        %v1934 = vunpack.c.l.b16 %v343
        %v1935 = vunpack.c.h.b16 %v343
        %v1936 = vunpack.c.l.b16 %v344
        %v1937 = vunpack.c.h.b16 %v344
        %v1938 = vunpack.c.l.b16 %v345
        %v1939 = vunpack.c.h.b16 %v345
        %v1940 = vunpack.c.l.b16 %v346
        %v1941 = vunpack.c.h.b16 %v346
        %v1942 = vunpack.c.l.b16 %v347
        %v1943 = vunpack.c.h.b16 %v347
        %v1944 = vunpack.c.l.b16 %v348
        %v1945 = vunpack.c.h.b16 %v348
        %v1946 = vunpack.c.l.b16 %v349
        %v1947 = vunpack.c.h.b16 %v349
        %v1948 = vunpack.c.l.b16 %v350
        %v1949 = vunpack.c.h.b16 %v350
        %v1950 = vunpack.c.l.b16 %v351
        %v1951 = vunpack.c.h.b16 %v351
        %v1952 = vunpack.c.l.b16 %v352
        %v1953 = vunpack.c.h.b16 %v352
        %v1954 = vunpack.c.l.b16 %v353
        %v1955 = vunpack.c.h.b16 %v353
        %v1956 = vunpack.c.l.b16 %v354
        %v1957 = vunpack.c.h.b16 %v354
        %v1958 = vunpack.c.l.b16 %v355
        %v1959 = vunpack.c.h.b16 %v355
        %v1960 = vunpack.c.l.b16 %v356
        %v1961 = vunpack.c.h.b16 %v356
        %v1962 = vunpack.c.l.b16 %v357
        %v1963 = vunpack.c.h.b16 %v357
        %v1964 = vunpack.c.l.b16 %v358
        %v1965 = vunpack.c.h.b16 %v358
        %v1966 = vunpack.c.l.b16 %v359
        %v1967 = vunpack.c.h.b16 %v359
        %v1968 = vunpack.c.l.b16 %v360
        %v1969 = vunpack.c.h.b16 %v360
        %v1970 = vunpack.c.l.b16 %v361
        %v1971 = vunpack.c.h.b16 %v361
        %v1972 = vunpack.c.l.b16 %v362
        %v1973 = vunpack.c.h.b16 %v362
        %v1974 = vunpack.c.l.b16 %v363
        %v1975 = vunpack.c.h.b16 %v363
        %v1976 = vunpack.c.l.b16 %v364
        %v1977 = vunpack.c.h.b16 %v364
        %v1978 = vunpack.c.l.b16 %v365
        %v1979 = vunpack.c.h.b16 %v365
        %v1980 = vunpack.c.l.b16 %v366
        %v1981 = vunpack.c.h.b16 %v366
        %v1982 = vunpack.c.l.b16 %v367
        %v1983 = vunpack.c.h.b16 %v367
        %v1984 = vunpack.c.l.b16 %v368
        %v1985 = vunpack.c.h.b16 %v368
        %v1986 = vunpack.c.l.b16 %v369
        %v1987 = vunpack.c.h.b16 %v369
        %v1988 = vunpack.c.l.b16 %v370
        %v1989 = vunpack.c.h.b16 %v370
        %v1990 = vunpack.c.l.b16 %v371
        %v1991 = vunpack.c.h.b16 %v371
        %v1992 = vunpack.c.l.b16 %v372
        %v1993 = vunpack.c.h.b16 %v372
        %v1994 = vunpack.c.l.b16 %v373
        %v1995 = vunpack.c.h.b16 %v373
        %v1996 = vunpack.c.l.b16 %v374
        %v1997 = vunpack.c.h.b16 %v374
        %v1998 = vunpack.c.l.b16 %v375
        %v1999 = vunpack.c.h.b16 %v375
        %v2000 = vunpack.c.l.b16 %v376
        %v2001 = vunpack.c.h.b16 %v376
        %v2002 = vunpack.c.l.b16 %v377
        %v2003 = vunpack.c.h.b16 %v377
        %v2004 = vunpack.c.l.b16 %v378
        %v2005 = vunpack.c.h.b16 %v378
        %v2006 = vunpack.c.l.b16 %v379
        %v2007 = vunpack.c.h.b16 %v379
        %v2008 = vunpack.c.l.b16 %v380
        %v2009 = vunpack.c.h.b16 %v380
        %v2010 = vunpack.c.l.b16 %v381
        %v2011 = vunpack.c.h.b16 %v381
        %v2012 = vunpack.c.l.b16 %v382
        %v2013 = vunpack.c.h.b16 %v382
        %v2014 = vunpack.c.l.b16 %v383
        %v2015 = vunpack.c.h.b16 %v383
        %v2016 = vunpack.c.l.b16 %v384
        %v2017 = vunpack.c.h.b16 %v384
        %v2018 = vunpack.c.l.b16 %v385
        %v2019 = vunpack.c.h.b16 %v385
        %v2020 = vunpack.c.l.b16 %v386
        %v2021 = vunpack.c.h.b16 %v386
        %v2022 = vunpack.c.l.b16 %v387
        %v2023 = vunpack.c.h.b16 %v387
        %v2024 = vunpack.c.l.b16 %v388
        %v2025 = vunpack.c.h.b16 %v388
        %v2026 = vunpack.c.l.b16 %v389
        %v2027 = vunpack.c.h.b16 %v389
        %v2028 = vunpack.c.l.b16 %v390
        %v2029 = vunpack.c.h.b16 %v390
        %v2030 = vunpack.c.l.b16 %v391
        %v2031 = vunpack.c.h.b16 %v391
        %v2032 = vunpack.c.l.b16 %v392
        %v2033 = vunpack.c.h.b16 %v392
        %v2034 = vunpack.c.l.b16 %v393
        %v2035 = vunpack.c.h.b16 %v393
        %v2036 = vunpack.c.l.b16 %v394
        %v2037 = vunpack.c.h.b16 %v394
        %v2038 = vunpack.c.l.b16 %v395
        %v2039 = vunpack.c.h.b16 %v395
        %v2040 = vunpack.c.l.b16 %v396
        %v2041 = vunpack.c.h.b16 %v396
        %v2042 = vunpack.c.l.b16 %v397
        %v2043 = vunpack.c.h.b16 %v397
        %v2044 = vunpack.c.l.b16 %v398
        %v2045 = vunpack.c.h.b16 %v398
        %v2046 = vunpack.c.l.b16 %v399
        %v2047 = vunpack.c.h.b16 %v399
        %v2048 = vunpack.c.l.b16 %v400
        %v2049 = vunpack.c.h.b16 %v400
        %v2050 = vunpack.c.l.b16 %v401
        %v2051 = vunpack.c.h.b16 %v401
        %v2052 = vunpack.c.l.b16 %v402
        %v2053 = vunpack.c.h.b16 %v402
        %v2054 = vunpack.c.l.b16 %v403
        %v2055 = vunpack.c.h.b16 %v403
        %v2056 = vunpack.c.l.b16 %v404
        %v2057 = vunpack.c.h.b16 %v404
        %v2058 = vunpack.c.l.b16 %v405
        %v2059 = vunpack.c.h.b16 %v405
        %v2060 = vunpack.c.l.b16 %v406
        %v2061 = vunpack.c.h.b16 %v406
        %v2062 = vunpack.c.l.b16 %v407
        %v2063 = vunpack.c.h.b16 %v407
        %v2064 = vunpack.c.l.b16 %v408
        %v2065 = vunpack.c.h.b16 %v408
        %v2066 = vunpack.c.l.b16 %v409
        %v2067 = vunpack.c.h.b16 %v409
        %v2068 = vunpack.c.l.b16 %v410
        %v2069 = vunpack.c.h.b16 %v410
        %v2070 = vunpack.c.l.b16 %v411
        %v2071 = vunpack.c.h.b16 %v411
        %v2072 = vunpack.c.l.b16 %v412
        %v2073 = vunpack.c.h.b16 %v412
        %v2074 = vunpack.c.l.b16 %v413
        %v2075 = vunpack.c.h.b16 %v413
        %v2076 = vunpack.c.l.b16 %v414
        %v2077 = vunpack.c.h.b16 %v414
        %v2078 = vunpack.c.l.b16 %v415
        %v2079 = vunpack.c.h.b16 %v415
        %v2080 = vunpack.c.l.b16 %v416
        %v2081 = vunpack.c.h.b16 %v416
        %v2082 = vunpack.c.l.b16 %v417
        %v2083 = vunpack.c.h.b16 %v417
        %v2084 = vunpack.c.l.b16 %v418
        %v2085 = vunpack.c.h.b16 %v418
        %v2086 = vunpack.c.l.b16 %v419
        %v2087 = vunpack.c.h.b16 %v419
        %v2088 = vunpack.c.l.b16 %v420
        %v2089 = vunpack.c.h.b16 %v420
        %v2090 = vunpack.c.l.b16 %v421
        %v2091 = vunpack.c.h.b16 %v421
        %v2092 = vunpack.c.l.b16 %v422
        %v2093 = vunpack.c.h.b16 %v422
        %v2094 = vunpack.c.l.b16 %v423
        %v2095 = vunpack.c.h.b16 %v423
        %v2096 = vunpack.c.l.b16 %v424
        %v2097 = vunpack.c.h.b16 %v424
        %v2098 = vunpack.c.l.b16 %v425
        %v2099 = vunpack.c.h.b16 %v425
        %v2100 = vunpack.c.l.b16 %v426
        %v2101 = vunpack.c.h.b16 %v426
        %v2102 = vunpack.c.l.b16 %v427
        %v2103 = vunpack.c.h.b16 %v427
        %v2104 = vunpack.c.l.b16 %v428
        %v2105 = vunpack.c.h.b16 %v428
        %v2106 = vunpack.c.l.b16 %v429
        %v2107 = vunpack.c.h.b16 %v429
        %v2108 = vunpack.c.l.b16 %v430
        %v2109 = vunpack.c.h.b16 %v430
        %v2110 = vunpack.c.l.b16 %v431
        %v2111 = vunpack.c.h.b16 %v431
        %v2112 = vunpack.c.l.b16 %v432
        %v2113 = vunpack.c.h.b16 %v432
        %v2114 = vunpack.c.l.b16 %v433
        %v2115 = vunpack.c.h.b16 %v433
        %v2116 = vunpack.c.l.b16 %v434
        %v2117 = vunpack.c.h.b16 %v434
        %v2118 = vunpack.c.l.b16 %v435
        %v2119 = vunpack.c.h.b16 %v435
        %v2120 = vunpack.c.l.b16 %v436
        %v2121 = vunpack.c.h.b16 %v436
        %v2122 = vunpack.c.l.b16 %v437
        %v2123 = vunpack.c.h.b16 %v437
        %v2124 = vunpack.c.l.b16 %v438
        %v2125 = vunpack.c.h.b16 %v438
        %v2126 = vunpack.c.l.b16 %v439
        %v2127 = vunpack.c.h.b16 %v439
        %v2128 = vunpack.c.l.b16 %v440
        %v2129 = vunpack.c.h.b16 %v440
        %v2130 = vunpack.c.l.b16 %v441
        %v2131 = vunpack.c.h.b16 %v441
        %v2132 = vunpack.c.l.b16 %v442
        %v2133 = vunpack.c.h.b16 %v442
        %v2134 = vunpack.c.l.b16 %v443
        %v2135 = vunpack.c.h.b16 %v443
        %v2136 = vunpack.c.l.b16 %v444
        %v2137 = vunpack.c.h.b16 %v444
        %v2138 = vunpack.c.l.b16 %v445
        %v2139 = vunpack.c.h.b16 %v445
        %v2140 = vunpack.c.l.b16 %v446
        %v2141 = vunpack.c.h.b16 %v446
        %v2142 = vunpack.c.l.b16 %v447
        %v2143 = vunpack.c.h.b16 %v447
        %v2144 = vunpack.c.l.b16 %v448
        %v2145 = vunpack.c.h.b16 %v448
        %v2146 = vunpack.c.l.b16 %v449
        %v2147 = vunpack.c.h.b16 %v449
        %v2148 = vunpack.c.l.b16 %v450
        %v2149 = vunpack.c.h.b16 %v450
        %v2150 = vunpack.c.l.b16 %v451
        %v2151 = vunpack.c.h.b16 %v451
        %v2152 = vunpack.c.l.b16 %v452
        %v2153 = vunpack.c.h.b16 %v452
        %v2154 = vunpack.c.l.b16 %v453
        %v2155 = vunpack.c.h.b16 %v453
        %v2156 = vunpack.c.l.b16 %v454
        %v2157 = vunpack.c.h.b16 %v454
        %v2158 = vunpack.c.l.b16 %v455
        %v2159 = vunpack.c.h.b16 %v455
        %v2160 = vunpack.c.l.b16 %v456
        %v2161 = vunpack.c.h.b16 %v456
        %v2162 = vunpack.c.l.b16 %v457
        %v2163 = vunpack.c.h.b16 %v457
        %v2164 = vunpack.c.l.b16 %v458
        %v2165 = vunpack.c.h.b16 %v458
        %v2166 = vunpack.c.l.b16 %v459
        %v2167 = vunpack.c.h.b16 %v459
        %v2168 = vunpack.c.l.b16 %v460
        %v2169 = vunpack.c.h.b16 %v460
        %v2170 = vunpack.c.l.b16 %v461
        %v2171 = vunpack.c.h.b16 %v461
        %v2172 = vunpack.c.l.b16 %v462
        %v2173 = vunpack.c.h.b16 %v462
        %v2174 = vunpack.c.l.b16 %v463
        %v2175 = vunpack.c.h.b16 %v463
        %v2176 = vunpack.c.l.b16 %v464
        %v2177 = vunpack.c.h.b16 %v464
        %v2178 = vunpack.c.l.b16 %v465
        %v2179 = vunpack.c.h.b16 %v465
        %v2180 = vunpack.c.l.b16 %v466
        %v2181 = vunpack.c.h.b16 %v466
        %v2182 = vunpack.c.l.b16 %v467
        %v2183 = vunpack.c.h.b16 %v467
        %v2184 = vunpack.c.l.b16 %v468
        %v2185 = vunpack.c.h.b16 %v468
        %v2186 = vunpack.c.l.b16 %v469
        %v2187 = vunpack.c.h.b16 %v469
        %v2188 = vunpack.c.l.b16 %v470
        %v2189 = vunpack.c.h.b16 %v470
        %v2190 = vunpack.c.l.b16 %v471
        %v2191 = vunpack.c.h.b16 %v471
        %v2192 = vunpack.c.l.b16 %v472
        %v2193 = vunpack.c.h.b16 %v472
        %v2194 = vunpack.c.l.b16 %v473
        %v2195 = vunpack.c.h.b16 %v473
        %v2196 = vunpack.c.l.b16 %v474
        %v2197 = vunpack.c.h.b16 %v474
        %v2198 = vunpack.c.l.b16 %v475
        %v2199 = vunpack.c.h.b16 %v475
        %v2200 = vunpack.c.l.b16 %v476
        %v2201 = vunpack.c.h.b16 %v476
        %v2202 = vunpack.c.l.b16 %v477
        %v2203 = vunpack.c.h.b16 %v477
        %v2204 = vunpack.c.l.b16 %v478
        %v2205 = vunpack.c.h.b16 %v478
        %v2206 = vunpack.c.l.b16 %v479
        %v2207 = vunpack.c.h.b16 %v479
        %v2208 = vunpack.c.l.b16 %v480
        %v2209 = vunpack.c.h.b16 %v480
        %v2210 = vunpack.c.l.b16 %v481
        %v2211 = vunpack.c.h.b16 %v481
        %v2212 = vunpack.c.l.b16 %v482
        %v2213 = vunpack.c.h.b16 %v482
        %v2214 = vunpack.c.l.b16 %v483
        %v2215 = vunpack.c.h.b16 %v483
        %v2216 = vunpack.c.l.b16 %v484
        %v2217 = vunpack.c.h.b16 %v484
        %v2218 = vunpack.c.l.b16 %v485
        %v2219 = vunpack.c.h.b16 %v485
        %v2220 = vunpack.c.l.b16 %v486
        %v2221 = vunpack.c.h.b16 %v486
        %v2222 = vunpack.c.l.b16 %v487
        %v2223 = vunpack.c.h.b16 %v487
        %v2224 = vunpack.c.l.b16 %v488
        %v2225 = vunpack.c.h.b16 %v488
        %v2226 = vunpack.c.l.b16 %v489
        %v2227 = vunpack.c.h.b16 %v489
        %v2228 = vunpack.c.l.b16 %v490
        %v2229 = vunpack.c.h.b16 %v490
        %v2230 = vunpack.c.l.b16 %v491
        %v2231 = vunpack.c.h.b16 %v491
        %v2232 = vunpack.c.l.b16 %v492
        %v2233 = vunpack.c.h.b16 %v492
        %v2234 = vunpack.c.l.b16 %v493
        %v2235 = vunpack.c.h.b16 %v493
        %v2236 = vunpack.c.l.b16 %v494
        %v2237 = vunpack.c.h.b16 %v494
        %v2238 = vunpack.c.l.b16 %v495
        %v2239 = vunpack.c.h.b16 %v495
        %v2240 = vunpack.c.l.b16 %v496
        %v2241 = vunpack.c.h.b16 %v496
        %v2242 = vunpack.c.l.b16 %v497
        %v2243 = vunpack.c.h.b16 %v497
        %v2244 = vunpack.c.l.b16 %v498
        %v2245 = vunpack.c.h.b16 %v498
        %v2246 = vunpack.c.l.b16 %v499
        %v2247 = vunpack.c.h.b16 %v499
        %v2248 = vunpack.c.l.b16 %v500
        %v2249 = vunpack.c.h.b16 %v500
        %v2250 = vunpack.c.l.b16 %v501
        %v2251 = vunpack.c.h.b16 %v501
        %v2252 = vunpack.c.l.b16 %v502
        %v2253 = vunpack.c.h.b16 %v502
        %v2254 = vunpack.c.l.b16 %v503
        %v2255 = vunpack.c.h.b16 %v503
        %v2256 = vunpack.c.l.b16 %v504
        %v2257 = vunpack.c.h.b16 %v504
        %v2258 = vunpack.c.l.b16 %v505
        %v2259 = vunpack.c.h.b16 %v505
        %v2260 = vunpack.c.l.b16 %v506
        %v2261 = vunpack.c.h.b16 %v506
        %v2262 = vunpack.c.l.b16 %v507
        %v2263 = vunpack.c.h.b16 %v507
        %v2264 = vunpack.c.l.b16 %v508
        %v2265 = vunpack.c.h.b16 %v508
        %v2266 = vunpack.c.l.b16 %v509
        %v2267 = vunpack.c.h.b16 %v509
        %v2268 = vunpack.c.l.b16 %v510
        %v2269 = vunpack.c.h.b16 %v510
        %v2270 = vunpack.c.l.b16 %v511
        %v2271 = vunpack.c.h.b16 %v511
        %v2272 = vunpack.c.l.b16 %v512
        %v2273 = vunpack.c.h.b16 %v512
        %v2274 = vunpack.c.l.b16 %v513
        %v2275 = vunpack.c.h.b16 %v513
        %v2276 = vunpack.c.l.b16 %v514
        %v2277 = vunpack.c.h.b16 %v514
        %v2278 = vunpack.c.l.b16 %v515
        %v2279 = vunpack.c.h.b16 %v515
        %v2280 = vunpack.c.l.b16 %v516
        %v2281 = vunpack.c.h.b16 %v516
        %v2282 = vunpack.c.l.b16 %v517
        %v2283 = vunpack.c.h.b16 %v517
        %v2284 = vunpack.c.l.b16 %v518
        %v2285 = vunpack.c.h.b16 %v518
        %v2286 = vunpack.c.l.b16 %v519
        %v2287 = vunpack.c.h.b16 %v519
        %v2288 = vunpack.c.l.b16 %v520
        %v2289 = vunpack.c.h.b16 %v520
        %v2290 = vunpack.c.l.b16 %v521
        %v2291 = vunpack.c.h.b16 %v521
        %v2292 = vunpack.c.l.b16 %v522
        %v2293 = vunpack.c.h.b16 %v522
        %v2294 = vunpack.c.l.b16 %v523
        %v2295 = vunpack.c.h.b16 %v523
        %v2296 = vunpack.c.l.b16 %v524
        %v2297 = vunpack.c.h.b16 %v524
        %v2298 = vunpack.c.l.b16 %v525
        %v2299 = vunpack.c.h.b16 %v525
        %v2300 = vunpack.c.l.b16 %v526
        %v2301 = vunpack.c.h.b16 %v526
        %v2302 = vunpack.c.l.b16 %v527
        %v2303 = vunpack.c.h.b16 %v527
        %v2304 = vunpack.c.l.b16 %v528
        %v2305 = vunpack.c.h.b16 %v528
        %v2306 = vunpack.c.l.b16 %v529
        %v2307 = vunpack.c.h.b16 %v529
        %v2308 = vunpack.c.l.b16 %v530
        %v2309 = vunpack.c.h.b16 %v530
        %v2310 = vunpack.c.l.b16 %v531
        %v2311 = vunpack.c.h.b16 %v531
        %v2312 = vunpack.c.l.b16 %v532
        %v2313 = vunpack.c.h.b16 %v532
        %v2314 = vunpack.c.l.b16 %v533
        %v2315 = vunpack.c.h.b16 %v533
        %v2316 = vunpack.c.l.b16 %v534
        %v2317 = vunpack.c.h.b16 %v534
        %v2318 = vunpack.c.l.b16 %v535
        %v2319 = vunpack.c.h.b16 %v535
        %v2320 = vunpack.c.l.b16 %v536
        %v2321 = vunpack.c.h.b16 %v536
        %v2322 = vunpack.c.l.b16 %v537
        %v2323 = vunpack.c.h.b16 %v537
        %v2324 = vunpack.c.l.b16 %v538
        %v2325 = vunpack.c.h.b16 %v538
        %v2326 = vunpack.c.l.b16 %v539
        %v2327 = vunpack.c.h.b16 %v539
        %v2328 = vunpack.c.l.b16 %v540
        %v2329 = vunpack.c.h.b16 %v540
        %v2330 = vunpack.c.l.b16 %v541
        %v2331 = vunpack.c.h.b16 %v541
        %v2332 = vunpack.c.l.b16 %v542
        %v2333 = vunpack.c.h.b16 %v542
        %v2334 = vunpack.c.l.b16 %v543
        %v2335 = vunpack.c.h.b16 %v543
        %v2336 = vunpack.c.l.b16 %v544
        %v2337 = vunpack.c.h.b16 %v544
        %v2338 = vunpack.c.l.b16 %v545
        %v2339 = vunpack.c.h.b16 %v545
        %v2340 = vunpack.c.l.b16 %v546
        %v2341 = vunpack.c.h.b16 %v546
        %v2342 = vunpack.c.l.b16 %v547
        %v2343 = vunpack.c.h.b16 %v547
        %v2344 = vunpack.c.l.b16 %v548
        %v2345 = vunpack.c.h.b16 %v548
        %v2346 = vunpack.c.l.b16 %v549
        %v2347 = vunpack.c.h.b16 %v549
        %v2348 = vunpack.c.l.b16 %v550
        %v2349 = vunpack.c.h.b16 %v550
        %v2350 = vunpack.c.l.b16 %v551
        %v2351 = vunpack.c.h.b16 %v551
        %v2352 = vunpack.c.l.b16 %v552
        %v2353 = vunpack.c.h.b16 %v552
        %v2354 = vunpack.c.l.b16 %v553
        %v2355 = vunpack.c.h.b16 %v553
        %v2356 = vunpack.c.l.b16 %v554
        %v2357 = vunpack.c.h.b16 %v554
        %v2358 = vunpack.c.l.b16 %v555
        %v2359 = vunpack.c.h.b16 %v555
        %v2360 = vunpack.c.l.b16 %v556
        %v2361 = vunpack.c.h.b16 %v556
        %v2362 = vunpack.c.l.b16 %v557
        %v2363 = vunpack.c.h.b16 %v557
        %v2364 = vunpack.c.l.b16 %v558
        %v2365 = vunpack.c.h.b16 %v558
        %v2366 = vunpack.c.l.b16 %v559
        %v2367 = vunpack.c.h.b16 %v559
        %v2368 = vunpack.c.l.b16 %v560
        %v2369 = vunpack.c.h.b16 %v560
        %v2370 = vunpack.c.l.b16 %v561
        %v2371 = vunpack.c.h.b16 %v561
        %v2372 = vunpack.c.l.b16 %v562
        %v2373 = vunpack.c.h.b16 %v562
        %v2374 = vunpack.c.l.b16 %v563
        %v2375 = vunpack.c.h.b16 %v563
        %v2376 = vunpack.c.l.b16 %v564
        %v2377 = vunpack.c.h.b16 %v564
        %v2378 = vunpack.c.l.b16 %v565
        %v2379 = vunpack.c.h.b16 %v565
        %v2380 = vunpack.c.l.b16 %v566
        %v2381 = vunpack.c.h.b16 %v566
        %v2382 = vunpack.c.l.b16 %v567
        %v2383 = vunpack.c.h.b16 %v567
        %v2384 = vunpack.c.l.b16 %v568
        %v2385 = vunpack.c.h.b16 %v568
        %v2386 = vunpack.c.l.b16 %v569
        %v2387 = vunpack.c.h.b16 %v569
        %v2388 = vunpack.c.l.b16 %v570
        %v2389 = vunpack.c.h.b16 %v570
        %v2390 = vunpack.c.l.b16 %v571
        %v2391 = vunpack.c.h.b16 %v571
        %v2392 = vunpack.c.l.b16 %v572
        %v2393 = vunpack.c.h.b16 %v572
        %v2394 = vunpack.c.l.b16 %v573
        %v2395 = vunpack.c.h.b16 %v573
        %v2396 = vunpack.c.l.b16 %v574
        %v2397 = vunpack.c.h.b16 %v574
        %v2398 = vunpack.c.l.b16 %v575
        %v2399 = vunpack.c.h.b16 %v575
        %v2400 = vunpack.c.l.b16 %v576
        %v2401 = vunpack.c.h.b16 %v576
        %v2402 = vunpack.c.l.b16 %v577
        %v2403 = vunpack.c.h.b16 %v577
        %v2404 = vunpack.c.l.b16 %v578
        %v2405 = vunpack.c.h.b16 %v578
        %v2406 = vunpack.c.l.b16 %v579
        %v2407 = vunpack.c.h.b16 %v579
        %v2408 = vunpack.c.l.b16 %v580
        %v2409 = vunpack.c.h.b16 %v580
        %v2410 = vunpack.c.l.b16 %v581
        %v2411 = vunpack.c.h.b16 %v581
        %v2412 = vunpack.c.l.b16 %v582
        %v2413 = vunpack.c.h.b16 %v582
        %v2414 = vunpack.c.l.b16 %v583
        %v2415 = vunpack.c.h.b16 %v583
        %v2416 = vunpack.c.l.b16 %v584
        %v2417 = vunpack.c.h.b16 %v584
        %v2418 = vunpack.c.l.b16 %v585
        %v2419 = vunpack.c.h.b16 %v585
        %v2420 = vunpack.c.l.b16 %v586
        %v2421 = vunpack.c.h.b16 %v586
        %v2422 = vunpack.c.l.b16 %v587
        %v2423 = vunpack.c.h.b16 %v587
        %v2424 = vunpack.c.l.b16 %v588
        %v2425 = vunpack.c.h.b16 %v588
        %v2426 = vunpack.c.l.b16 %v589
        %v2427 = vunpack.c.h.b16 %v589
        %v2428 = vunpack.c.l.b16 %v590
        %v2429 = vunpack.c.h.b16 %v590
        %v2430 = vunpack.c.l.b16 %v591
        %v2431 = vunpack.c.h.b16 %v591
        %v2432 = vunpack.c.l.b16 %v592
        %v2433 = vunpack.c.h.b16 %v592
        %v2434 = vunpack.c.l.b16 %v593
        %v2435 = vunpack.c.h.b16 %v593
        %v2436 = vunpack.c.l.b16 %v594
        %v2437 = vunpack.c.h.b16 %v594
        %v2438 = vunpack.c.l.b16 %v595
        %v2439 = vunpack.c.h.b16 %v595
        %v2440 = vunpack.c.l.b16 %v596
        %v2441 = vunpack.c.h.b16 %v596
        %v2442 = vunpack.c.l.b16 %v597
        %v2443 = vunpack.c.h.b16 %v597
        %v2444 = vunpack.c.l.b16 %v598
        %v2445 = vunpack.c.h.b16 %v598
        %v2446 = vunpack.c.l.b16 %v599
        %v2447 = vunpack.c.h.b16 %v599
        %v2448 = vunpack.c.l.b16 %v600
        %v2449 = vunpack.c.h.b16 %v600
        %v2450 = vunpack.c.l.b16 %v601
        %v2451 = vunpack.c.h.b16 %v601
        %v2452 = vunpack.c.l.b16 %v602
        %v2453 = vunpack.c.h.b16 %v602
        %v2454 = vunpack.c.l.b16 %v603
        %v2455 = vunpack.c.h.b16 %v603
        %v2456 = vunpack.c.l.b16 %v604
        %v2457 = vunpack.c.h.b16 %v604
        %v2458 = vunpack.c.l.b16 %v605
        %v2459 = vunpack.c.h.b16 %v605
        %v2460 = vunpack.c.l.b16 %v606
        %v2461 = vunpack.c.h.b16 %v606
        %v2462 = vunpack.c.l.b16 %v607
        %v2463 = vunpack.c.h.b16 %v607
        %v2464 = vunpack.c.l.b16 %v608
        %v2465 = vunpack.c.h.b16 %v608
        %v2466 = vunpack.c.l.b16 %v609
        %v2467 = vunpack.c.h.b16 %v609
        %v2468 = vunpack.c.l.b16 %v610
        %v2469 = vunpack.c.h.b16 %v610
        %v2470 = vunpack.c.l.b16 %v611
        %v2471 = vunpack.c.h.b16 %v611
        %v2472 = vunpack.c.l.b16 %v612
        %v2473 = vunpack.c.h.b16 %v612
        %v2474 = vunpack.c.l.b16 %v613
        %v2475 = vunpack.c.h.b16 %v613
        %v2476 = vunpack.c.l.b16 %v614
        %v2477 = vunpack.c.h.b16 %v614
        %v2478 = vunpack.c.l.b16 %v615
        %v2479 = vunpack.c.h.b16 %v615
        %v2480 = vunpack.c.l.b16 %v616
        %v2481 = vunpack.c.h.b16 %v616
        %v2482 = vunpack.c.l.b16 %v617
        %v2483 = vunpack.c.h.b16 %v617
        %v2484 = vunpack.c.l.b16 %v618
        %v2485 = vunpack.c.h.b16 %v618
        %v2486 = vunpack.c.l.b16 %v619
        %v2487 = vunpack.c.h.b16 %v619
        %v2488 = vunpack.c.l.b16 %v620
        %v2489 = vunpack.c.h.b16 %v620
        %v2490 = vunpack.c.l.b16 %v621
        %v2491 = vunpack.c.h.b16 %v621
        %v2492 = vunpack.c.l.b16 %v622
        %v2493 = vunpack.c.h.b16 %v622
        %v2494 = vunpack.c.l.b16 %v623
        %v2495 = vunpack.c.h.b16 %v623
        %v2496 = vunpack.c.l.b16 %v624
        %v2497 = vunpack.c.h.b16 %v624
        %v2498 = vunpack.c.l.b16 %v625
        %v2499 = vunpack.c.h.b16 %v625
        %v2500 = vunpack.c.l.b16 %v626
        %v2501 = vunpack.c.h.b16 %v626
        %v2502 = vunpack.c.l.b16 %v627
        %v2503 = vunpack.c.h.b16 %v627
        %v2504 = vunpack.c.l.b16 %v628
        %v2505 = vunpack.c.h.b16 %v628
        %v2506 = vunpack.c.l.b16 %v629
        %v2507 = vunpack.c.h.b16 %v629
        %v2508 = vunpack.c.l.b16 %v630
        %v2509 = vunpack.c.h.b16 %v630
        %v2510 = vunpack.c.l.b16 %v631
        %v2511 = vunpack.c.h.b16 %v631
        %v2512 = vunpack.c.l.b16 %v632
        %v2513 = vunpack.c.h.b16 %v632
        %v2514 = vunpack.c.l.b16 %v633
        %v2515 = vunpack.c.h.b16 %v633
        %v2516 = vunpack.c.l.b16 %v634
        %v2517 = vunpack.c.h.b16 %v634
        %v2518 = vunpack.c.l.b16 %v635
        %v2519 = vunpack.c.h.b16 %v635
        %v2520 = vunpack.c.l.b16 %v636
        %v2521 = vunpack.c.h.b16 %v636
        %v2522 = vunpack.c.l.b16 %v637
        %v2523 = vunpack.c.h.b16 %v637
        %v2524 = vunpack.c.l.b16 %v638
        %v2525 = vunpack.c.h.b16 %v638
        %v2526 = vunpack.c.l.b16 %v639
        %v2527 = vunpack.c.h.b16 %v639
        %v2528 = vunpack.c.l.b16 %v640
        %v2529 = vunpack.c.h.b16 %v640
        %v2530 = vunpack.c.l.b16 %v641
        %v2531 = vunpack.c.h.b16 %v641
        %v2532 = vunpack.c.l.b16 %v642
        %v2533 = vunpack.c.h.b16 %v642
        %v2534 = vunpack.c.l.b16 %v643
        %v2535 = vunpack.c.h.b16 %v643
        %v2536 = vunpack.c.l.b16 %v644
        %v2537 = vunpack.c.h.b16 %v644
        %v2538 = vunpack.c.l.b16 %v645
        %v2539 = vunpack.c.h.b16 %v645
        %v2540 = vunpack.c.l.b16 %v646
        %v2541 = vunpack.c.h.b16 %v646
        %v2542 = vunpack.c.l.b16 %v647
        %v2543 = vunpack.c.h.b16 %v647
        %v2544 = vunpack.c.l.b16 %v648
        %v2545 = vunpack.c.h.b16 %v648
        %v2546 = vunpack.c.l.b16 %v649
        %v2547 = vunpack.c.h.b16 %v649
        %v2548 = vunpack.c.l.b16 %v650
        %v2549 = vunpack.c.h.b16 %v650
        %v2550 = vunpack.c.l.b16 %v651
        %v2551 = vunpack.c.h.b16 %v651
        %v2552 = vunpack.c.l.b16 %v652
        %v2553 = vunpack.c.h.b16 %v652
        %v2554 = vunpack.c.l.b16 %v653
        %v2555 = vunpack.c.h.b16 %v653
        %v2556 = vunpack.c.l.b16 %v654
        %v2557 = vunpack.c.h.b16 %v654
        %v2558 = vunpack.c.l.b16 %v655
        %v2559 = vunpack.c.h.b16 %v655
        %v2560 = vunpack.c.l.b16 %v656
        %v2561 = vunpack.c.h.b16 %v656
        %v2562 = vunpack.c.l.b16 %v657
        %v2563 = vunpack.c.h.b16 %v657
        %v2564 = vunpack.c.l.b16 %v658
        %v2565 = vunpack.c.h.b16 %v658
        %v2566 = vunpack.c.l.b16 %v659
        %v2567 = vunpack.c.h.b16 %v659
        %v2568 = vunpack.c.l.b16 %v660
        %v2569 = vunpack.c.h.b16 %v660
        %v2570 = vunpack.c.l.b16 %v661
        %v2571 = vunpack.c.h.b16 %v661
        %v2572 = vunpack.c.l.b16 %v662
        %v2573 = vunpack.c.h.b16 %v662
        %v2574 = vunpack.c.l.b16 %v663
        %v2575 = vunpack.c.h.b16 %v663
        %v2576 = vunpack.c.l.b16 %v664
        %v2577 = vunpack.c.h.b16 %v664
        %v2578 = vunpack.c.l.b16 %v665
        %v2579 = vunpack.c.h.b16 %v665
        %v2580 = vunpack.c.l.b16 %v666
        %v2581 = vunpack.c.h.b16 %v666
        %v2582 = vunpack.c.l.b16 %v667
        %v2583 = vunpack.c.h.b16 %v667
        %v2584 = vunpack.c.l.b16 %v668
        %v2585 = vunpack.c.h.b16 %v668
        %v2586 = vunpack.c.l.b16 %v669
        %v2587 = vunpack.c.h.b16 %v669
        %v2588 = vunpack.c.l.b16 %v670
        %v2589 = vunpack.c.h.b16 %v670
        %v2590 = vunpack.c.l.b16 %v671
        %v2591 = vunpack.c.h.b16 %v671
        %v2592 = vunpack.c.l.b16 %v672
        %v2593 = vunpack.c.h.b16 %v672
        %v2594 = vunpack.c.l.b16 %v673
        %v2595 = vunpack.c.h.b16 %v673
        %v2596 = vunpack.c.l.b16 %v674
        %v2597 = vunpack.c.h.b16 %v674
        %v2598 = vunpack.c.l.b16 %v675
        %v2599 = vunpack.c.h.b16 %v675
        %v2600 = vunpack.c.l.b16 %v676
        %v2601 = vunpack.c.h.b16 %v676
        %v2602 = vunpack.c.l.b16 %v677
        %v2603 = vunpack.c.h.b16 %v677
        %v2604 = vunpack.c.l.b16 %v678
        %v2605 = vunpack.c.h.b16 %v678
        %v2606 = vunpack.c.l.b16 %v679
        %v2607 = vunpack.c.h.b16 %v679
        %v2608 = vunpack.c.l.b16 %v680
        %v2609 = vunpack.c.h.b16 %v680
        %v2610 = vunpack.c.l.b16 %v681
        %v2611 = vunpack.c.h.b16 %v681
        %v2612 = vunpack.c.l.b16 %v682
        %v2613 = vunpack.c.h.b16 %v682
        %v2614 = vunpack.c.l.b16 %v683
        %v2615 = vunpack.c.h.b16 %v683
        %v2616 = vunpack.c.l.b16 %v684
        %v2617 = vunpack.c.h.b16 %v684
        %v2618 = vunpack.c.l.b16 %v685
        %v2619 = vunpack.c.h.b16 %v685
        %v2620 = vunpack.c.l.b16 %v686
        %v2621 = vunpack.c.h.b16 %v686
        %v2622 = vunpack.c.l.b16 %v687
        %v2623 = vunpack.c.h.b16 %v687
        %v2624 = vunpack.c.l.b16 %v688
        %v2625 = vunpack.c.h.b16 %v688
        %v2626 = vunpack.c.l.b16 %v689
        %v2627 = vunpack.c.h.b16 %v689
        %v2628 = vunpack.c.l.b16 %v690
        %v2629 = vunpack.c.h.b16 %v690
        %v2630 = vunpack.c.l.b16 %v691
        %v2631 = vunpack.c.h.b16 %v691
        %v2632 = vunpack.c.l.b16 %v692
        %v2633 = vunpack.c.h.b16 %v692
        %v2634 = vunpack.c.l.b16 %v693
        %v2635 = vunpack.c.h.b16 %v693
        %v2636 = vunpack.c.l.b16 %v694
        %v2637 = vunpack.c.h.b16 %v694
        %v2638 = vunpack.c.l.b16 %v695
        %v2639 = vunpack.c.h.b16 %v695
        %v2640 = vunpack.c.l.b16 %v696
        %v2641 = vunpack.c.h.b16 %v696
        %v2642 = vunpack.c.l.b16 %v697
        %v2643 = vunpack.c.h.b16 %v697
        %v2644 = vunpack.c.l.b16 %v698
        %v2645 = vunpack.c.h.b16 %v698
        %v2646 = vunpack.c.l.b16 %v699
        %v2647 = vunpack.c.h.b16 %v699
        %v2648 = vunpack.c.l.b16 %v700
        %v2649 = vunpack.c.h.b16 %v700
        %v2650 = vunpack.c.l.b16 %v701
        %v2651 = vunpack.c.h.b16 %v701
        %v2652 = vunpack.c.l.b16 %v702
        %v2653 = vunpack.c.h.b16 %v702
        %v2654 = vunpack.c.l.b16 %v703
        %v2655 = vunpack.c.h.b16 %v703
        %v2656 = vunpack.c.l.b16 %v704
        %v2657 = vunpack.c.h.b16 %v704
        %v2658 = vunpack.c.l.b16 %v705
        %v2659 = vunpack.c.h.b16 %v705
        %v2660 = vunpack.c.l.b16 %v706
        %v2661 = vunpack.c.h.b16 %v706
        %v2662 = vunpack.c.l.b16 %v707
        %v2663 = vunpack.c.h.b16 %v707
        %v2664 = vunpack.c.l.b16 %v708
        %v2665 = vunpack.c.h.b16 %v708
        %v2666 = vunpack.c.l.b16 %v709
        %v2667 = vunpack.c.h.b16 %v709
        %v2668 = vunpack.c.l.b16 %v710
        %v2669 = vunpack.c.h.b16 %v710
        %v2670 = vunpack.c.l.b16 %v711
        %v2671 = vunpack.c.h.b16 %v711
        %v2672 = vunpack.c.l.b16 %v712
        %v2673 = vunpack.c.h.b16 %v712
        %v2674 = vunpack.c.l.b16 %v713
        %v2675 = vunpack.c.h.b16 %v713
        %v2676 = vunpack.c.l.b16 %v714
        %v2677 = vunpack.c.h.b16 %v714
        %v2678 = vunpack.c.l.b16 %v715
        %v2679 = vunpack.c.h.b16 %v715
        %v2680 = vunpack.c.l.b16 %v716
        %v2681 = vunpack.c.h.b16 %v716
        %v2682 = vunpack.c.l.b16 %v717
        %v2683 = vunpack.c.h.b16 %v717
        %v2684 = vunpack.c.l.b16 %v718
        %v2685 = vunpack.c.h.b16 %v718
        %v2686 = vunpack.c.l.b16 %v719
        %v2687 = vunpack.c.h.b16 %v719
        %v2688 = vunpack.c.l.b16 %v720
        %v2689 = vunpack.c.h.b16 %v720
        %v2690 = vunpack.c.l.b16 %v721
        %v2691 = vunpack.c.h.b16 %v721
        %v2692 = vunpack.c.l.b16 %v722
        %v2693 = vunpack.c.h.b16 %v722
        %v2694 = vunpack.c.l.b16 %v723
        %v2695 = vunpack.c.h.b16 %v723
        %v2696 = vunpack.c.l.b16 %v724
        %v2697 = vunpack.c.h.b16 %v724
        %v2698 = vunpack.c.l.b16 %v725
        %v2699 = vunpack.c.h.b16 %v725
        %v2700 = vunpack.c.l.b16 %v726
        %v2701 = vunpack.c.h.b16 %v726
        %v2702 = vunpack.c.l.b16 %v727
        %v2703 = vunpack.c.h.b16 %v727
        %v2704 = vunpack.c.l.b16 %v728
        %v2705 = vunpack.c.h.b16 %v728
        %v2706 = vunpack.c.l.b16 %v729
        %v2707 = vunpack.c.h.b16 %v729
        %v2708 = vunpack.c.l.b16 %v730
        %v2709 = vunpack.c.h.b16 %v730
        %v2710 = vunpack.c.l.b16 %v731
        %v2711 = vunpack.c.h.b16 %v731
        %v2712 = vunpack.c.l.b16 %v732
        %v2713 = vunpack.c.h.b16 %v732
        %v2714 = vunpack.c.l.b16 %v733
        %v2715 = vunpack.c.h.b16 %v733
        %v2716 = vunpack.c.l.b16 %v734
        %v2717 = vunpack.c.h.b16 %v734
        %v2718 = vunpack.c.l.b16 %v735
        %v2719 = vunpack.c.h.b16 %v735
        %v2720 = vunpack.c.l.b16 %v736
        %v2721 = vunpack.c.h.b16 %v736
        %v2722 = vunpack.c.l.b16 %v737
        %v2723 = vunpack.c.h.b16 %v737
        %v2724 = vunpack.c.l.b16 %v738
        %v2725 = vunpack.c.h.b16 %v738
        %v2726 = vunpack.c.l.b16 %v739
        %v2727 = vunpack.c.h.b16 %v739
        %v2728 = vunpack.c.l.b16 %v740
        %v2729 = vunpack.c.h.b16 %v740
        %v2730 = vunpack.c.l.b16 %v741
        %v2731 = vunpack.c.h.b16 %v741
        %v2732 = vunpack.c.l.b16 %v742
        %v2733 = vunpack.c.h.b16 %v742
        %v2734 = vunpack.c.l.b16 %v743
        %v2735 = vunpack.c.h.b16 %v743
        %v2736 = vunpack.c.l.b16 %v744
        %v2737 = vunpack.c.h.b16 %v744
        %v2738 = vunpack.c.l.b16 %v745
        %v2739 = vunpack.c.h.b16 %v745
        %v2740 = vunpack.c.l.b16 %v746
        %v2741 = vunpack.c.h.b16 %v746
        %v2742 = vunpack.c.l.b16 %v747
        %v2743 = vunpack.c.h.b16 %v747
        %v2744 = vunpack.c.l.b16 %v748
        %v2745 = vunpack.c.h.b16 %v748
        %v2746 = vunpack.c.l.b16 %v749
        %v2747 = vunpack.c.h.b16 %v749
        %v2748 = vunpack.c.l.b16 %v750
        %v2749 = vunpack.c.h.b16 %v750
        %v2750 = vunpack.c.l.b16 %v751
        %v2751 = vunpack.c.h.b16 %v751
        %v2752 = vunpack.c.l.b16 %v752
        %v2753 = vunpack.c.h.b16 %v752
        %v2754 = vunpack.c.l.b16 %v753
        %v2755 = vunpack.c.h.b16 %v753
        %v2756 = vunpack.c.l.b16 %v754
        %v2757 = vunpack.c.h.b16 %v754
        %v2758 = vunpack.c.l.b16 %v755
        %v2759 = vunpack.c.h.b16 %v755
        %v2760 = vunpack.c.l.b16 %v756
        %v2761 = vunpack.c.h.b16 %v756
        %v2762 = vunpack.c.l.b16 %v757
        %v2763 = vunpack.c.h.b16 %v757
        %v2764 = vunpack.c.l.b16 %v758
        %v2765 = vunpack.c.h.b16 %v758
        %v2766 = vunpack.c.l.b16 %v759
        %v2767 = vunpack.c.h.b16 %v759
        %v2768 = vunpack.c.l.b16 %v760
        %v2769 = vunpack.c.h.b16 %v760
        %v2770 = vunpack.c.l.b16 %v761
        %v2771 = vunpack.c.h.b16 %v761
        %v2772 = vunpack.c.l.b16 %v762
        %v2773 = vunpack.c.h.b16 %v762
        %v2774 = vunpack.c.l.b16 %v763
        %v2775 = vunpack.c.h.b16 %v763
        %v2776 = vunpack.c.l.b16 %v764
        %v2777 = vunpack.c.h.b16 %v764
        %v2778 = vunpack.c.l.b16 %v765
        %v2779 = vunpack.c.h.b16 %v765
        %v2780 = vunpack.c.l.b16 %v766
        %v2781 = vunpack.c.h.b16 %v766
        %v2782 = vunpack.c.l.b16 %v767
        %v2783 = vunpack.c.h.b16 %v767
        %v2784 = vunpack.c.l.b16 %v768
        %v2785 = vunpack.c.h.b16 %v768
        %v2786 = vunpack.c.l.b16 %v769
        %v2787 = vunpack.c.h.b16 %v769
        %v2788 = vunpack.c.l.b16 %v770
        %v2789 = vunpack.c.h.b16 %v770
        %v2790 = vunpack.c.l.b16 %v771
        %v2791 = vunpack.c.h.b16 %v771
        %v2792 = vunpack.c.l.b16 %v772
        %v2793 = vunpack.c.h.b16 %v772
        %v2794 = vunpack.c.l.b16 %v773
        %v2795 = vunpack.c.h.b16 %v773
        %v2796 = vunpack.c.l.b16 %v774
        %v2797 = vunpack.c.h.b16 %v774
        %v2798 = vunpack.c.l.b16 %v775
        %v2799 = vunpack.c.h.b16 %v775
        %v2800 = vunpack.c.l.b16 %v776
        %v2801 = vunpack.c.h.b16 %v776
        %v2802 = vunpack.c.l.b16 %v777
        %v2803 = vunpack.c.h.b16 %v777
        %v2804 = vunpack.c.l.b16 %v778
        %v2805 = vunpack.c.h.b16 %v778
        %v2806 = vunpack.c.l.b16 %v779
        %v2807 = vunpack.c.h.b16 %v779
        %v2808 = vunpack.c.l.b16 %v780
        %v2809 = vunpack.c.h.b16 %v780
        %v2810 = vunpack.c.l.b16 %v781
        %v2811 = vunpack.c.h.b16 %v781
        %v2812 = vunpack.c.l.b16 %v782
        %v2813 = vunpack.c.h.b16 %v782
        %v2814 = vunpack.c.l.b16 %v783
        %v2815 = vunpack.c.h.b16 %v783
        %v2816 = vunpack.c.l.b16 %v784
        %v2817 = vunpack.c.h.b16 %v784
        %v2818 = vunpack.c.l.b16 %v785
        %v2819 = vunpack.c.h.b16 %v785
        %v2820 = vunpack.c.l.b16 %v786
        %v2821 = vunpack.c.h.b16 %v786
        %v2822 = vunpack.c.l.b16 %v787
        %v2823 = vunpack.c.h.b16 %v787
        %v2824 = vunpack.c.l.b16 %v788
        %v2825 = vunpack.c.h.b16 %v788
        %v2826 = vunpack.c.l.b16 %v789
        %v2827 = vunpack.c.h.b16 %v789
        %v2828 = vunpack.c.l.b16 %v790
        %v2829 = vunpack.c.h.b16 %v790
        %v2830 = vunpack.c.l.b16 %v791
        %v2831 = vunpack.c.h.b16 %v791
        %v2832 = vunpack.c.l.b16 %v792
        %v2833 = vunpack.c.h.b16 %v792
        %v2834 = vunpack.c.l.b16 %v793
        %v2835 = vunpack.c.h.b16 %v793
        %v2836 = vunpack.c.l.b16 %v794
        %v2837 = vunpack.c.h.b16 %v794
        %v2838 = vunpack.c.l.b16 %v795
        %v2839 = vunpack.c.h.b16 %v795
        %v2840 = vunpack.c.l.b16 %v796
        %v2841 = vunpack.c.h.b16 %v796
        %v2842 = vunpack.c.l.b16 %v797
        %v2843 = vunpack.c.h.b16 %v797
        %v2844 = vunpack.c.l.b16 %v798
        %v2845 = vunpack.c.h.b16 %v798
        %v2846 = vunpack.c.l.b16 %v799
        %v2847 = vunpack.c.h.b16 %v799
        %v2848 = vunpack.c.l.b16 %v800
        %v2849 = vunpack.c.h.b16 %v800
        %v2850 = vunpack.c.l.b16 %v801
        %v2851 = vunpack.c.h.b16 %v801
        %v2852 = vunpack.c.l.b16 %v802
        %v2853 = vunpack.c.h.b16 %v802
        %v2854 = vunpack.c.l.b16 %v803
        %v2855 = vunpack.c.h.b16 %v803
        %v2856 = vunpack.c.l.b16 %v804
        %v2857 = vunpack.c.h.b16 %v804
        %v2858 = vunpack.c.l.b16 %v805
        %v2859 = vunpack.c.h.b16 %v805
        %v2860 = vunpack.c.l.b16 %v806
        %v2861 = vunpack.c.h.b16 %v806
        %v2862 = vunpack.c.l.b16 %v807
        %v2863 = vunpack.c.h.b16 %v807
        %v2864 = vunpack.c.l.b16 %v808
        %v2865 = vunpack.c.h.b16 %v808
        %v2866 = vunpack.c.l.b16 %v809
        %v2867 = vunpack.c.h.b16 %v809
        %v2868 = vunpack.c.l.b16 %v810
        %v2869 = vunpack.c.h.b16 %v810
        %v2870 = vunpack.c.l.b16 %v811
        %v2871 = vunpack.c.h.b16 %v811
        %v2872 = vunpack.c.l.b16 %v812
        %v2873 = vunpack.c.h.b16 %v812
        %v2874 = vunpack.c.l.b16 %v813
        %v2875 = vunpack.c.h.b16 %v813
        %v2876 = vunpack.c.l.b16 %v814
        %v2877 = vunpack.c.h.b16 %v814
        %v2878 = vunpack.c.l.b16 %v815
        %v2879 = vunpack.c.h.b16 %v815
        %v2880 = vunpack.c.l.b16 %v816
        %v2881 = vunpack.c.h.b16 %v816
        %v2882 = vunpack.c.l.b16 %v817
        %v2883 = vunpack.c.h.b16 %v817
        %v2884 = vunpack.c.l.b16 %v818
        %v2885 = vunpack.c.h.b16 %v818
        %v2886 = vunpack.c.l.b16 %v819
        %v2887 = vunpack.c.h.b16 %v819
        %v2888 = vunpack.c.l.b16 %v820
        %v2889 = vunpack.c.h.b16 %v820
        %v2890 = vunpack.c.l.b16 %v821
        %v2891 = vunpack.c.h.b16 %v821
        %v2892 = vunpack.c.l.b16 %v822
        %v2893 = vunpack.c.h.b16 %v822
        %v2894 = vunpack.c.l.b16 %v823
        %v2895 = vunpack.c.h.b16 %v823
        %v2896 = vunpack.c.l.b16 %v824
        %v2897 = vunpack.c.h.b16 %v824
        %v2898 = vunpack.c.l.b16 %v825
        %v2899 = vunpack.c.h.b16 %v825
        %v2900 = vunpack.c.l.b16 %v826
        %v2901 = vunpack.c.h.b16 %v826
        %v2902 = vunpack.c.l.b16 %v827
        %v2903 = vunpack.c.h.b16 %v827
        %v2904 = vunpack.c.l.b16 %v828
        %v2905 = vunpack.c.h.b16 %v828
        %v2906 = vunpack.c.l.b16 %v829
        %v2907 = vunpack.c.h.b16 %v829
        %v2908 = vunpack.c.l.b16 %v830
        %v2909 = vunpack.c.h.b16 %v830
        %v2910 = vunpack.c.l.b16 %v831
        %v2911 = vunpack.c.h.b16 %v831
        %v2912 = vunpack.c.l.b16 %v832
        %v2913 = vunpack.c.h.b16 %v832
        %v2914 = vunpack.c.l.b16 %v833
        %v2915 = vunpack.c.h.b16 %v833
        %v2916 = vunpack.c.l.b16 %v834
        %v2917 = vunpack.c.h.b16 %v834
        %v2918 = vunpack.c.l.b16 %v835
        %v2919 = vunpack.c.h.b16 %v835
        %v2920 = vunpack.c.l.b16 %v836
        %v2921 = vunpack.c.h.b16 %v836
        %v2922 = vunpack.c.l.b16 %v837
        %v2923 = vunpack.c.h.b16 %v837
        %v2924 = vunpack.c.l.b16 %v838
        %v2925 = vunpack.c.h.b16 %v838
        %v2926 = vunpack.c.l.b16 %v839
        %v2927 = vunpack.c.h.b16 %v839
        %v2928 = vunpack.c.l.b16 %v840
        %v2929 = vunpack.c.h.b16 %v840
        %v2930 = vunpack.c.l.b16 %v841
        %v2931 = vunpack.c.h.b16 %v841
        %v2932 = vunpack.c.l.b16 %v842
        %v2933 = vunpack.c.h.b16 %v842
        %v2934 = vunpack.c.l.b16 %v843
        %v2935 = vunpack.c.h.b16 %v843
        %v2936 = vunpack.c.l.b16 %v844
        %v2937 = vunpack.c.h.b16 %v844
        %v2938 = vunpack.c.l.b16 %v845
        %v2939 = vunpack.c.h.b16 %v845
        %v2940 = vunpack.c.l.b16 %v846
        %v2941 = vunpack.c.h.b16 %v846
        %v2942 = vunpack.c.l.b16 %v847
        %v2943 = vunpack.c.h.b16 %v847
        %v2944 = vunpack.c.l.b16 %v848
        %v2945 = vunpack.c.h.b16 %v848
        %v2946 = vunpack.c.l.b16 %v849
        %v2947 = vunpack.c.h.b16 %v849
        %v2948 = vunpack.c.l.b16 %v850
        %v2949 = vunpack.c.h.b16 %v850
        %v2950 = vunpack.c.l.b16 %v851
        %v2951 = vunpack.c.h.b16 %v851
        %v2952 = vunpack.c.l.b16 %v852
        %v2953 = vunpack.c.h.b16 %v852
        %v2954 = vunpack.c.l.b16 %v853
        %v2955 = vunpack.c.h.b16 %v853
        %v2956 = vunpack.c.l.b16 %v854
        %v2957 = vunpack.c.h.b16 %v854
        %v2958 = vunpack.c.l.b16 %v855
        %v2959 = vunpack.c.h.b16 %v855
        %v2960 = vunpack.c.l.b16 %v856
        %v2961 = vunpack.c.h.b16 %v856
        %v2962 = vunpack.c.l.b16 %v857
        %v2963 = vunpack.c.h.b16 %v857
        %v2964 = vunpack.c.l.b16 %v858
        %v2965 = vunpack.c.h.b16 %v858
        %v2966 = vunpack.c.l.b16 %v859
        %v2967 = vunpack.c.h.b16 %v859
        %v2968 = vunpack.c.l.b16 %v860
        %v2969 = vunpack.c.h.b16 %v860
        %v2970 = vunpack.c.l.b16 %v861
        %v2971 = vunpack.c.h.b16 %v861
        %v2972 = vunpack.c.l.b16 %v862
        %v2973 = vunpack.c.h.b16 %v862
        %v2974 = vunpack.c.l.b16 %v863
        %v2975 = vunpack.c.h.b16 %v863
        %v2976 = vunpack.c.l.b16 %v864
        %v2977 = vunpack.c.h.b16 %v864
        %v2978 = vunpack.c.l.b16 %v865
        %v2979 = vunpack.c.h.b16 %v865
        %v2980 = vunpack.c.l.b16 %v866
        %v2981 = vunpack.c.h.b16 %v866
        %v2982 = vunpack.c.l.b16 %v867
        %v2983 = vunpack.c.h.b16 %v867
        %v2984 = vunpack.c.l.b16 %v868
        %v2985 = vunpack.c.h.b16 %v868
        %v2986 = vunpack.c.l.b16 %v869
        %v2987 = vunpack.c.h.b16 %v869
        %v2988 = vunpack.c.l.b16 %v870
        %v2989 = vunpack.c.h.b16 %v870
        %v2990 = vunpack.c.l.b16 %v871
        %v2991 = vunpack.c.h.b16 %v871
        %v2992 = vunpack.c.l.b16 %v872
        %v2993 = vunpack.c.h.b16 %v872
        %v2994 = vunpack.c.l.b16 %v873
        %v2995 = vunpack.c.h.b16 %v873
        %v2996 = vunpack.c.l.b16 %v874
        %v2997 = vunpack.c.h.b16 %v874
        %v2998 = vunpack.c.l.b16 %v875
        %v2999 = vunpack.c.h.b16 %v875
        %v3000 = vunpack.c.l.b16 %v876
        %v3001 = vunpack.c.h.b16 %v876
        %v3002 = vunpack.c.l.b16 %v877
        %v3003 = vunpack.c.h.b16 %v877
        %v3004 = vunpack.c.l.b16 %v878
        %v3005 = vunpack.c.h.b16 %v878
        %v3006 = vunpack.c.l.b16 %v879
        %v3007 = vunpack.c.h.b16 %v879
        %v3008 = vunpack.c.l.b16 %v880
        %v3009 = vunpack.c.h.b16 %v880
        %v3010 = vunpack.c.l.b16 %v881
        %v3011 = vunpack.c.h.b16 %v881
        %v3012 = vunpack.c.l.b16 %v882
        %v3013 = vunpack.c.h.b16 %v882
        %v3014 = vunpack.c.l.b16 %v883
        %v3015 = vunpack.c.h.b16 %v883
        %v3016 = vunpack.c.l.b16 %v884
        %v3017 = vunpack.c.h.b16 %v884
        %v3018 = vunpack.c.l.b16 %v885
        %v3019 = vunpack.c.h.b16 %v885
        %v3020 = vunpack.c.l.b16 %v886
        %v3021 = vunpack.c.h.b16 %v886
        %v3022 = vunpack.c.l.b16 %v887
        %v3023 = vunpack.c.h.b16 %v887
        %v3024 = vunpack.c.l.b16 %v888
        %v3025 = vunpack.c.h.b16 %v888
        %v3026 = vunpack.c.l.b16 %v889
        %v3027 = vunpack.c.h.b16 %v889
        %v3028 = vunpack.c.l.b16 %v890
        %v3029 = vunpack.c.h.b16 %v890
        %v3030 = vunpack.c.l.b16 %v891
        %v3031 = vunpack.c.h.b16 %v891
        %v3032 = vunpack.c.l.b16 %v892
        %v3033 = vunpack.c.h.b16 %v892
        %v3034 = vunpack.c.l.b16 %v893
        %v3035 = vunpack.c.h.b16 %v893
        %v3036 = vunpack.c.l.b16 %v894
        %v3037 = vunpack.c.h.b16 %v894
        %v3038 = vunpack.c.l.b16 %v895
        %v3039 = vunpack.c.h.b16 %v895
        %v3040 = vunpack.c.l.b16 %v896
        %v3041 = vunpack.c.h.b16 %v896
        %v3042 = vunpack.c.l.b16 %v897
        %v3043 = vunpack.c.h.b16 %v897
        %v3044 = vunpack.c.l.b16 %v898
        %v3045 = vunpack.c.h.b16 %v898
        %v3046 = vunpack.c.l.b16 %v899
        %v3047 = vunpack.c.h.b16 %v899
        %v3048 = vunpack.c.l.b16 %v900
        %v3049 = vunpack.c.h.b16 %v900
        %v3050 = vunpack.c.l.b16 %v901
        %v3051 = vunpack.c.h.b16 %v901
        %v3052 = vunpack.c.l.b16 %v902
        %v3053 = vunpack.c.h.b16 %v902
        %v3054 = vunpack.c.l.b16 %v903
        %v3055 = vunpack.c.h.b16 %v903
        %v3056 = vunpack.c.l.b16 %v904
        %v3057 = vunpack.c.h.b16 %v904
        %v3058 = vunpack.c.l.b16 %v905
        %v3059 = vunpack.c.h.b16 %v905
        %v3060 = vunpack.c.l.b16 %v906
        %v3061 = vunpack.c.h.b16 %v906
        %v3062 = vunpack.c.l.b16 %v907
        %v3063 = vunpack.c.h.b16 %v907
        %v3064 = vunpack.c.l.b16 %v908
        %v3065 = vunpack.c.h.b16 %v908
        %v3066 = vunpack.c.l.b16 %v909
        %v3067 = vunpack.c.h.b16 %v909
        %v3068 = vunpack.c.l.b16 %v910
        %v3069 = vunpack.c.h.b16 %v910
        %v3070 = vunpack.c.l.b16 %v911
        %v3071 = vunpack.c.h.b16 %v911
        %v3072 = vunpack.c.l.b16 %v912
        %v3073 = vunpack.c.h.b16 %v912
        %v3074 = vunpack.c.l.b16 %v913
        %v3075 = vunpack.c.h.b16 %v913
        %v3076 = vunpack.c.l.b16 %v914
        %v3077 = vunpack.c.h.b16 %v914
        %v3078 = vunpack.c.l.b16 %v915
        %v3079 = vunpack.c.h.b16 %v915
        %v3080 = vunpack.c.l.b16 %v916
        %v3081 = vunpack.c.h.b16 %v916
        %v3082 = vunpack.c.l.b16 %v917
        %v3083 = vunpack.c.h.b16 %v917
        %v3084 = vunpack.c.l.b16 %v918
        %v3085 = vunpack.c.h.b16 %v918
        %v3086 = vunpack.c.l.b16 %v919
        %v3087 = vunpack.c.h.b16 %v919
        %v3088 = vunpack.c.l.b16 %v920
        %v3089 = vunpack.c.h.b16 %v920
        %v3090 = vunpack.c.l.b16 %v921
        %v3091 = vunpack.c.h.b16 %v921
        %v3092 = vunpack.c.l.b16 %v922
        %v3093 = vunpack.c.h.b16 %v922
        %v3094 = vunpack.c.l.b16 %v923
        %v3095 = vunpack.c.h.b16 %v923
        %v3096 = vunpack.c.l.b16 %v924
        %v3097 = vunpack.c.h.b16 %v924
        %v3098 = vunpack.c.l.b16 %v925
        %v3099 = vunpack.c.h.b16 %v925
        %v3100 = vunpack.c.l.b16 %v926
        %v3101 = vunpack.c.h.b16 %v926
        %v3102 = vunpack.c.l.b16 %v927
        %v3103 = vunpack.c.h.b16 %v927
        %v3104 = vunpack.c.l.b16 %v928
        %v3105 = vunpack.c.h.b16 %v928
        %v3106 = vunpack.c.l.b16 %v929
        %v3107 = vunpack.c.h.b16 %v929
        %v3108 = vunpack.c.l.b16 %v930
        %v3109 = vunpack.c.h.b16 %v930
        %v3110 = vunpack.c.l.b16 %v931
        %v3111 = vunpack.c.h.b16 %v931
        %v3112 = vunpack.c.l.b16 %v932
        %v3113 = vunpack.c.h.b16 %v932
        %v3114 = vunpack.c.l.b16 %v933
        %v3115 = vunpack.c.h.b16 %v933
        %v3116 = vunpack.c.l.b16 %v934
        %v3117 = vunpack.c.h.b16 %v934
        %v3118 = vunpack.c.l.b16 %v935
        %v3119 = vunpack.c.h.b16 %v935
        %v3120 = vunpack.c.l.b16 %v936
        %v3121 = vunpack.c.h.b16 %v936
        %v3122 = vunpack.c.l.b16 %v937
        %v3123 = vunpack.c.h.b16 %v937
        %v3124 = vunpack.c.l.b16 %v938
        %v3125 = vunpack.c.h.b16 %v938
        %v3126 = vunpack.c.l.b16 %v939
        %v3127 = vunpack.c.h.b16 %v939
        %v3128 = vunpack.c.l.b16 %v940
        %v3129 = vunpack.c.h.b16 %v940
        %v3130 = vunpack.c.l.b16 %v941
        %v3131 = vunpack.c.h.b16 %v941
        %v3132 = vunpack.c.l.b16 %v942
        %v3133 = vunpack.c.h.b16 %v942
        %v3134 = vunpack.c.l.b16 %v943
        %v3135 = vunpack.c.h.b16 %v943
        %v3136 = vunpack.c.l.b16 %v944
        %v3137 = vunpack.c.h.b16 %v944
        %v3138 = vunpack.c.l.b16 %v945
        %v3139 = vunpack.c.h.b16 %v945
        %v3140 = vunpack.c.l.b16 %v946
        %v3141 = vunpack.c.h.b16 %v946
        %v3142 = vunpack.c.l.b16 %v947
        %v3143 = vunpack.c.h.b16 %v947
        %v3144 = vunpack.c.l.b16 %v948
        %v3145 = vunpack.c.h.b16 %v948
        %v3146 = vunpack.c.l.b16 %v949
        %v3147 = vunpack.c.h.b16 %v949
        %v3148 = vunpack.c.l.b16 %v950
        %v3149 = vunpack.c.h.b16 %v950
        %v3150 = vunpack.c.l.b16 %v951
        %v3151 = vunpack.c.h.b16 %v951
        %v3152 = vunpack.c.l.b16 %v952
        %v3153 = vunpack.c.h.b16 %v952
        %v3154 = vunpack.c.l.b16 %v953
        %v3155 = vunpack.c.h.b16 %v953
        %v3156 = vunpack.c.l.b16 %v954
        %v3157 = vunpack.c.h.b16 %v954
        %v3158 = vunpack.c.l.b16 %v955
        %v3159 = vunpack.c.h.b16 %v955
        %v3160 = vunpack.c.l.b16 %v956
        %v3161 = vunpack.c.h.b16 %v956
        %v3162 = vunpack.c.l.b16 %v957
        %v3163 = vunpack.c.h.b16 %v957
        %v3164 = vunpack.c.l.b16 %v958
        %v3165 = vunpack.c.h.b16 %v958
        %v3166 = vunpack.c.l.b16 %v959
        %v3167 = vunpack.c.h.b16 %v959
        %v3168 = vunpack.c.l.b16 %v960
        %v3169 = vunpack.c.h.b16 %v960
        %v3170 = vunpack.c.l.b16 %v961
        %v3171 = vunpack.c.h.b16 %v961
        %v3172 = vunpack.c.l.b16 %v962
        %v3173 = vunpack.c.h.b16 %v962
        %v3174 = vunpack.c.l.b16 %v963
        %v3175 = vunpack.c.h.b16 %v963
        %v3176 = vunpack.c.l.b16 %v964
        %v3177 = vunpack.c.h.b16 %v964
        %v3178 = vunpack.c.l.b16 %v965
        %v3179 = vunpack.c.h.b16 %v965
        %v3180 = vunpack.c.l.b16 %v966
        %v3181 = vunpack.c.h.b16 %v966
        %v3182 = vunpack.c.l.b16 %v967
        %v3183 = vunpack.c.h.b16 %v967
        %v3184 = vunpack.c.l.b16 %v968
        %v3185 = vunpack.c.h.b16 %v968
        %v3186 = vunpack.c.l.b16 %v969
        %v3187 = vunpack.c.h.b16 %v969
        %v3188 = vunpack.c.l.b16 %v970
        %v3189 = vunpack.c.h.b16 %v970
        %v3190 = vunpack.c.l.b16 %v971
        %v3191 = vunpack.c.h.b16 %v971
        %v3192 = vunpack.c.l.b16 %v972
        %v3193 = vunpack.c.h.b16 %v972
        %v3194 = vunpack.c.l.b16 %v973
        %v3195 = vunpack.c.h.b16 %v973
        %v3196 = vunpack.c.l.b16 %v974
        %v3197 = vunpack.c.h.b16 %v974
        %v3198 = vunpack.c.l.b16 %v975
        %v3199 = vunpack.c.h.b16 %v975
        %v3200 = vunpack.c.l.b16 %v976
        %v3201 = vunpack.c.h.b16 %v976
        %v3202 = vunpack.c.l.b16 %v977
        %v3203 = vunpack.c.h.b16 %v977
        %v3204 = vunpack.c.l.b16 %v978
        %v3205 = vunpack.c.h.b16 %v978
        %v3206 = vunpack.c.l.b16 %v979
        %v3207 = vunpack.c.h.b16 %v979
        %v3208 = vunpack.c.l.b16 %v980
        %v3209 = vunpack.c.h.b16 %v980
        %v3210 = vunpack.c.l.b16 %v981
        %v3211 = vunpack.c.h.b16 %v981
        %v3212 = vunpack.c.l.b16 %v982
        %v3213 = vunpack.c.h.b16 %v982
        %v3214 = vunpack.c.l.b16 %v983
        %v3215 = vunpack.c.h.b16 %v983
        %v3216 = vunpack.c.l.b16 %v984
        %v3217 = vunpack.c.h.b16 %v984
        %v3218 = vunpack.c.l.b16 %v985
        %v3219 = vunpack.c.h.b16 %v985
        %v3220 = vunpack.c.l.b16 %v986
        %v3221 = vunpack.c.h.b16 %v986
        %v3222 = vunpack.c.l.b16 %v987
        %v3223 = vunpack.c.h.b16 %v987
        %v3224 = vunpack.c.l.b16 %v988
        %v3225 = vunpack.c.h.b16 %v988
        %v3226 = vunpack.c.l.b16 %v989
        %v3227 = vunpack.c.h.b16 %v989
        %v3228 = vunpack.c.l.b16 %v990
        %v3229 = vunpack.c.h.b16 %v990
        %v3230 = vunpack.c.l.b16 %v991
        %v3231 = vunpack.c.h.b16 %v991
        %v3232 = vunpack.c.l.b16 %v992
        %v3233 = vunpack.c.h.b16 %v992
        %v3234 = vunpack.c.l.b16 %v993
        %v3235 = vunpack.c.h.b16 %v993
        %v3236 = vunpack.c.l.b16 %v994
        %v3237 = vunpack.c.h.b16 %v994
        %v3238 = vunpack.c.l.b16 %v995
        %v3239 = vunpack.c.h.b16 %v995
        %v3240 = vunpack.c.l.b16 %v996
        %v3241 = vunpack.c.h.b16 %v996
        %v3242 = vunpack.c.l.b16 %v997
        %v3243 = vunpack.c.h.b16 %v997
        %v3244 = vunpack.c.l.b16 %v998
        %v3245 = vunpack.c.h.b16 %v998
        %v3246 = vunpack.c.l.b16 %v999
        %v3247 = vunpack.c.h.b16 %v999
        %v3248 = vunpack.c.l.b16 %v1000
        %v3249 = vunpack.c.h.b16 %v1000
        %v3250 = vunpack.c.l.b16 %v1001
        %v3251 = vunpack.c.h.b16 %v1001
        %v3252 = vunpack.c.l.b16 %v1002
        %v3253 = vunpack.c.h.b16 %v1002
        %v3254 = vunpack.c.l.b16 %v1003
        %v3255 = vunpack.c.h.b16 %v1003
        %v3256 = vunpack.c.l.b16 %v1004
        %v3257 = vunpack.c.h.b16 %v1004
        %v3258 = vunpack.c.l.b16 %v1005
        %v3259 = vunpack.c.h.b16 %v1005
        %v3260 = vunpack.c.l.b16 %v1006
        %v3261 = vunpack.c.h.b16 %v1006
        %v3262 = vunpack.c.l.b16 %v1007
        %v3263 = vunpack.c.h.b16 %v1007
        %v3264 = vunpack.c.l.b16 %v1008
        %v3265 = vunpack.c.h.b16 %v1008
        %v3266 = vunpack.c.l.b16 %v1009
        %v3267 = vunpack.c.h.b16 %v1009
        %v3268 = vunpack.c.l.b16 %v1010
        %v3269 = vunpack.c.h.b16 %v1010
        %v3270 = vunpack.c.l.b16 %v1011
        %v3271 = vunpack.c.h.b16 %v1011
        %v3272 = vunpack.c.l.b16 %v1012
        %v3273 = vunpack.c.h.b16 %v1012
        %v3274 = vunpack.c.l.b16 %v1013
        %v3275 = vunpack.c.h.b16 %v1013
        %v3276 = vunpack.c.l.b16 %v1014
        %v3277 = vunpack.c.h.b16 %v1014
        %v3278 = vunpack.c.l.b16 %v1015
        %v3279 = vunpack.c.h.b16 %v1015
        %v3280 = vunpack.c.l.b16 %v1016
        %v3281 = vunpack.c.h.b16 %v1016
        %v3282 = vunpack.c.l.b16 %v1017
        %v3283 = vunpack.c.h.b16 %v1017
        %v3284 = vunpack.c.l.b16 %v1018
        %v3285 = vunpack.c.h.b16 %v1018
        %v3286 = vunpack.c.l.b16 %v1019
        %v3287 = vunpack.c.h.b16 %v1019
        %v3288 = vunpack.c.l.b16 %v1020
        %v3289 = vunpack.c.h.b16 %v1020
        %v3290 = vunpack.c.l.b16 %v1021
        %v3291 = vunpack.c.h.b16 %v1021
        %v3292 = vunpack.c.l.b16 %v1022
        %v3293 = vunpack.c.h.b16 %v1022
        %v3294 = vunpack.c.l.b16 %v1023
        %v3295 = vunpack.c.h.b16 %v1023
        %v3296 = vunpack.c.l.b16 %v1024
        %v3297 = vunpack.c.h.b16 %v1024
        %v3298 = vunpack.c.l.b16 %v1025
        %v3299 = vunpack.c.h.b16 %v1025
        %v3300 = vunpack.c.l.b16 %v1026
        %v3301 = vunpack.c.h.b16 %v1026
        %v3302 = vunpack.c.l.b16 %v1027
        %v3303 = vunpack.c.h.b16 %v1027
        %v3304 = vunpack.c.l.b16 %v1028
        %v3305 = vunpack.c.h.b16 %v1028
        %v3306 = vunpack.c.l.b16 %v1029
        %v3307 = vunpack.c.h.b16 %v1029
        %v3308 = vunpack.c.l.b16 %v1030
        %v3309 = vunpack.c.h.b16 %v1030
        %v3310 = vunpack.c.l.b16 %v1031
        %v3311 = vunpack.c.h.b16 %v1031
        %v3312 = vunpack.c.l.b16 %v1032
        %v3313 = vunpack.c.h.b16 %v1032
        %v3314 = vunpack.c.l.b16 %v1033
        %v3315 = vunpack.c.h.b16 %v1033
        %v3316 = vunpack.c.l.b16 %v1034
        %v3317 = vunpack.c.h.b16 %v1034
        %v3318 = vunpack.c.l.b16 %v1035
        %v3319 = vunpack.c.h.b16 %v1035
        %v3320 = vunpack.c.l.b16 %v1036
        %v3321 = vunpack.c.h.b16 %v1036
        %v3322 = vunpack.c.l.b16 %v1037
        %v3323 = vunpack.c.h.b16 %v1037
        %v3324 = vunpack.c.l.b16 %v1038
        %v3325 = vunpack.c.h.b16 %v1038
        %v3326 = vunpack.c.l.b16 %v1039
        %v3327 = vunpack.c.h.b16 %v1039
        %v3328 = vunpack.c.l.b16 %v1040
        %v3329 = vunpack.c.h.b16 %v1040
        %v3330 = vunpack.c.l.b16 %v1041
        %v3331 = vunpack.c.h.b16 %v1041
        %v3332 = vunpack.c.l.b16 %v1042
        %v3333 = vunpack.c.h.b16 %v1042
        %v3334 = vunpack.c.l.b16 %v1043
        %v3335 = vunpack.c.h.b16 %v1043
        %v3336 = vunpack.c.l.b16 %v1044
        %v3337 = vunpack.c.h.b16 %v1044
        %v3338 = vunpack.c.l.b16 %v1045
        %v3339 = vunpack.c.h.b16 %v1045
        %v3340 = vunpack.c.l.b16 %v1046
        %v3341 = vunpack.c.h.b16 %v1046
        %v3342 = vunpack.c.l.b16 %v1047
        %v3343 = vunpack.c.h.b16 %v1047
        %v3344 = vunpack.c.l.b16 %v1048
        %v3345 = vunpack.c.h.b16 %v1048
        %v3346 = vunpack.c.l.b16 %v1049
        %v3347 = vunpack.c.h.b16 %v1049
        %v3348 = vunpack.c.l.b16 %v1050
        %v3349 = vunpack.c.h.b16 %v1050
        %v3350 = vunpack.c.l.b16 %v1051
        %v3351 = vunpack.c.h.b16 %v1051
        %v3352 = vunpack.c.l.b16 %v1052
        %v3353 = vunpack.c.h.b16 %v1052
        %v3354 = vunpack.c.l.b16 %v1053
        %v3355 = vunpack.c.h.b16 %v1053
        %v3356 = vunpack.c.l.b16 %v1054
        %v3357 = vunpack.c.h.b16 %v1054
        %v3358 = vunpack.c.l.b16 %v1055
        %v3359 = vunpack.c.h.b16 %v1055
        %v3360 = vunpack.c.l.b16 %v1056
        %v3361 = vunpack.c.h.b16 %v1056
        %v3362 = vunpack.c.l.b16 %v1057
        %v3363 = vunpack.c.h.b16 %v1057
        %v3364 = vunpack.c.l.b16 %v1058
        %v3365 = vunpack.c.h.b16 %v1058
        %v3366 = vunpack.c.l.b16 %v1059
        %v3367 = vunpack.c.h.b16 %v1059
        %v3368 = vunpack.c.l.b16 %v1060
        %v3369 = vunpack.c.h.b16 %v1060
        %v3370 = vunpack.c.l.b16 %v1061
        %v3371 = vunpack.c.h.b16 %v1061
        %v3372 = vunpack.c.l.b16 %v1062
        %v3373 = vunpack.c.h.b16 %v1062
        %v3374 = vunpack.c.l.b16 %v1063
        %v3375 = vunpack.c.h.b16 %v1063
        %v3376 = vunpack.c.l.b16 %v1064
        %v3377 = vunpack.c.h.b16 %v1064
        %v3378 = vunpack.c.l.b16 %v1065
        %v3379 = vunpack.c.h.b16 %v1065
        %v3380 = vunpack.c.l.b16 %v1066
        %v3381 = vunpack.c.h.b16 %v1066
        %v3382 = vunpack.c.l.b16 %v1067
        %v3383 = vunpack.c.h.b16 %v1067
        %v3384 = vunpack.c.l.b16 %v1068
        %v3385 = vunpack.c.h.b16 %v1068
        %v3386 = vunpack.c.l.b16 %v1069
        %v3387 = vunpack.c.h.b16 %v1069
        %v3388 = vunpack.c.l.b16 %v1070
        %v3389 = vunpack.c.h.b16 %v1070
        %v3390 = vunpack.c.l.b16 %v1071
        %v3391 = vunpack.c.h.b16 %v1071
        %v3392 = vunpack.c.l.b16 %v1072
        %v3393 = vunpack.c.h.b16 %v1072
        %v3394 = vunpack.c.l.b16 %v1073
        %v3395 = vunpack.c.h.b16 %v1073
        %v3396 = vunpack.c.l.b16 %v1074
        %v3397 = vunpack.c.h.b16 %v1074
        %v3398 = vunpack.c.l.b16 %v1075
        %v3399 = vunpack.c.h.b16 %v1075
        %v3400 = vunpack.c.l.b16 %v1076
        %v3401 = vunpack.c.h.b16 %v1076
        %v3402 = vunpack.c.l.b16 %v1077
        %v3403 = vunpack.c.h.b16 %v1077
        %v3404 = vpack.c.b16 %v1872, %v1868
        %v3405 = vpack.c.b16 %v1873, %v1869
        %v3406 = vpack.c.b16 %v1874, %v1870
        %v3407 = vpack.c.b16 %v1875, %v1871
        %v3408 = vpack.c.b16 %v1880, %v1876
        %v3409 = vpack.c.b16 %v1881, %v1877
        %v3410 = vpack.c.b16 %v1882, %v1878
        %v3411 = vpack.c.b16 %v1883, %v1879
        %v3412 = vpack.c.b16 %v1888, %v1884
        %v3413 = vpack.c.b16 %v1889, %v1885
        %v3414 = vpack.c.b16 %v1890, %v1886
        %v3415 = vpack.c.b16 %v1891, %v1887
        %v3416 = vpack.c.b16 %v1896, %v1892
        %v3417 = vpack.c.b16 %v1897, %v1893
        %v3418 = vpack.c.b16 %v1898, %v1894
        %v3419 = vpack.c.b16 %v1899, %v1895
        %v3420 = vpack.c.b16 %v1904, %v1900
        %v3421 = vpack.c.b16 %v1905, %v1901
        %v3422 = vpack.c.b16 %v1906, %v1902
        %v3423 = vpack.c.b16 %v1907, %v1903
        %v3424 = vpack.c.b16 %v1912, %v1908
        %v3425 = vpack.c.b16 %v1913, %v1909
        %v3426 = vpack.c.b16 %v1914, %v1910
        %v3427 = vpack.c.b16 %v1915, %v1911
        %v3428 = vpack.c.b16 %v1920, %v1916
        %v3429 = vpack.c.b16 %v1921, %v1917
        %v3430 = vpack.c.b16 %v1922, %v1918
        %v3431 = vpack.c.b16 %v1923, %v1919
        %v3432 = vpack.c.b16 %v1928, %v1924
        %v3433 = vpack.c.b16 %v1929, %v1925
        %v3434 = vpack.c.b16 %v1930, %v1926
        %v3435 = vpack.c.b16 %v1931, %v1927
        %v3436 = vpack.c.b16 %v1936, %v1932
        %v3437 = vpack.c.b16 %v1937, %v1933
        %v3438 = vpack.c.b16 %v1938, %v1934
        %v3439 = vpack.c.b16 %v1939, %v1935
        %v3440 = vpack.c.b16 %v1944, %v1940
        %v3441 = vpack.c.b16 %v1945, %v1941
        %v3442 = vpack.c.b16 %v1946, %v1942
        %v3443 = vpack.c.b16 %v1947, %v1943
        %v3444 = vpack.c.b16 %v1952, %v1948
        %v3445 = vpack.c.b16 %v1953, %v1949
        %v3446 = vpack.c.b16 %v1954, %v1950
        %v3447 = vpack.c.b16 %v1955, %v1951
        %v3448 = vpack.c.b16 %v1960, %v1956
        %v3449 = vpack.c.b16 %v1961, %v1957
        %v3450 = vpack.c.b16 %v1962, %v1958
        %v3451 = vpack.c.b16 %v1963, %v1959
        %v3452 = vpack.c.b16 %v1968, %v1964
        %v3453 = vpack.c.b16 %v1969, %v1965
        %v3454 = vpack.c.b16 %v1970, %v1966
        %v3455 = vpack.c.b16 %v1971, %v1967
        %v3456 = vpack.c.b16 %v1976, %v1972
        %v3457 = vpack.c.b16 %v1977, %v1973
        %v3458 = vpack.c.b16 %v1978, %v1974
        %v3459 = vpack.c.b16 %v1979, %v1975
        %v3460 = vpack.c.b16 %v1984, %v1980
        %v3461 = vpack.c.b16 %v1985, %v1981
        %v3462 = vpack.c.b16 %v1986, %v1982
        %v3463 = vpack.c.b16 %v1987, %v1983
        %v3464 = vpack.c.b16 %v1992, %v1988
        %v3465 = vpack.c.b16 %v1993, %v1989
        %v3466 = vpack.c.b16 %v1994, %v1990
        %v3467 = vpack.c.b16 %v1995, %v1991
        %v3468 = vpack.c.b16 %v2000, %v1996
        %v3469 = vpack.c.b16 %v2001, %v1997
        %v3470 = vpack.c.b16 %v2002, %v1998
        %v3471 = vpack.c.b16 %v2003, %v1999
        %v3472 = vpack.c.b16 %v2008, %v2004
        %v3473 = vpack.c.b16 %v2009, %v2005
        %v3474 = vpack.c.b16 %v2010, %v2006
        %v3475 = vpack.c.b16 %v2011, %v2007
        %v3476 = vpack.c.b16 %v2016, %v2012
        %v3477 = vpack.c.b16 %v2017, %v2013
        %v3478 = vpack.c.b16 %v2018, %v2014
        %v3479 = vpack.c.b16 %v2019, %v2015
        %v3480 = vpack.c.b16 %v2024, %v2020
        %v3481 = vpack.c.b16 %v2025, %v2021
        %v3482 = vpack.c.b16 %v2026, %v2022
        %v3483 = vpack.c.b16 %v2027, %v2023
        %v3484 = vpack.c.b16 %v2032, %v2028
        %v3485 = vpack.c.b16 %v2033, %v2029
        %v3486 = vpack.c.b16 %v2034, %v2030
        %v3487 = vpack.c.b16 %v2035, %v2031
        %v3488 = vpack.c.b16 %v2040, %v2036
        %v3489 = vpack.c.b16 %v2041, %v2037
        %v3490 = vpack.c.b16 %v2042, %v2038
        %v3491 = vpack.c.b16 %v2043, %v2039
        %v3492 = vpack.c.b16 %v2048, %v2044
        %v3493 = vpack.c.b16 %v2049, %v2045
        %v3494 = vpack.c.b16 %v2050, %v2046
        %v3495 = vpack.c.b16 %v2051, %v2047
        %v3496 = vpack.c.b16 %v2056, %v2052
        %v3497 = vpack.c.b16 %v2057, %v2053
        %v3498 = vpack.c.b16 %v2058, %v2054
        %v3499 = vpack.c.b16 %v2059, %v2055
        %v3500 = vpack.c.b16 %v2064, %v2060
        %v3501 = vpack.c.b16 %v2065, %v2061
        %v3502 = vpack.c.b16 %v2066, %v2062
        %v3503 = vpack.c.b16 %v2067, %v2063
        %v3504 = vpack.c.b16 %v2072, %v2068
        %v3505 = vpack.c.b16 %v2073, %v2069
        %v3506 = vpack.c.b16 %v2074, %v2070
        %v3507 = vpack.c.b16 %v2075, %v2071
        %v3508 = vpack.c.b16 %v2080, %v2076
        %v3509 = vpack.c.b16 %v2081, %v2077
        %v3510 = vpack.c.b16 %v2082, %v2078
        %v3511 = vpack.c.b16 %v2083, %v2079
        %v3512 = vpack.c.b16 %v2088, %v2084
        %v3513 = vpack.c.b16 %v2089, %v2085
        %v3514 = vpack.c.b16 %v2090, %v2086
        %v3515 = vpack.c.b16 %v2091, %v2087
        %v3516 = vpack.c.b16 %v2096, %v2092
        %v3517 = vpack.c.b16 %v2097, %v2093
        %v3518 = vpack.c.b16 %v2098, %v2094
        %v3519 = vpack.c.b16 %v2099, %v2095
        %v3520 = vpack.c.b16 %v2104, %v2100
        %v3521 = vpack.c.b16 %v2105, %v2101
        %v3522 = vpack.c.b16 %v2106, %v2102
        %v3523 = vpack.c.b16 %v2107, %v2103
        %v3524 = vpack.c.b16 %v2112, %v2108
        %v3525 = vpack.c.b16 %v2113, %v2109
        %v3526 = vpack.c.b16 %v2114, %v2110
        %v3527 = vpack.c.b16 %v2115, %v2111
        %v3528 = vpack.c.b16 %v2120, %v2116
        %v3529 = vpack.c.b16 %v2121, %v2117
        %v3530 = vpack.c.b16 %v2122, %v2118
        %v3531 = vpack.c.b16 %v2123, %v2119
        %v3532 = vpack.c.b16 %v2128, %v2124
        %v3533 = vpack.c.b16 %v2129, %v2125
        %v3534 = vpack.c.b16 %v2130, %v2126
        %v3535 = vpack.c.b16 %v2131, %v2127
        %v3536 = vpack.c.b16 %v2136, %v2132
        %v3537 = vpack.c.b16 %v2137, %v2133
        %v3538 = vpack.c.b16 %v2138, %v2134
        %v3539 = vpack.c.b16 %v2139, %v2135
        %v3540 = vpack.c.b16 %v2144, %v2140
        %v3541 = vpack.c.b16 %v2145, %v2141
        %v3542 = vpack.c.b16 %v2146, %v2142
        %v3543 = vpack.c.b16 %v2147, %v2143
        %v3544 = vpack.c.b16 %v2152, %v2148
        %v3545 = vpack.c.b16 %v2153, %v2149
        %v3546 = vpack.c.b16 %v2154, %v2150
        %v3547 = vpack.c.b16 %v2155, %v2151
        %v3548 = vpack.c.b16 %v2160, %v2156
        %v3549 = vpack.c.b16 %v2161, %v2157
        %v3550 = vpack.c.b16 %v2162, %v2158
        %v3551 = vpack.c.b16 %v2163, %v2159
        %v3552 = vpack.c.b16 %v2168, %v2164
        %v3553 = vpack.c.b16 %v2169, %v2165
        %v3554 = vpack.c.b16 %v2170, %v2166
        %v3555 = vpack.c.b16 %v2171, %v2167
        %v3556 = vpack.c.b16 %v2176, %v2172
        %v3557 = vpack.c.b16 %v2177, %v2173
        %v3558 = vpack.c.b16 %v2178, %v2174
        %v3559 = vpack.c.b16 %v2179, %v2175
        %v3560 = vpack.c.b16 %v2184, %v2180
        %v3561 = vpack.c.b16 %v2185, %v2181
        %v3562 = vpack.c.b16 %v2186, %v2182
        %v3563 = vpack.c.b16 %v2187, %v2183
        %v3564 = vpack.c.b16 %v2192, %v2188
        %v3565 = vpack.c.b16 %v2193, %v2189
        %v3566 = vpack.c.b16 %v2194, %v2190
        %v3567 = vpack.c.b16 %v2195, %v2191
        %v3568 = vpack.c.b16 %v2200, %v2196
        %v3569 = vpack.c.b16 %v2201, %v2197
        %v3570 = vpack.c.b16 %v2202, %v2198
        %v3571 = vpack.c.b16 %v2203, %v2199
        %v3572 = vpack.c.b16 %v2208, %v2204
        %v3573 = vpack.c.b16 %v2209, %v2205
        %v3574 = vpack.c.b16 %v2210, %v2206
        %v3575 = vpack.c.b16 %v2211, %v2207
        %v3576 = vpack.c.b16 %v2216, %v2212
        %v3577 = vpack.c.b16 %v2217, %v2213
        %v3578 = vpack.c.b16 %v2218, %v2214
        %v3579 = vpack.c.b16 %v2219, %v2215
        %v3580 = vpack.c.b16 %v2224, %v2220
        %v3581 = vpack.c.b16 %v2225, %v2221
        %v3582 = vpack.c.b16 %v2226, %v2222
        %v3583 = vpack.c.b16 %v2227, %v2223
        %v3584 = vpack.c.b16 %v2232, %v2228
        %v3585 = vpack.c.b16 %v2233, %v2229
        %v3586 = vpack.c.b16 %v2234, %v2230
        %v3587 = vpack.c.b16 %v2235, %v2231
        %v3588 = vpack.c.b16 %v2240, %v2236
        %v3589 = vpack.c.b16 %v2241, %v2237
        %v3590 = vpack.c.b16 %v2242, %v2238
        %v3591 = vpack.c.b16 %v2243, %v2239
        %v3592 = vpack.c.b16 %v2248, %v2244
        %v3593 = vpack.c.b16 %v2249, %v2245
        %v3594 = vpack.c.b16 %v2250, %v2246
        %v3595 = vpack.c.b16 %v2251, %v2247
        %v3596 = vpack.c.b16 %v2256, %v2252
        %v3597 = vpack.c.b16 %v2257, %v2253
        %v3598 = vpack.c.b16 %v2258, %v2254
        %v3599 = vpack.c.b16 %v2259, %v2255
        %v3600 = vpack.c.b16 %v2264, %v2260
        %v3601 = vpack.c.b16 %v2265, %v2261
        %v3602 = vpack.c.b16 %v2266, %v2262
        %v3603 = vpack.c.b16 %v2267, %v2263
        %v3604 = vpack.c.b16 %v2272, %v2268
        %v3605 = vpack.c.b16 %v2273, %v2269
        %v3606 = vpack.c.b16 %v2274, %v2270
        %v3607 = vpack.c.b16 %v2275, %v2271
        %v3608 = vpack.c.b16 %v2280, %v2276
        %v3609 = vpack.c.b16 %v2281, %v2277
        %v3610 = vpack.c.b16 %v2282, %v2278
        %v3611 = vpack.c.b16 %v2283, %v2279
        %v3612 = vpack.c.b16 %v2288, %v2284
        %v3613 = vpack.c.b16 %v2289, %v2285
        %v3614 = vpack.c.b16 %v2290, %v2286
        %v3615 = vpack.c.b16 %v2291, %v2287
        %v3616 = vpack.c.b16 %v2296, %v2292
        %v3617 = vpack.c.b16 %v2297, %v2293
        %v3618 = vpack.c.b16 %v2298, %v2294
        %v3619 = vpack.c.b16 %v2299, %v2295
        %v3620 = vpack.c.b16 %v2304, %v2300
        %v3621 = vpack.c.b16 %v2305, %v2301
        %v3622 = vpack.c.b16 %v2306, %v2302
        %v3623 = vpack.c.b16 %v2307, %v2303
        %v3624 = vpack.c.b16 %v2312, %v2308
        %v3625 = vpack.c.b16 %v2313, %v2309
        %v3626 = vpack.c.b16 %v2314, %v2310
        %v3627 = vpack.c.b16 %v2315, %v2311
        %v3628 = vpack.c.b16 %v2320, %v2316
        %v3629 = vpack.c.b16 %v2321, %v2317
        %v3630 = vpack.c.b16 %v2322, %v2318
        %v3631 = vpack.c.b16 %v2323, %v2319
        %v3632 = vpack.c.b16 %v2328, %v2324
        %v3633 = vpack.c.b16 %v2329, %v2325
        %v3634 = vpack.c.b16 %v2330, %v2326
        %v3635 = vpack.c.b16 %v2331, %v2327
        %v3636 = vpack.c.b16 %v2336, %v2332
        %v3637 = vpack.c.b16 %v2337, %v2333
        %v3638 = vpack.c.b16 %v2338, %v2334
        %v3639 = vpack.c.b16 %v2339, %v2335
        %v3640 = vpack.c.b16 %v2344, %v2340
        %v3641 = vpack.c.b16 %v2345, %v2341
        %v3642 = vpack.c.b16 %v2346, %v2342
        %v3643 = vpack.c.b16 %v2347, %v2343
        %v3644 = vpack.c.b16 %v2352, %v2348
        %v3645 = vpack.c.b16 %v2353, %v2349
        %v3646 = vpack.c.b16 %v2354, %v2350
        %v3647 = vpack.c.b16 %v2355, %v2351
        %v3648 = vpack.c.b16 %v2360, %v2356
        %v3649 = vpack.c.b16 %v2361, %v2357
        %v3650 = vpack.c.b16 %v2362, %v2358
        %v3651 = vpack.c.b16 %v2363, %v2359
        %v3652 = vpack.c.b16 %v2368, %v2364
        %v3653 = vpack.c.b16 %v2369, %v2365
        %v3654 = vpack.c.b16 %v2370, %v2366
        %v3655 = vpack.c.b16 %v2371, %v2367
        %v3656 = vpack.c.b16 %v2376, %v2372
        %v3657 = vpack.c.b16 %v2377, %v2373
        %v3658 = vpack.c.b16 %v2378, %v2374
        %v3659 = vpack.c.b16 %v2379, %v2375
        %v3660 = vpack.c.b16 %v2384, %v2380
        %v3661 = vpack.c.b16 %v2385, %v2381
        %v3662 = vpack.c.b16 %v2386, %v2382
        %v3663 = vpack.c.b16 %v2387, %v2383
        %v3664 = vpack.c.b16 %v2392, %v2388
        %v3665 = vpack.c.b16 %v2393, %v2389
        %v3666 = vpack.c.b16 %v2394, %v2390
        %v3667 = vpack.c.b16 %v2395, %v2391
        %v3668 = vpack.c.b16 %v2400, %v2396
        %v3669 = vpack.c.b16 %v2401, %v2397
        %v3670 = vpack.c.b16 %v2402, %v2398
        %v3671 = vpack.c.b16 %v2403, %v2399
        %v3672 = vpack.c.b16 %v2408, %v2404
        %v3673 = vpack.c.b16 %v2409, %v2405
        %v3674 = vpack.c.b16 %v2410, %v2406
        %v3675 = vpack.c.b16 %v2411, %v2407
        %v3676 = vpack.c.b16 %v2416, %v2412
        %v3677 = vpack.c.b16 %v2417, %v2413
        %v3678 = vpack.c.b16 %v2418, %v2414
        %v3679 = vpack.c.b16 %v2419, %v2415
        %v3680 = vpack.c.b16 %v2424, %v2420
        %v3681 = vpack.c.b16 %v2425, %v2421
        %v3682 = vpack.c.b16 %v2426, %v2422
        %v3683 = vpack.c.b16 %v2427, %v2423
        %v3684 = vpack.c.b16 %v2432, %v2428
        %v3685 = vpack.c.b16 %v2433, %v2429
        %v3686 = vpack.c.b16 %v2434, %v2430
        %v3687 = vpack.c.b16 %v2435, %v2431
        %v3688 = vpack.c.b16 %v2440, %v2436
        %v3689 = vpack.c.b16 %v2441, %v2437
        %v3690 = vpack.c.b16 %v2442, %v2438
        %v3691 = vpack.c.b16 %v2443, %v2439
        %v3692 = vpack.c.b16 %v2448, %v2444
        %v3693 = vpack.c.b16 %v2449, %v2445
        %v3694 = vpack.c.b16 %v2450, %v2446
        %v3695 = vpack.c.b16 %v2451, %v2447
        %v3696 = vpack.c.b16 %v2456, %v2452
        %v3697 = vpack.c.b16 %v2457, %v2453
        %v3698 = vpack.c.b16 %v2458, %v2454
        %v3699 = vpack.c.b16 %v2459, %v2455
        %v3700 = vpack.c.b16 %v2464, %v2460
        %v3701 = vpack.c.b16 %v2465, %v2461
        %v3702 = vpack.c.b16 %v2466, %v2462
        %v3703 = vpack.c.b16 %v2467, %v2463
        %v3704 = vpack.c.b16 %v2472, %v2468
        %v3705 = vpack.c.b16 %v2473, %v2469
        %v3706 = vpack.c.b16 %v2474, %v2470
        %v3707 = vpack.c.b16 %v2475, %v2471
        %v3708 = vpack.c.b16 %v2480, %v2476
        %v3709 = vpack.c.b16 %v2481, %v2477
        %v3710 = vpack.c.b16 %v2482, %v2478
        %v3711 = vpack.c.b16 %v2483, %v2479
        %v3712 = vpack.c.b16 %v2488, %v2484
        %v3713 = vpack.c.b16 %v2489, %v2485
        %v3714 = vpack.c.b16 %v2490, %v2486
        %v3715 = vpack.c.b16 %v2491, %v2487
        %v3716 = vpack.c.b16 %v2496, %v2492
        %v3717 = vpack.c.b16 %v2497, %v2493
        %v3718 = vpack.c.b16 %v2498, %v2494
        %v3719 = vpack.c.b16 %v2499, %v2495
        %v3720 = vpack.c.b16 %v2504, %v2500
        %v3721 = vpack.c.b16 %v2505, %v2501
        %v3722 = vpack.c.b16 %v2506, %v2502
        %v3723 = vpack.c.b16 %v2507, %v2503
        %v3724 = vpack.c.b16 %v2512, %v2508
        %v3725 = vpack.c.b16 %v2513, %v2509
        %v3726 = vpack.c.b16 %v2514, %v2510
        %v3727 = vpack.c.b16 %v2515, %v2511
        %v3728 = vpack.c.b16 %v2520, %v2516
        %v3729 = vpack.c.b16 %v2521, %v2517
        %v3730 = vpack.c.b16 %v2522, %v2518
        %v3731 = vpack.c.b16 %v2523, %v2519
        %v3732 = vpack.c.b16 %v2528, %v2524
        %v3733 = vpack.c.b16 %v2529, %v2525
        %v3734 = vpack.c.b16 %v2530, %v2526
        %v3735 = vpack.c.b16 %v2531, %v2527
        %v3736 = vpack.c.b16 %v2536, %v2532
        %v3737 = vpack.c.b16 %v2537, %v2533
        %v3738 = vpack.c.b16 %v2538, %v2534
        %v3739 = vpack.c.b16 %v2539, %v2535
        %v3740 = vpack.c.b16 %v2544, %v2540
        %v3741 = vpack.c.b16 %v2545, %v2541
        %v3742 = vpack.c.b16 %v2546, %v2542
        %v3743 = vpack.c.b16 %v2547, %v2543
        %v3744 = vpack.c.b16 %v2552, %v2548
        %v3745 = vpack.c.b16 %v2553, %v2549
        %v3746 = vpack.c.b16 %v2554, %v2550
        %v3747 = vpack.c.b16 %v2555, %v2551
        %v3748 = vpack.c.b16 %v2560, %v2556
        %v3749 = vpack.c.b16 %v2561, %v2557
        %v3750 = vpack.c.b16 %v2562, %v2558
        %v3751 = vpack.c.b16 %v2563, %v2559
        %v3752 = vpack.c.b16 %v2568, %v2564
        %v3753 = vpack.c.b16 %v2569, %v2565
        %v3754 = vpack.c.b16 %v2570, %v2566
        %v3755 = vpack.c.b16 %v2571, %v2567
        %v3756 = vpack.c.b16 %v2576, %v2572
        %v3757 = vpack.c.b16 %v2577, %v2573
        %v3758 = vpack.c.b16 %v2578, %v2574
        %v3759 = vpack.c.b16 %v2579, %v2575
        %v3760 = vpack.c.b16 %v2584, %v2580
        %v3761 = vpack.c.b16 %v2585, %v2581
        %v3762 = vpack.c.b16 %v2586, %v2582
        %v3763 = vpack.c.b16 %v2587, %v2583
        %v3764 = vpack.c.b16 %v2592, %v2588
        %v3765 = vpack.c.b16 %v2593, %v2589
        %v3766 = vpack.c.b16 %v2594, %v2590
        %v3767 = vpack.c.b16 %v2595, %v2591
        %v3768 = vpack.c.b16 %v2600, %v2596
        %v3769 = vpack.c.b16 %v2601, %v2597
        %v3770 = vpack.c.b16 %v2602, %v2598
        %v3771 = vpack.c.b16 %v2603, %v2599
        %v3772 = vpack.c.b16 %v2608, %v2604
        %v3773 = vpack.c.b16 %v2609, %v2605
        %v3774 = vpack.c.b16 %v2610, %v2606
        %v3775 = vpack.c.b16 %v2611, %v2607
        %v3776 = vpack.c.b16 %v2616, %v2612
        %v3777 = vpack.c.b16 %v2617, %v2613
        %v3778 = vpack.c.b16 %v2618, %v2614
        %v3779 = vpack.c.b16 %v2619, %v2615
        %v3780 = vpack.c.b16 %v2624, %v2620
        %v3781 = vpack.c.b16 %v2625, %v2621
        %v3782 = vpack.c.b16 %v2626, %v2622
        %v3783 = vpack.c.b16 %v2627, %v2623
        %v3784 = vpack.c.b16 %v2632, %v2628
        %v3785 = vpack.c.b16 %v2633, %v2629
        %v3786 = vpack.c.b16 %v2634, %v2630
        %v3787 = vpack.c.b16 %v2635, %v2631
        %v3788 = vpack.c.b16 %v2640, %v2636
        %v3789 = vpack.c.b16 %v2641, %v2637
        %v3790 = vpack.c.b16 %v2642, %v2638
        %v3791 = vpack.c.b16 %v2643, %v2639
        %v3792 = vpack.c.b16 %v2648, %v2644
        %v3793 = vpack.c.b16 %v2649, %v2645
        %v3794 = vpack.c.b16 %v2650, %v2646
        %v3795 = vpack.c.b16 %v2651, %v2647
        %v3796 = vpack.c.b16 %v2656, %v2652
        %v3797 = vpack.c.b16 %v2657, %v2653
        %v3798 = vpack.c.b16 %v2658, %v2654
        %v3799 = vpack.c.b16 %v2659, %v2655
        %v3800 = vpack.c.b16 %v2664, %v2660
        %v3801 = vpack.c.b16 %v2665, %v2661
        %v3802 = vpack.c.b16 %v2666, %v2662
        %v3803 = vpack.c.b16 %v2667, %v2663
        %v3804 = vpack.c.b16 %v2672, %v2668
        %v3805 = vpack.c.b16 %v2673, %v2669
        %v3806 = vpack.c.b16 %v2674, %v2670
        %v3807 = vpack.c.b16 %v2675, %v2671
        %v3808 = vpack.c.b16 %v2680, %v2676
        %v3809 = vpack.c.b16 %v2681, %v2677
        %v3810 = vpack.c.b16 %v2682, %v2678
        %v3811 = vpack.c.b16 %v2683, %v2679
        %v3812 = vpack.c.b16 %v2688, %v2684
        %v3813 = vpack.c.b16 %v2689, %v2685
        %v3814 = vpack.c.b16 %v2690, %v2686
        %v3815 = vpack.c.b16 %v2691, %v2687
        %v3816 = vpack.c.b16 %v2696, %v2692
        %v3817 = vpack.c.b16 %v2697, %v2693
        %v3818 = vpack.c.b16 %v2698, %v2694
        %v3819 = vpack.c.b16 %v2699, %v2695
        %v3820 = vpack.c.b16 %v2704, %v2700
        %v3821 = vpack.c.b16 %v2705, %v2701
        %v3822 = vpack.c.b16 %v2706, %v2702
        %v3823 = vpack.c.b16 %v2707, %v2703
        %v3824 = vpack.c.b16 %v2712, %v2708
        %v3825 = vpack.c.b16 %v2713, %v2709
        %v3826 = vpack.c.b16 %v2714, %v2710
        %v3827 = vpack.c.b16 %v2715, %v2711
        %v3828 = vpack.c.b16 %v2720, %v2716
        %v3829 = vpack.c.b16 %v2721, %v2717
        %v3830 = vpack.c.b16 %v2722, %v2718
        %v3831 = vpack.c.b16 %v2723, %v2719
        %v3832 = vpack.c.b16 %v2728, %v2724
        %v3833 = vpack.c.b16 %v2729, %v2725
        %v3834 = vpack.c.b16 %v2730, %v2726
        %v3835 = vpack.c.b16 %v2731, %v2727
        %v3836 = vpack.c.b16 %v2736, %v2732
        %v3837 = vpack.c.b16 %v2737, %v2733
        %v3838 = vpack.c.b16 %v2738, %v2734
        %v3839 = vpack.c.b16 %v2739, %v2735
        %v3840 = vpack.c.b16 %v2744, %v2740
        %v3841 = vpack.c.b16 %v2745, %v2741
        %v3842 = vpack.c.b16 %v2746, %v2742
        %v3843 = vpack.c.b16 %v2747, %v2743
        %v3844 = vpack.c.b16 %v2752, %v2748
        %v3845 = vpack.c.b16 %v2753, %v2749
        %v3846 = vpack.c.b16 %v2754, %v2750
        %v3847 = vpack.c.b16 %v2755, %v2751
        %v3848 = vpack.c.b16 %v2760, %v2756
        %v3849 = vpack.c.b16 %v2761, %v2757
        %v3850 = vpack.c.b16 %v2762, %v2758
        %v3851 = vpack.c.b16 %v2763, %v2759
        %v3852 = vpack.c.b16 %v2768, %v2764
        %v3853 = vpack.c.b16 %v2769, %v2765
        %v3854 = vpack.c.b16 %v2770, %v2766
        %v3855 = vpack.c.b16 %v2771, %v2767
        %v3856 = vpack.c.b16 %v2776, %v2772
        %v3857 = vpack.c.b16 %v2777, %v2773
        %v3858 = vpack.c.b16 %v2778, %v2774
        %v3859 = vpack.c.b16 %v2779, %v2775
        %v3860 = vpack.c.b16 %v2784, %v2780
        %v3861 = vpack.c.b16 %v2785, %v2781
        %v3862 = vpack.c.b16 %v2786, %v2782
        %v3863 = vpack.c.b16 %v2787, %v2783
        %v3864 = vpack.c.b16 %v2792, %v2788
        %v3865 = vpack.c.b16 %v2793, %v2789
        %v3866 = vpack.c.b16 %v2794, %v2790
        %v3867 = vpack.c.b16 %v2795, %v2791
        %v3868 = vpack.c.b16 %v2800, %v2796
        %v3869 = vpack.c.b16 %v2801, %v2797
        %v3870 = vpack.c.b16 %v2802, %v2798
        %v3871 = vpack.c.b16 %v2803, %v2799
        %v3872 = vpack.c.b16 %v2808, %v2804
        %v3873 = vpack.c.b16 %v2809, %v2805
        %v3874 = vpack.c.b16 %v2810, %v2806
        %v3875 = vpack.c.b16 %v2811, %v2807
        %v3876 = vpack.c.b16 %v2816, %v2812
        %v3877 = vpack.c.b16 %v2817, %v2813
        %v3878 = vpack.c.b16 %v2818, %v2814
        %v3879 = vpack.c.b16 %v2819, %v2815
        %v3880 = vpack.c.b16 %v2824, %v2820
        %v3881 = vpack.c.b16 %v2825, %v2821
        %v3882 = vpack.c.b16 %v2826, %v2822
        %v3883 = vpack.c.b16 %v2827, %v2823
        %v3884 = vpack.c.b16 %v2832, %v2828
        %v3885 = vpack.c.b16 %v2833, %v2829
        %v3886 = vpack.c.b16 %v2834, %v2830
        %v3887 = vpack.c.b16 %v2835, %v2831
        %v3888 = vpack.c.b16 %v2840, %v2836
        %v3889 = vpack.c.b16 %v2841, %v2837
        %v3890 = vpack.c.b16 %v2842, %v2838
        %v3891 = vpack.c.b16 %v2843, %v2839
        %v3892 = vpack.c.b16 %v2848, %v2844
        %v3893 = vpack.c.b16 %v2849, %v2845
        %v3894 = vpack.c.b16 %v2850, %v2846
        %v3895 = vpack.c.b16 %v2851, %v2847
        %v3896 = vpack.c.b16 %v2856, %v2852
        %v3897 = vpack.c.b16 %v2857, %v2853
        %v3898 = vpack.c.b16 %v2858, %v2854
        %v3899 = vpack.c.b16 %v2859, %v2855
        %v3900 = vpack.c.b16 %v2864, %v2860
        %v3901 = vpack.c.b16 %v2865, %v2861
        %v3902 = vpack.c.b16 %v2866, %v2862
        %v3903 = vpack.c.b16 %v2867, %v2863
        %v3904 = vpack.c.b16 %v2872, %v2868
        %v3905 = vpack.c.b16 %v2873, %v2869
        %v3906 = vpack.c.b16 %v2874, %v2870
        %v3907 = vpack.c.b16 %v2875, %v2871
        %v3908 = vpack.c.b16 %v2880, %v2876
        %v3909 = vpack.c.b16 %v2881, %v2877
        %v3910 = vpack.c.b16 %v2882, %v2878
        %v3911 = vpack.c.b16 %v2883, %v2879
        %v3912 = vpack.c.b16 %v2888, %v2884
        %v3913 = vpack.c.b16 %v2889, %v2885
        %v3914 = vpack.c.b16 %v2890, %v2886
        %v3915 = vpack.c.b16 %v2891, %v2887
        %v3916 = vpack.c.b16 %v2896, %v2892
        %v3917 = vpack.c.b16 %v2897, %v2893
        %v3918 = vpack.c.b16 %v2898, %v2894
        %v3919 = vpack.c.b16 %v2899, %v2895
        %v3920 = vpack.c.b16 %v2904, %v2900
        %v3921 = vpack.c.b16 %v2905, %v2901
        %v3922 = vpack.c.b16 %v2906, %v2902
        %v3923 = vpack.c.b16 %v2907, %v2903
        %v3924 = vpack.c.b16 %v2912, %v2908
        %v3925 = vpack.c.b16 %v2913, %v2909
        %v3926 = vpack.c.b16 %v2914, %v2910
        %v3927 = vpack.c.b16 %v2915, %v2911
        %v3928 = vpack.c.b16 %v2920, %v2916
        %v3929 = vpack.c.b16 %v2921, %v2917
        %v3930 = vpack.c.b16 %v2922, %v2918
        %v3931 = vpack.c.b16 %v2923, %v2919
        %v3932 = vpack.c.b16 %v2928, %v2924
        %v3933 = vpack.c.b16 %v2929, %v2925
        %v3934 = vpack.c.b16 %v2930, %v2926
        %v3935 = vpack.c.b16 %v2931, %v2927
        %v3936 = vpack.c.b16 %v2936, %v2932
        %v3937 = vpack.c.b16 %v2937, %v2933
        %v3938 = vpack.c.b16 %v2938, %v2934
        %v3939 = vpack.c.b16 %v2939, %v2935
        %v3940 = vpack.c.b16 %v2944, %v2940
        %v3941 = vpack.c.b16 %v2945, %v2941
        %v3942 = vpack.c.b16 %v2946, %v2942
        %v3943 = vpack.c.b16 %v2947, %v2943
        %v3944 = vpack.c.b16 %v2952, %v2948
        %v3945 = vpack.c.b16 %v2953, %v2949
        %v3946 = vpack.c.b16 %v2954, %v2950
        %v3947 = vpack.c.b16 %v2955, %v2951
        %v3948 = vpack.c.b16 %v2960, %v2956
        %v3949 = vpack.c.b16 %v2961, %v2957
        %v3950 = vpack.c.b16 %v2962, %v2958
        %v3951 = vpack.c.b16 %v2963, %v2959
        %v3952 = vpack.c.b16 %v2968, %v2964
        %v3953 = vpack.c.b16 %v2969, %v2965
        %v3954 = vpack.c.b16 %v2970, %v2966
        %v3955 = vpack.c.b16 %v2971, %v2967
        %v3956 = vpack.c.b16 %v2976, %v2972
        %v3957 = vpack.c.b16 %v2977, %v2973
        %v3958 = vpack.c.b16 %v2978, %v2974
        %v3959 = vpack.c.b16 %v2979, %v2975
        %v3960 = vpack.c.b16 %v2984, %v2980
        %v3961 = vpack.c.b16 %v2985, %v2981
        %v3962 = vpack.c.b16 %v2986, %v2982
        %v3963 = vpack.c.b16 %v2987, %v2983
        %v3964 = vpack.c.b16 %v2992, %v2988
        %v3965 = vpack.c.b16 %v2993, %v2989
        %v3966 = vpack.c.b16 %v2994, %v2990
        %v3967 = vpack.c.b16 %v2995, %v2991
        %v3968 = vpack.c.b16 %v3000, %v2996
        %v3969 = vpack.c.b16 %v3001, %v2997
        %v3970 = vpack.c.b16 %v3002, %v2998
        %v3971 = vpack.c.b16 %v3003, %v2999
        %v3972 = vpack.c.b16 %v3008, %v3004
        %v3973 = vpack.c.b16 %v3009, %v3005
        %v3974 = vpack.c.b16 %v3010, %v3006
        %v3975 = vpack.c.b16 %v3011, %v3007
        %v3976 = vpack.c.b16 %v3016, %v3012
        %v3977 = vpack.c.b16 %v3017, %v3013
        %v3978 = vpack.c.b16 %v3018, %v3014
        %v3979 = vpack.c.b16 %v3019, %v3015
        %v3980 = vpack.c.b16 %v3024, %v3020
        %v3981 = vpack.c.b16 %v3025, %v3021
        %v3982 = vpack.c.b16 %v3026, %v3022
        %v3983 = vpack.c.b16 %v3027, %v3023
        %v3984 = vpack.c.b16 %v3032, %v3028
        %v3985 = vpack.c.b16 %v3033, %v3029
        %v3986 = vpack.c.b16 %v3034, %v3030
        %v3987 = vpack.c.b16 %v3035, %v3031
        %v3988 = vpack.c.b16 %v3040, %v3036
        %v3989 = vpack.c.b16 %v3041, %v3037
        %v3990 = vpack.c.b16 %v3042, %v3038
        %v3991 = vpack.c.b16 %v3043, %v3039
        %v3992 = vpack.c.b16 %v3048, %v3044
        %v3993 = vpack.c.b16 %v3049, %v3045
        %v3994 = vpack.c.b16 %v3050, %v3046
        %v3995 = vpack.c.b16 %v3051, %v3047
        %v3996 = vpack.c.b16 %v3056, %v3052
        %v3997 = vpack.c.b16 %v3057, %v3053
        %v3998 = vpack.c.b16 %v3058, %v3054
        %v3999 = vpack.c.b16 %v3059, %v3055
        %v4000 = vpack.c.b16 %v3064, %v3060
        %v4001 = vpack.c.b16 %v3065, %v3061
        %v4002 = vpack.c.b16 %v3066, %v3062
        %v4003 = vpack.c.b16 %v3067, %v3063
        %v4004 = vpack.c.b16 %v3072, %v3068
        %v4005 = vpack.c.b16 %v3073, %v3069
        %v4006 = vpack.c.b16 %v3074, %v3070
        %v4007 = vpack.c.b16 %v3075, %v3071
        %v4008 = vpack.c.b16 %v3080, %v3076
        %v4009 = vpack.c.b16 %v3081, %v3077
        %v4010 = vpack.c.b16 %v3082, %v3078
        %v4011 = vpack.c.b16 %v3083, %v3079
        %v4012 = vpack.c.b16 %v3088, %v3084
        %v4013 = vpack.c.b16 %v3089, %v3085
        %v4014 = vpack.c.b16 %v3090, %v3086
        %v4015 = vpack.c.b16 %v3091, %v3087
        %v4016 = vpack.c.b16 %v3096, %v3092
        %v4017 = vpack.c.b16 %v3097, %v3093
        %v4018 = vpack.c.b16 %v3098, %v3094
        %v4019 = vpack.c.b16 %v3099, %v3095
        %v4020 = vpack.c.b16 %v3104, %v3100
        %v4021 = vpack.c.b16 %v3105, %v3101
        %v4022 = vpack.c.b16 %v3106, %v3102
        %v4023 = vpack.c.b16 %v3107, %v3103
        %v4024 = vpack.c.b16 %v3112, %v3108
        %v4025 = vpack.c.b16 %v3113, %v3109
        %v4026 = vpack.c.b16 %v3114, %v3110
        %v4027 = vpack.c.b16 %v3115, %v3111
        %v4028 = vpack.c.b16 %v3120, %v3116
        %v4029 = vpack.c.b16 %v3121, %v3117
        %v4030 = vpack.c.b16 %v3122, %v3118
        %v4031 = vpack.c.b16 %v3123, %v3119
        %v4032 = vpack.c.b16 %v3128, %v3124
        %v4033 = vpack.c.b16 %v3129, %v3125
        %v4034 = vpack.c.b16 %v3130, %v3126
        %v4035 = vpack.c.b16 %v3131, %v3127
        %v4036 = vpack.c.b16 %v3136, %v3132
        %v4037 = vpack.c.b16 %v3137, %v3133
        %v4038 = vpack.c.b16 %v3138, %v3134
        %v4039 = vpack.c.b16 %v3139, %v3135
        %v4040 = vpack.c.b16 %v3144, %v3140
        %v4041 = vpack.c.b16 %v3145, %v3141
        %v4042 = vpack.c.b16 %v3146, %v3142
        %v4043 = vpack.c.b16 %v3147, %v3143
        %v4044 = vpack.c.b16 %v3152, %v3148
        %v4045 = vpack.c.b16 %v3153, %v3149
        %v4046 = vpack.c.b16 %v3154, %v3150
        %v4047 = vpack.c.b16 %v3155, %v3151
        %v4048 = vpack.c.b16 %v3160, %v3156
        %v4049 = vpack.c.b16 %v3161, %v3157
        %v4050 = vpack.c.b16 %v3162, %v3158
        %v4051 = vpack.c.b16 %v3163, %v3159
        %v4052 = vpack.c.b16 %v3168, %v3164
        %v4053 = vpack.c.b16 %v3169, %v3165
        %v4054 = vpack.c.b16 %v3170, %v3166
        %v4055 = vpack.c.b16 %v3171, %v3167
        %v4056 = vpack.c.b16 %v3176, %v3172
        %v4057 = vpack.c.b16 %v3177, %v3173
        %v4058 = vpack.c.b16 %v3178, %v3174
        %v4059 = vpack.c.b16 %v3179, %v3175
        %v4060 = vpack.c.b16 %v3184, %v3180
        %v4061 = vpack.c.b16 %v3185, %v3181
        %v4062 = vpack.c.b16 %v3186, %v3182
        %v4063 = vpack.c.b16 %v3187, %v3183
        %v4064 = vpack.c.b16 %v3192, %v3188
        %v4065 = vpack.c.b16 %v3193, %v3189
        %v4066 = vpack.c.b16 %v3194, %v3190
        %v4067 = vpack.c.b16 %v3195, %v3191
        %v4068 = vpack.c.b16 %v3200, %v3196
        %v4069 = vpack.c.b16 %v3201, %v3197
        %v4070 = vpack.c.b16 %v3202, %v3198
        %v4071 = vpack.c.b16 %v3203, %v3199
        %v4072 = vpack.c.b16 %v3208, %v3204
        %v4073 = vpack.c.b16 %v3209, %v3205
        %v4074 = vpack.c.b16 %v3210, %v3206
        %v4075 = vpack.c.b16 %v3211, %v3207
        %v4076 = vpack.c.b16 %v3216, %v3212
        %v4077 = vpack.c.b16 %v3217, %v3213
        %v4078 = vpack.c.b16 %v3218, %v3214
        %v4079 = vpack.c.b16 %v3219, %v3215
        %v4080 = vpack.c.b16 %v3224, %v3220
        %v4081 = vpack.c.b16 %v3225, %v3221
        %v4082 = vpack.c.b16 %v3226, %v3222
        %v4083 = vpack.c.b16 %v3227, %v3223
        %v4084 = vpack.c.b16 %v3232, %v3228
        %v4085 = vpack.c.b16 %v3233, %v3229
        %v4086 = vpack.c.b16 %v3234, %v3230
        %v4087 = vpack.c.b16 %v3235, %v3231
        %v4088 = vpack.c.b16 %v3240, %v3236
        %v4089 = vpack.c.b16 %v3241, %v3237
        %v4090 = vpack.c.b16 %v3242, %v3238
        %v4091 = vpack.c.b16 %v3243, %v3239
        %v4092 = vpack.c.b16 %v3248, %v3244
        %v4093 = vpack.c.b16 %v3249, %v3245
        %v4094 = vpack.c.b16 %v3250, %v3246
        %v4095 = vpack.c.b16 %v3251, %v3247
        %v4096 = vpack.c.b16 %v3256, %v3252
        %v4097 = vpack.c.b16 %v3257, %v3253
        %v4098 = vpack.c.b16 %v3258, %v3254
        %v4099 = vpack.c.b16 %v3259, %v3255
        %v4100 = vpack.c.b16 %v3264, %v3260
        %v4101 = vpack.c.b16 %v3265, %v3261
        %v4102 = vpack.c.b16 %v3266, %v3262
        %v4103 = vpack.c.b16 %v3267, %v3263
        %v4104 = vpack.c.b16 %v3272, %v3268
        %v4105 = vpack.c.b16 %v3273, %v3269
        %v4106 = vpack.c.b16 %v3274, %v3270
        %v4107 = vpack.c.b16 %v3275, %v3271
        %v4108 = vpack.c.b16 %v3280, %v3276
        %v4109 = vpack.c.b16 %v3281, %v3277
        %v4110 = vpack.c.b16 %v3282, %v3278
        %v4111 = vpack.c.b16 %v3283, %v3279
        %v4112 = vpack.c.b16 %v3288, %v3284
        %v4113 = vpack.c.b16 %v3289, %v3285
        %v4114 = vpack.c.b16 %v3290, %v3286
        %v4115 = vpack.c.b16 %v3291, %v3287
        %v4116 = vpack.c.b16 %v3296, %v3292
        %v4117 = vpack.c.b16 %v3297, %v3293
        %v4118 = vpack.c.b16 %v3298, %v3294
        %v4119 = vpack.c.b16 %v3299, %v3295
        %v4120 = vpack.c.b16 %v3304, %v3300
        %v4121 = vpack.c.b16 %v3305, %v3301
        %v4122 = vpack.c.b16 %v3306, %v3302
        %v4123 = vpack.c.b16 %v3307, %v3303
        %v4124 = vpack.c.b16 %v3312, %v3308
        %v4125 = vpack.c.b16 %v3313, %v3309
        %v4126 = vpack.c.b16 %v3314, %v3310
        %v4127 = vpack.c.b16 %v3315, %v3311
        %v4128 = vpack.c.b16 %v3320, %v3316
        %v4129 = vpack.c.b16 %v3321, %v3317
        %v4130 = vpack.c.b16 %v3322, %v3318
        %v4131 = vpack.c.b16 %v3323, %v3319
        %v4132 = vpack.c.b16 %v3328, %v3324
        %v4133 = vpack.c.b16 %v3329, %v3325
        %v4134 = vpack.c.b16 %v3330, %v3326
        %v4135 = vpack.c.b16 %v3331, %v3327
        %v4136 = vpack.c.b16 %v3336, %v3332
        %v4137 = vpack.c.b16 %v3337, %v3333
        %v4138 = vpack.c.b16 %v3338, %v3334
        %v4139 = vpack.c.b16 %v3339, %v3335
        %v4140 = vpack.c.b16 %v3344, %v3340
        %v4141 = vpack.c.b16 %v3345, %v3341
        %v4142 = vpack.c.b16 %v3346, %v3342
        %v4143 = vpack.c.b16 %v3347, %v3343
        %v4144 = vpack.c.b16 %v3352, %v3348
        %v4145 = vpack.c.b16 %v3353, %v3349
        %v4146 = vpack.c.b16 %v3354, %v3350
        %v4147 = vpack.c.b16 %v3355, %v3351
        %v4148 = vpack.c.b16 %v3360, %v3356
        %v4149 = vpack.c.b16 %v3361, %v3357
        %v4150 = vpack.c.b16 %v3362, %v3358
        %v4151 = vpack.c.b16 %v3363, %v3359
        %v4152 = vpack.c.b16 %v3368, %v3364
        %v4153 = vpack.c.b16 %v3369, %v3365
        %v4154 = vpack.c.b16 %v3370, %v3366
        %v4155 = vpack.c.b16 %v3371, %v3367
        %v4156 = vpack.c.b16 %v3376, %v3372
        %v4157 = vpack.c.b16 %v3377, %v3373
        %v4158 = vpack.c.b16 %v3378, %v3374
        %v4159 = vpack.c.b16 %v3379, %v3375
        %v4160 = vpack.c.b16 %v3384, %v3380
        %v4161 = vpack.c.b16 %v3385, %v3381
        %v4162 = vpack.c.b16 %v3386, %v3382
        %v4163 = vpack.c.b16 %v3387, %v3383
        %v4164 = vpack.c.b16 %v3392, %v3388
        %v4165 = vpack.c.b16 %v3393, %v3389
        %v4166 = vpack.c.b16 %v3394, %v3390
        %v4167 = vpack.c.b16 %v3395, %v3391
        %v4168 = vpack.c.b16 %v3400, %v3396
        %v4169 = vpack.c.b16 %v3401, %v3397
        %v4170 = vpack.c.b16 %v3402, %v3398
        %v4171 = vpack.c.b16 %v3403, %v3399
        %4940 = vmatprep.subr.bf16.mxu0 %v3405
        %4941 = vmatpush1.bf16.msra.mxu0 %v3404
        %4942 = vmatprep.subr.bf16.mxu0 %v3409
        %4943 = vmatpush1.bf16.msra.mxu0 %v3408
        %4944 = vmatprep.subr.bf16.mxu0 %v3413
        %4945 = vmatpush1.bf16.msra.mxu0 %v3412
        %4946 = vmatprep.subr.bf16.mxu0 %v3417
        %4947 = vmatpush1.bf16.msra.mxu0 %v3416
        %4948 = vmatprep.subr.bf16.mxu0 %v3421
        %4949 = vmatpush1.bf16.msra.mxu0 %v3420
        %4950 = vmatprep.subr.bf16.mxu0 %v3425
        %4951 = vmatpush1.bf16.msra.mxu0 %v3424
        %4952 = vmatprep.subr.bf16.mxu0 %v3429
        %4953 = vmatpush1.bf16.msra.mxu0 %v3428
        %4954 = vmatprep.subr.bf16.mxu0 %v3433
        %4955 = vmatpush1.bf16.msra.mxu0 %v3432
        %4956 = vmatprep.subr.bf16.mxu0 %v3437
        %4957 = vmatpush1.bf16.msra.mxu0 %v3436
        %4958 = vmatprep.subr.bf16.mxu0 %v3441
        %4959 = vmatpush1.bf16.msra.mxu0 %v3440
        %4960 = vmatprep.subr.bf16.mxu0 %v3445
        %4961 = vmatpush1.bf16.msra.mxu0 %v3444
        %4962 = vmatprep.subr.bf16.mxu0 %v3449
        %4963 = vmatpush1.bf16.msra.mxu0 %v3448
        %4964 = vmatprep.subr.bf16.mxu0 %v3453
        %4965 = vmatpush1.bf16.msra.mxu0 %v3452
        %4966 = vmatprep.subr.bf16.mxu0 %v3457
        %4967 = vmatpush1.bf16.msra.mxu0 %v3456
        %4968 = vmatprep.subr.bf16.mxu0 %v3461
        %4969 = vmatpush1.bf16.msra.mxu0 %v3460
        %4970 = vmatprep.subr.bf16.mxu0 %v3465
        %4971 = vmatpush1.bf16.msra.mxu0 %v3464
        %4972 = vmatprep.mubr.bf16.mxu0 %v287
        %4973 = vmatmul.mubr.bf16.gmra.mrb[0].mxu0 %v286
        %v4974 = vpop.f32.mrb[0].mxu0
        %v4975 = vadd.f32 %v1083, %v4974
        %v4976 = vpop.f32.mrb[0].mxu0
        %v4977 = vadd.f32 %v1087, %v4976
        %v4978 = vpop.f32.mrb[0].mxu0
        %v4979 = vpop.f32.mrb[0].mxu0
        %4980 = vdwg.mxu0
        %4981 = vmatprep.subr.bf16.mxu0 %v3469
        %4982 = vmatpush1.bf16.msra.mxu0 %v3468
        %4983 = vmatprep.subr.bf16.mxu0 %v3473
        %4984 = vmatpush1.bf16.msra.mxu0 %v3472
        %4985 = vmatprep.subr.bf16.mxu0 %v3477
        %4986 = vmatpush1.bf16.msra.mxu0 %v3476
        %4987 = vmatprep.subr.bf16.mxu0 %v3481
        %4988 = vmatpush1.bf16.msra.mxu0 %v3480
        %4989 = vmatprep.subr.bf16.mxu0 %v3485
        %4990 = vmatpush1.bf16.msra.mxu0 %v3484
        %4991 = vmatprep.subr.bf16.mxu0 %v3489
        %4992 = vmatpush1.bf16.msra.mxu0 %v3488
        %4993 = vmatprep.subr.bf16.mxu0 %v3493
        %4994 = vmatpush1.bf16.msra.mxu0 %v3492
        %4995 = vmatprep.subr.bf16.mxu0 %v3497
        %4996 = vmatpush1.bf16.msra.mxu0 %v3496
        %4997 = vmatprep.subr.bf16.mxu0 %v3501
        %4998 = vmatpush1.bf16.msra.mxu0 %v3500
        %4999 = vmatprep.subr.bf16.mxu0 %v3505
        %5000 = vmatpush1.bf16.msra.mxu0 %v3504
        %5001 = vmatprep.subr.bf16.mxu0 %v3509
        %5002 = vmatpush1.bf16.msra.mxu0 %v3508
        %5003 = vmatprep.subr.bf16.mxu0 %v3513
        %5004 = vmatpush1.bf16.msra.mxu0 %v3512
        %5005 = vmatprep.subr.bf16.mxu0 %v3517
        %5006 = vmatpush1.bf16.msra.mxu0 %v3516
        %5007 = vmatprep.subr.bf16.mxu0 %v3521
        %5008 = vmatpush1.bf16.msra.mxu0 %v3520
        %5009 = vmatprep.subr.bf16.mxu0 %v3525
        %5010 = vmatpush1.bf16.msra.mxu0 %v3524
        %5011 = vmatprep.subr.bf16.mxu0 %v3529
        %5012 = vmatpush1.bf16.msra.mxu0 %v3528
        %5013 = vmatprep.mubr.bf16.mxu0 %v289
        %5014 = vmatmul.mubr.bf16.gmra.mrb[0].mxu0 %v288
        %v5015 = vpop.f32.mrb[0].mxu0
        %v5016 = vadd.f32 %v4975, %v5015
        %v5017 = vpop.f32.mrb[0].mxu0
        %v5018 = vadd.f32 %v4977, %v5017
        %v5019 = vpop.f32.mrb[0].mxu0
        %v5020 = vpop.f32.mrb[0].mxu0
        %5021 = vdwg.mxu0
        %5022 = vmatprep.subr.bf16.mxu0 %v3533
        %5023 = vmatpush1.bf16.msra.mxu0 %v3532
        %5024 = vmatprep.subr.bf16.mxu0 %v3537
        %5025 = vmatpush1.bf16.msra.mxu0 %v3536
        %5026 = vmatprep.subr.bf16.mxu0 %v3541
        %5027 = vmatpush1.bf16.msra.mxu0 %v3540
        %5028 = vmatprep.subr.bf16.mxu0 %v3545
        %5029 = vmatpush1.bf16.msra.mxu0 %v3544
        %5030 = vmatprep.subr.bf16.mxu0 %v3549
        %5031 = vmatpush1.bf16.msra.mxu0 %v3548
        %5032 = vmatprep.subr.bf16.mxu0 %v3553
        %5033 = vmatpush1.bf16.msra.mxu0 %v3552
        %5034 = vmatprep.subr.bf16.mxu0 %v3557
        %5035 = vmatpush1.bf16.msra.mxu0 %v3556
        %5036 = vmatprep.subr.bf16.mxu0 %v3561
        %5037 = vmatpush1.bf16.msra.mxu0 %v3560
        %5038 = vmatprep.subr.bf16.mxu0 %v3565
        %5039 = vmatpush1.bf16.msra.mxu0 %v3564
        %5040 = vmatprep.subr.bf16.mxu0 %v3569
        %5041 = vmatpush1.bf16.msra.mxu0 %v3568
        %5042 = vmatprep.subr.bf16.mxu0 %v3573
        %5043 = vmatpush1.bf16.msra.mxu0 %v3572
        %5044 = vmatprep.subr.bf16.mxu0 %v3577
        %5045 = vmatpush1.bf16.msra.mxu0 %v3576
        %5046 = vmatprep.subr.bf16.mxu0 %v3581
        %5047 = vmatpush1.bf16.msra.mxu0 %v3580
        %5048 = vmatprep.subr.bf16.mxu0 %v3585
        %5049 = vmatpush1.bf16.msra.mxu0 %v3584
        %5050 = vmatprep.subr.bf16.mxu0 %v3589
        %5051 = vmatpush1.bf16.msra.mxu0 %v3588
        %5052 = vmatprep.subr.bf16.mxu0 %v3593
        %5053 = vmatpush1.bf16.msra.mxu0 %v3592
        %5054 = vmatprep.mubr.bf16.mxu0 %v291
        %5055 = vmatmul.mubr.bf16.gmra.mrb[0].mxu0 %v290
        %v5056 = vpop.f32.mrb[0].mxu0
        %v5057 = vadd.f32 %v5016, %v5056
        %v5058 = vpop.f32.mrb[0].mxu0
        %v5059 = vadd.f32 %v5018, %v5058
        %v5060 = vpop.f32.mrb[0].mxu0
        %v5061 = vpop.f32.mrb[0].mxu0
        %5062 = vdwg.mxu0
        %5063 = vmatprep.subr.bf16.mxu0 %v3597
        %5064 = vmatpush1.bf16.msra.mxu0 %v3596
        %5065 = vmatprep.subr.bf16.mxu0 %v3601
        %5066 = vmatpush1.bf16.msra.mxu0 %v3600
        %5067 = vmatprep.subr.bf16.mxu0 %v3605
        %5068 = vmatpush1.bf16.msra.mxu0 %v3604
        %5069 = vmatprep.subr.bf16.mxu0 %v3609
        %5070 = vmatpush1.bf16.msra.mxu0 %v3608
        %5071 = vmatprep.subr.bf16.mxu0 %v3613
        %5072 = vmatpush1.bf16.msra.mxu0 %v3612
        %5073 = vmatprep.subr.bf16.mxu0 %v3617
        %5074 = vmatpush1.bf16.msra.mxu0 %v3616
        %5075 = vmatprep.subr.bf16.mxu0 %v3621
        %5076 = vmatpush1.bf16.msra.mxu0 %v3620
        %5077 = vmatprep.subr.bf16.mxu0 %v3625
        %5078 = vmatpush1.bf16.msra.mxu0 %v3624
        %5079 = vmatprep.subr.bf16.mxu0 %v3629
        %5080 = vmatpush1.bf16.msra.mxu0 %v3628
        %5081 = vmatprep.subr.bf16.mxu0 %v3633
        %5082 = vmatpush1.bf16.msra.mxu0 %v3632
        %5083 = vmatprep.subr.bf16.mxu0 %v3637
        %5084 = vmatpush1.bf16.msra.mxu0 %v3636
        %5085 = vmatprep.subr.bf16.mxu0 %v3641
        %5086 = vmatpush1.bf16.msra.mxu0 %v3640
        %5087 = vmatprep.subr.bf16.mxu0 %v3645
        %5088 = vmatpush1.bf16.msra.mxu0 %v3644
        %5089 = vmatprep.subr.bf16.mxu0 %v3649
        %5090 = vmatpush1.bf16.msra.mxu0 %v3648
        %5091 = vmatprep.subr.bf16.mxu0 %v3653
        %5092 = vmatpush1.bf16.msra.mxu0 %v3652
        %5093 = vmatprep.subr.bf16.mxu0 %v3657
        %5094 = vmatpush1.bf16.msra.mxu0 %v3656
        %5095 = vmatprep.mubr.bf16.mxu0 %v293
        %5096 = vmatmul.mubr.bf16.gmra.mrb[0].mxu0 %v292
        %v5097 = vpop.f32.mrb[0].mxu0
        %v5098 = vadd.f32 %v5057, %v5097
        %v5099 = vpop.f32.mrb[0].mxu0
        %v5100 = vadd.f32 %v5059, %v5099
        %v5101 = vpop.f32.mrb[0].mxu0
        %v5102 = vpop.f32.mrb[0].mxu0
        %5103 = vdwg.mxu0
        %5104 = vmatprep.subr.bf16.mxu0 %v3661
        %5105 = vmatpush1.bf16.msra.mxu0 %v3660
        %5106 = vmatprep.subr.bf16.mxu0 %v3665
        %5107 = vmatpush1.bf16.msra.mxu0 %v3664
        %5108 = vmatprep.subr.bf16.mxu0 %v3669
        %5109 = vmatpush1.bf16.msra.mxu0 %v3668
        %5110 = vmatprep.subr.bf16.mxu0 %v3673
        %5111 = vmatpush1.bf16.msra.mxu0 %v3672
        %5112 = vmatprep.subr.bf16.mxu0 %v3677
        %5113 = vmatpush1.bf16.msra.mxu0 %v3676
        %5114 = vmatprep.subr.bf16.mxu0 %v3681
        %5115 = vmatpush1.bf16.msra.mxu0 %v3680
        %5116 = vmatprep.subr.bf16.mxu0 %v3685
        %5117 = vmatpush1.bf16.msra.mxu0 %v3684
        %5118 = vmatprep.subr.bf16.mxu0 %v3689
        %5119 = vmatpush1.bf16.msra.mxu0 %v3688
        %5120 = vmatprep.subr.bf16.mxu0 %v3693
        %5121 = vmatpush1.bf16.msra.mxu0 %v3692
        %5122 = vmatprep.subr.bf16.mxu0 %v3697
        %5123 = vmatpush1.bf16.msra.mxu0 %v3696
        %5124 = vmatprep.subr.bf16.mxu0 %v3701
        %5125 = vmatpush1.bf16.msra.mxu0 %v3700
        %5126 = vmatprep.subr.bf16.mxu0 %v3705
        %5127 = vmatpush1.bf16.msra.mxu0 %v3704
        %5128 = vmatprep.subr.bf16.mxu0 %v3709
        %5129 = vmatpush1.bf16.msra.mxu0 %v3708
        %5130 = vmatprep.subr.bf16.mxu0 %v3713
        %5131 = vmatpush1.bf16.msra.mxu0 %v3712
        %5132 = vmatprep.subr.bf16.mxu0 %v3717
        %5133 = vmatpush1.bf16.msra.mxu0 %v3716
        %5134 = vmatprep.subr.bf16.mxu0 %v3721
        %5135 = vmatpush1.bf16.msra.mxu0 %v3720
        %5136 = vmatprep.mubr.bf16.mxu0 %v295
        %5137 = vmatmul.mubr.bf16.gmra.mrb[0].mxu0 %v294
        %v5138 = vpop.f32.mrb[0].mxu0
        %v5139 = vadd.f32 %v5098, %v5138
        %v5140 = vpop.f32.mrb[0].mxu0
        %v5141 = vadd.f32 %v5100, %v5140
        %v5142 = vpop.f32.mrb[0].mxu0
        %v5143 = vpop.f32.mrb[0].mxu0
        %5144 = vdwg.mxu0
        %5145 = vmatprep.subr.bf16.mxu0 %v3725
        %5146 = vmatpush1.bf16.msra.mxu0 %v3724
        %5147 = vmatprep.subr.bf16.mxu0 %v3729
        %5148 = vmatpush1.bf16.msra.mxu0 %v3728
        %5149 = vmatprep.subr.bf16.mxu0 %v3733
        %5150 = vmatpush1.bf16.msra.mxu0 %v3732
        %5151 = vmatprep.subr.bf16.mxu0 %v3737
        %5152 = vmatpush1.bf16.msra.mxu0 %v3736
        %5153 = vmatprep.subr.bf16.mxu0 %v3741
        %5154 = vmatpush1.bf16.msra.mxu0 %v3740
        %5155 = vmatprep.subr.bf16.mxu0 %v3745
        %5156 = vmatpush1.bf16.msra.mxu0 %v3744
        %5157 = vmatprep.subr.bf16.mxu0 %v3749
        %5158 = vmatpush1.bf16.msra.mxu0 %v3748
        %5159 = vmatprep.subr.bf16.mxu0 %v3753
        %5160 = vmatpush1.bf16.msra.mxu0 %v3752
        %5161 = vmatprep.subr.bf16.mxu0 %v3757
        %5162 = vmatpush1.bf16.msra.mxu0 %v3756
        %5163 = vmatprep.subr.bf16.mxu0 %v3761
        %5164 = vmatpush1.bf16.msra.mxu0 %v3760
        %5165 = vmatprep.subr.bf16.mxu0 %v3765
        %5166 = vmatpush1.bf16.msra.mxu0 %v3764
        %5167 = vmatprep.subr.bf16.mxu0 %v3769
        %5168 = vmatpush1.bf16.msra.mxu0 %v3768
        %5169 = vmatprep.subr.bf16.mxu0 %v3773
        %5170 = vmatpush1.bf16.msra.mxu0 %v3772
        %5171 = vmatprep.subr.bf16.mxu0 %v3777
        %5172 = vmatpush1.bf16.msra.mxu0 %v3776
        %5173 = vmatprep.subr.bf16.mxu0 %v3781
        %5174 = vmatpush1.bf16.msra.mxu0 %v3780
        %5175 = vmatprep.subr.bf16.mxu0 %v3785
        %5176 = vmatpush1.bf16.msra.mxu0 %v3784
        %5177 = vmatprep.mubr.bf16.mxu0 %v297
        %5178 = vmatmul.mubr.bf16.gmra.mrb[0].mxu0 %v296
        %v5179 = vpop.f32.mrb[0].mxu0
        %v5180 = vadd.f32 %v5139, %v5179
        %v5181 = vpop.f32.mrb[0].mxu0
        %v5182 = vadd.f32 %v5141, %v5181
        %v5183 = vpop.f32.mrb[0].mxu0
        %v5184 = vpop.f32.mrb[0].mxu0
        %5185 = vdwg.mxu0
        %5186 = vmatprep.subr.bf16.mxu0 %v3789
        %5187 = vmatpush1.bf16.msra.mxu0 %v3788
        %5188 = vmatprep.subr.bf16.mxu0 %v3793
        %5189 = vmatpush1.bf16.msra.mxu0 %v3792
        %5190 = vmatprep.subr.bf16.mxu0 %v3797
        %5191 = vmatpush1.bf16.msra.mxu0 %v3796
        %5192 = vmatprep.subr.bf16.mxu0 %v3801
        %5193 = vmatpush1.bf16.msra.mxu0 %v3800
        %5194 = vmatprep.subr.bf16.mxu0 %v3805
        %5195 = vmatpush1.bf16.msra.mxu0 %v3804
        %5196 = vmatprep.subr.bf16.mxu0 %v3809
        %5197 = vmatpush1.bf16.msra.mxu0 %v3808
        %5198 = vmatprep.subr.bf16.mxu0 %v3813
        %5199 = vmatpush1.bf16.msra.mxu0 %v3812
        %5200 = vmatprep.subr.bf16.mxu0 %v3817
        %5201 = vmatpush1.bf16.msra.mxu0 %v3816
        %5202 = vmatprep.subr.bf16.mxu0 %v3821
        %5203 = vmatpush1.bf16.msra.mxu0 %v3820
        %5204 = vmatprep.subr.bf16.mxu0 %v3825
        %5205 = vmatpush1.bf16.msra.mxu0 %v3824
        %5206 = vmatprep.subr.bf16.mxu0 %v3829
        %5207 = vmatpush1.bf16.msra.mxu0 %v3828
        %5208 = vmatprep.subr.bf16.mxu0 %v3833
        %5209 = vmatpush1.bf16.msra.mxu0 %v3832
        %5210 = vmatprep.subr.bf16.mxu0 %v3837
        %5211 = vmatpush1.bf16.msra.mxu0 %v3836
        %5212 = vmatprep.subr.bf16.mxu0 %v3841
        %5213 = vmatpush1.bf16.msra.mxu0 %v3840
        %5214 = vmatprep.subr.bf16.mxu0 %v3845
        %5215 = vmatpush1.bf16.msra.mxu0 %v3844
        %5216 = vmatprep.subr.bf16.mxu0 %v3849
        %5217 = vmatpush1.bf16.msra.mxu0 %v3848
        %5218 = vmatprep.mubr.bf16.mxu0 %v299
        %5219 = vmatmul.mubr.bf16.gmra.mrb[0].mxu0 %v298
        %v5220 = vpop.f32.mrb[0].mxu0
        %v5221 = vadd.f32 %v5180, %v5220
        %v5222 = vpop.f32.mrb[0].mxu0
        %v5223 = vadd.f32 %v5182, %v5222
        %v5224 = vpop.f32.mrb[0].mxu0
        %v5225 = vpop.f32.mrb[0].mxu0
        %5226 = vdwg.mxu0
        %5227 = vmatprep.subr.bf16.mxu0 %v3853
        %5228 = vmatpush1.bf16.msra.mxu0 %v3852
        %5229 = vmatprep.subr.bf16.mxu0 %v3857
        %5230 = vmatpush1.bf16.msra.mxu0 %v3856
        %5231 = vmatprep.subr.bf16.mxu0 %v3861
        %5232 = vmatpush1.bf16.msra.mxu0 %v3860
        %5233 = vmatprep.subr.bf16.mxu0 %v3865
        %5234 = vmatpush1.bf16.msra.mxu0 %v3864
        %5235 = vmatprep.subr.bf16.mxu0 %v3869
        %5236 = vmatpush1.bf16.msra.mxu0 %v3868
        %5237 = vmatprep.subr.bf16.mxu0 %v3873
        %5238 = vmatpush1.bf16.msra.mxu0 %v3872
        %5239 = vmatprep.subr.bf16.mxu0 %v3877
        %5240 = vmatpush1.bf16.msra.mxu0 %v3876
        %5241 = vmatprep.subr.bf16.mxu0 %v3881
        %5242 = vmatpush1.bf16.msra.mxu0 %v3880
        %5243 = vmatprep.subr.bf16.mxu0 %v3885
        %5244 = vmatpush1.bf16.msra.mxu0 %v3884
        %5245 = vmatprep.subr.bf16.mxu0 %v3889
        %5246 = vmatpush1.bf16.msra.mxu0 %v3888
        %5247 = vmatprep.subr.bf16.mxu0 %v3893
        %5248 = vmatpush1.bf16.msra.mxu0 %v3892
        %5249 = vmatprep.subr.bf16.mxu0 %v3897
        %5250 = vmatpush1.bf16.msra.mxu0 %v3896
        %5251 = vmatprep.subr.bf16.mxu0 %v3901
        %5252 = vmatpush1.bf16.msra.mxu0 %v3900
        %5253 = vmatprep.subr.bf16.mxu0 %v3905
        %5254 = vmatpush1.bf16.msra.mxu0 %v3904
        %5255 = vmatprep.subr.bf16.mxu0 %v3909
        %5256 = vmatpush1.bf16.msra.mxu0 %v3908
        %5257 = vmatprep.subr.bf16.mxu0 %v3913
        %5258 = vmatpush1.bf16.msra.mxu0 %v3912
        %5259 = vmatprep.mubr.bf16.mxu0 %v301
        %5260 = vmatmul.mubr.bf16.gmra.mrb[0].mxu0 %v300
        %v5261 = vpop.f32.mrb[0].mxu0
        %v5262 = vadd.f32 %v5221, %v5261
        %v5263 = vpop.f32.mrb[0].mxu0
        %v5264 = vadd.f32 %v5223, %v5263
        %v5265 = vpop.f32.mrb[0].mxu0
        %v5266 = vpop.f32.mrb[0].mxu0
        %5267 = vdwg.mxu0
        %5268 = vmatprep.subr.bf16.mxu0 %v3917
        %5269 = vmatpush1.bf16.msra.mxu0 %v3916
        %5270 = vmatprep.subr.bf16.mxu0 %v3921
        %5271 = vmatpush1.bf16.msra.mxu0 %v3920
        %5272 = vmatprep.subr.bf16.mxu0 %v3925
        %5273 = vmatpush1.bf16.msra.mxu0 %v3924
        %5274 = vmatprep.subr.bf16.mxu0 %v3929
        %5275 = vmatpush1.bf16.msra.mxu0 %v3928
        %5276 = vmatprep.subr.bf16.mxu0 %v3933
        %5277 = vmatpush1.bf16.msra.mxu0 %v3932
        %5278 = vmatprep.subr.bf16.mxu0 %v3937
        %5279 = vmatpush1.bf16.msra.mxu0 %v3936
        %5280 = vmatprep.subr.bf16.mxu0 %v3941
        %5281 = vmatpush1.bf16.msra.mxu0 %v3940
        %5282 = vmatprep.subr.bf16.mxu0 %v3945
        %5283 = vmatpush1.bf16.msra.mxu0 %v3944
        %5284 = vmatprep.subr.bf16.mxu0 %v3949
        %5285 = vmatpush1.bf16.msra.mxu0 %v3948
        %5286 = vmatprep.subr.bf16.mxu0 %v3953
        %5287 = vmatpush1.bf16.msra.mxu0 %v3952
        %5288 = vmatprep.subr.bf16.mxu0 %v3957
        %5289 = vmatpush1.bf16.msra.mxu0 %v3956
        %5290 = vmatprep.subr.bf16.mxu0 %v3961
        %5291 = vmatpush1.bf16.msra.mxu0 %v3960
        %5292 = vmatprep.subr.bf16.mxu0 %v3965
        %5293 = vmatpush1.bf16.msra.mxu0 %v3964
        %5294 = vmatprep.subr.bf16.mxu0 %v3969
        %5295 = vmatpush1.bf16.msra.mxu0 %v3968
        %5296 = vmatprep.subr.bf16.mxu0 %v3973
        %5297 = vmatpush1.bf16.msra.mxu0 %v3972
        %5298 = vmatprep.subr.bf16.mxu0 %v3977
        %5299 = vmatpush1.bf16.msra.mxu0 %v3976
        %5300 = vmatprep.mubr.bf16.mxu0 %v303
        %5301 = vmatmul.mubr.bf16.gmra.mrb[0].mxu0 %v302
        %v5302 = vpop.f32.mrb[0].mxu0
        %v5303 = vadd.f32 %v5262, %v5302
        %v5304 = vpop.f32.mrb[0].mxu0
        %v5305 = vadd.f32 %v5264, %v5304
        %v5306 = vpop.f32.mrb[0].mxu0
        %v5307 = vpop.f32.mrb[0].mxu0
        %5308 = vdwg.mxu0
        %5309 = vmatprep.subr.bf16.mxu0 %v3981
        %5310 = vmatpush1.bf16.msra.mxu0 %v3980
        %5311 = vmatprep.subr.bf16.mxu0 %v3985
        %5312 = vmatpush1.bf16.msra.mxu0 %v3984
        %5313 = vmatprep.subr.bf16.mxu0 %v3989
        %5314 = vmatpush1.bf16.msra.mxu0 %v3988
        %5315 = vmatprep.subr.bf16.mxu0 %v3993
        %5316 = vmatpush1.bf16.msra.mxu0 %v3992
        %5317 = vmatprep.subr.bf16.mxu0 %v3997
        %5318 = vmatpush1.bf16.msra.mxu0 %v3996
        %5319 = vmatprep.subr.bf16.mxu0 %v4001
        %5320 = vmatpush1.bf16.msra.mxu0 %v4000
        %5321 = vmatprep.subr.bf16.mxu0 %v4005
        %5322 = vmatpush1.bf16.msra.mxu0 %v4004
        %5323 = vmatprep.subr.bf16.mxu0 %v4009
        %5324 = vmatpush1.bf16.msra.mxu0 %v4008
        %5325 = vmatprep.subr.bf16.mxu0 %v4013
        %5326 = vmatpush1.bf16.msra.mxu0 %v4012
        %5327 = vmatprep.subr.bf16.mxu0 %v4017
        %5328 = vmatpush1.bf16.msra.mxu0 %v4016
        %5329 = vmatprep.subr.bf16.mxu0 %v4021
        %5330 = vmatpush1.bf16.msra.mxu0 %v4020
        %5331 = vmatprep.subr.bf16.mxu0 %v4025
        %5332 = vmatpush1.bf16.msra.mxu0 %v4024
        %5333 = vmatprep.subr.bf16.mxu0 %v4029
        %5334 = vmatpush1.bf16.msra.mxu0 %v4028
        %5335 = vmatprep.subr.bf16.mxu0 %v4033
        %5336 = vmatpush1.bf16.msra.mxu0 %v4032
        %5337 = vmatprep.subr.bf16.mxu0 %v4037
        %5338 = vmatpush1.bf16.msra.mxu0 %v4036
        %5339 = vmatprep.subr.bf16.mxu0 %v4041
        %5340 = vmatpush1.bf16.msra.mxu0 %v4040
        %5341 = vmatprep.mubr.bf16.mxu0 %v305
        %5342 = vmatmul.mubr.bf16.gmra.mrb[0].mxu0 %v304
        %v5343 = vpop.f32.mrb[0].mxu0
        %v5344 = vadd.f32 %v5303, %v5343
        %v5345 = vpop.f32.mrb[0].mxu0
        %v5346 = vadd.f32 %v5305, %v5345
        %v5347 = vpop.f32.mrb[0].mxu0
        %v5348 = vpop.f32.mrb[0].mxu0
        %5349 = vdwg.mxu0
        %5350 = vmatprep.subr.bf16.mxu0 %v4045
        %5351 = vmatpush1.bf16.msra.mxu0 %v4044
        %5352 = vmatprep.subr.bf16.mxu0 %v4049
        %5353 = vmatpush1.bf16.msra.mxu0 %v4048
        %5354 = vmatprep.subr.bf16.mxu0 %v4053
        %5355 = vmatpush1.bf16.msra.mxu0 %v4052
        %5356 = vmatprep.subr.bf16.mxu0 %v4057
        %5357 = vmatpush1.bf16.msra.mxu0 %v4056
        %5358 = vmatprep.subr.bf16.mxu0 %v4061
        %5359 = vmatpush1.bf16.msra.mxu0 %v4060
        %5360 = vmatprep.subr.bf16.mxu0 %v4065
        %5361 = vmatpush1.bf16.msra.mxu0 %v4064
        %5362 = vmatprep.subr.bf16.mxu0 %v4069
        %5363 = vmatpush1.bf16.msra.mxu0 %v4068
        %5364 = vmatprep.subr.bf16.mxu0 %v4073
        %5365 = vmatpush1.bf16.msra.mxu0 %v4072
        %5366 = vmatprep.subr.bf16.mxu0 %v4077
        %5367 = vmatpush1.bf16.msra.mxu0 %v4076
        %5368 = vmatprep.subr.bf16.mxu0 %v4081
        %5369 = vmatpush1.bf16.msra.mxu0 %v4080
        %5370 = vmatprep.subr.bf16.mxu0 %v4085
        %5371 = vmatpush1.bf16.msra.mxu0 %v4084
        %5372 = vmatprep.subr.bf16.mxu0 %v4089
        %5373 = vmatpush1.bf16.msra.mxu0 %v4088
        %5374 = vmatprep.subr.bf16.mxu0 %v4093
        %5375 = vmatpush1.bf16.msra.mxu0 %v4092
        %5376 = vmatprep.subr.bf16.mxu0 %v4097
        %5377 = vmatpush1.bf16.msra.mxu0 %v4096
        %5378 = vmatprep.subr.bf16.mxu0 %v4101
        %5379 = vmatpush1.bf16.msra.mxu0 %v4100
        %5380 = vmatprep.subr.bf16.mxu0 %v4105
        %5381 = vmatpush1.bf16.msra.mxu0 %v4104
        %5382 = vmatprep.mubr.bf16.mxu0 %v307
        %5383 = vmatmul.mubr.bf16.gmra.mrb[0].mxu0 %v306
        %v5384 = vpop.f32.mrb[0].mxu0
        %v5385 = vadd.f32 %v5344, %v5384
        %v5386 = vpop.f32.mrb[0].mxu0
        %v5387 = vadd.f32 %v5346, %v5386
        %v5388 = vpop.f32.mrb[0].mxu0
        %v5389 = vpop.f32.mrb[0].mxu0
        %5390 = vdwg.mxu0
        %5391 = vmatprep.subr.bf16.mxu0 %v4109
        %5392 = vmatpush1.bf16.msra.mxu0 %v4108
        %5393 = vmatprep.subr.bf16.mxu0 %v4113
        %5394 = vmatpush1.bf16.msra.mxu0 %v4112
        %5395 = vmatprep.subr.bf16.mxu0 %v4117
        %5396 = vmatpush1.bf16.msra.mxu0 %v4116
        %5397 = vmatprep.subr.bf16.mxu0 %v4121
        %5398 = vmatpush1.bf16.msra.mxu0 %v4120
        %5399 = vmatprep.subr.bf16.mxu0 %v4125
        %5400 = vmatpush1.bf16.msra.mxu0 %v4124
        %5401 = vmatprep.subr.bf16.mxu0 %v4129
        %5402 = vmatpush1.bf16.msra.mxu0 %v4128
        %5403 = vmatprep.subr.bf16.mxu0 %v4133
        %5404 = vmatpush1.bf16.msra.mxu0 %v4132
        %5405 = vmatprep.subr.bf16.mxu0 %v4137
        %5406 = vmatpush1.bf16.msra.mxu0 %v4136
        %5407 = vmatprep.subr.bf16.mxu0 %v4141
        %5408 = vmatpush1.bf16.msra.mxu0 %v4140
        %5409 = vmatprep.subr.bf16.mxu0 %v4145
        %5410 = vmatpush1.bf16.msra.mxu0 %v4144
        %5411 = vmatprep.subr.bf16.mxu0 %v4149
        %5412 = vmatpush1.bf16.msra.mxu0 %v4148
        %5413 = vmatprep.subr.bf16.mxu0 %v4153
        %5414 = vmatpush1.bf16.msra.mxu0 %v4152
        %5415 = vmatprep.subr.bf16.mxu0 %v4157
        %5416 = vmatpush1.bf16.msra.mxu0 %v4156
        %5417 = vmatprep.subr.bf16.mxu0 %v4161
        %5418 = vmatpush1.bf16.msra.mxu0 %v4160
        %5419 = vmatprep.subr.bf16.mxu0 %v4165
        %5420 = vmatpush1.bf16.msra.mxu0 %v4164
        %5421 = vmatprep.subr.bf16.mxu0 %v4169
        %5422 = vmatpush1.bf16.msra.mxu0 %v4168
        %5423 = vmatprep.mubr.bf16.mxu0 %v309
        %5424 = vmatmul.mubr.bf16.gmra.mrb[0].mxu0 %v308
        %v5425 = vpop.f32.mrb[0].mxu0
        %v5426 = vadd.f32 %v5385, %v5425
        %v5427 = vpop.f32.mrb[0].mxu0
        %v5428 = vadd.f32 %v5387, %v5427
        %v5429 = vpop.f32.mrb[0].mxu0
        %v5430 = vpop.f32.mrb[0].mxu0
        %5431 = vdwg.mxu0
        %5432 = vmatprep.subr.bf16.mxu0 %v3407
        %5433 = vmatpush1.bf16.msra.mxu0 %v3406
        %5434 = vmatprep.subr.bf16.mxu0 %v3411
        %5435 = vmatpush1.bf16.msra.mxu0 %v3410
        %5436 = vmatprep.subr.bf16.mxu0 %v3415
        %5437 = vmatpush1.bf16.msra.mxu0 %v3414
        %5438 = vmatprep.subr.bf16.mxu0 %v3419
        %5439 = vmatpush1.bf16.msra.mxu0 %v3418
        %5440 = vmatprep.subr.bf16.mxu0 %v3423
        %5441 = vmatpush1.bf16.msra.mxu0 %v3422
        %5442 = vmatprep.subr.bf16.mxu0 %v3427
        %5443 = vmatpush1.bf16.msra.mxu0 %v3426
        %5444 = vmatprep.subr.bf16.mxu0 %v3431
        %5445 = vmatpush1.bf16.msra.mxu0 %v3430
        %5446 = vmatprep.subr.bf16.mxu0 %v3435
        %5447 = vmatpush1.bf16.msra.mxu0 %v3434
        %5448 = vmatprep.subr.bf16.mxu0 %v3439
        %5449 = vmatpush1.bf16.msra.mxu0 %v3438
        %5450 = vmatprep.subr.bf16.mxu0 %v3443
        %5451 = vmatpush1.bf16.msra.mxu0 %v3442
        %5452 = vmatprep.subr.bf16.mxu0 %v3447
        %5453 = vmatpush1.bf16.msra.mxu0 %v3446
        %5454 = vmatprep.subr.bf16.mxu0 %v3451
        %5455 = vmatpush1.bf16.msra.mxu0 %v3450
        %5456 = vmatprep.subr.bf16.mxu0 %v3455
        %5457 = vmatpush1.bf16.msra.mxu0 %v3454
        %5458 = vmatprep.subr.bf16.mxu0 %v3459
        %5459 = vmatpush1.bf16.msra.mxu0 %v3458
        %5460 = vmatprep.subr.bf16.mxu0 %v3463
        %5461 = vmatpush1.bf16.msra.mxu0 %v3462
        %5462 = vmatprep.subr.bf16.mxu0 %v3467
        %5463 = vmatpush1.bf16.msra.mxu0 %v3466
        %5464 = vmatprep.mubr.bf16.mxu0 %v287
        %5465 = vmatmul.mubr.bf16.gmra.mrb[0].mxu0 %v286
        %v5466 = vpop.f32.mrb[0].mxu0
        %v5467 = vadd.f32 %v1091, %v5466
        %v5468 = vpop.f32.mrb[0].mxu0
        %v5469 = vadd.f32 %v1095, %v5468
        %v5470 = vpop.f32.mrb[0].mxu0
        %v5471 = vpop.f32.mrb[0].mxu0
        %5472 = vdwg.mxu0
        %5473 = vmatprep.subr.bf16.mxu0 %v3471
        %5474 = vmatpush1.bf16.msra.mxu0 %v3470
        %5475 = vmatprep.subr.bf16.mxu0 %v3475
        %5476 = vmatpush1.bf16.msra.mxu0 %v3474
        %5477 = vmatprep.subr.bf16.mxu0 %v3479
        %5478 = vmatpush1.bf16.msra.mxu0 %v3478
        %5479 = vmatprep.subr.bf16.mxu0 %v3483
        %5480 = vmatpush1.bf16.msra.mxu0 %v3482
        %5481 = vmatprep.subr.bf16.mxu0 %v3487
        %5482 = vmatpush1.bf16.msra.mxu0 %v3486
        %5483 = vmatprep.subr.bf16.mxu0 %v3491
        %5484 = vmatpush1.bf16.msra.mxu0 %v3490
        %5485 = vmatprep.subr.bf16.mxu0 %v3495
        %5486 = vmatpush1.bf16.msra.mxu0 %v3494
        %5487 = vmatprep.subr.bf16.mxu0 %v3499
        %5488 = vmatpush1.bf16.msra.mxu0 %v3498
        %5489 = vmatprep.subr.bf16.mxu0 %v3503
        %5490 = vmatpush1.bf16.msra.mxu0 %v3502
        %5491 = vmatprep.subr.bf16.mxu0 %v3507
        %5492 = vmatpush1.bf16.msra.mxu0 %v3506
        %5493 = vmatprep.subr.bf16.mxu0 %v3511
        %5494 = vmatpush1.bf16.msra.mxu0 %v3510
        %5495 = vmatprep.subr.bf16.mxu0 %v3515
        %5496 = vmatpush1.bf16.msra.mxu0 %v3514
        %5497 = vmatprep.subr.bf16.mxu0 %v3519
        %5498 = vmatpush1.bf16.msra.mxu0 %v3518
        %5499 = vmatprep.subr.bf16.mxu0 %v3523
        %5500 = vmatpush1.bf16.msra.mxu0 %v3522
        %5501 = vmatprep.subr.bf16.mxu0 %v3527
        %5502 = vmatpush1.bf16.msra.mxu0 %v3526
        %5503 = vmatprep.subr.bf16.mxu0 %v3531
        %5504 = vmatpush1.bf16.msra.mxu0 %v3530
        %5505 = vmatprep.mubr.bf16.mxu0 %v289
        %5506 = vmatmul.mubr.bf16.gmra.mrb[0].mxu0 %v288
        %v5507 = vpop.f32.mrb[0].mxu0
        %v5508 = vadd.f32 %v5467, %v5507
        %v5509 = vpop.f32.mrb[0].mxu0
        %v5510 = vadd.f32 %v5469, %v5509
        %v5511 = vpop.f32.mrb[0].mxu0
        %v5512 = vpop.f32.mrb[0].mxu0
        %5513 = vdwg.mxu0
        %5514 = vmatprep.subr.bf16.mxu0 %v3535
        %5515 = vmatpush1.bf16.msra.mxu0 %v3534
        %5516 = vmatprep.subr.bf16.mxu0 %v3539
        %5517 = vmatpush1.bf16.msra.mxu0 %v3538
        %5518 = vmatprep.subr.bf16.mxu0 %v3543
        %5519 = vmatpush1.bf16.msra.mxu0 %v3542
        %5520 = vmatprep.subr.bf16.mxu0 %v3547
        %5521 = vmatpush1.bf16.msra.mxu0 %v3546
        %5522 = vmatprep.subr.bf16.mxu0 %v3551
        %5523 = vmatpush1.bf16.msra.mxu0 %v3550
        %5524 = vmatprep.subr.bf16.mxu0 %v3555
        %5525 = vmatpush1.bf16.msra.mxu0 %v3554
        %5526 = vmatprep.subr.bf16.mxu0 %v3559
        %5527 = vmatpush1.bf16.msra.mxu0 %v3558
        %5528 = vmatprep.subr.bf16.mxu0 %v3563
        %5529 = vmatpush1.bf16.msra.mxu0 %v3562
        %5530 = vmatprep.subr.bf16.mxu0 %v3567
        %5531 = vmatpush1.bf16.msra.mxu0 %v3566
        %5532 = vmatprep.subr.bf16.mxu0 %v3571
        %5533 = vmatpush1.bf16.msra.mxu0 %v3570
        %5534 = vmatprep.subr.bf16.mxu0 %v3575
        %5535 = vmatpush1.bf16.msra.mxu0 %v3574
        %5536 = vmatprep.subr.bf16.mxu0 %v3579
        %5537 = vmatpush1.bf16.msra.mxu0 %v3578
        %5538 = vmatprep.subr.bf16.mxu0 %v3583
        %5539 = vmatpush1.bf16.msra.mxu0 %v3582
        %5540 = vmatprep.subr.bf16.mxu0 %v3587
        %5541 = vmatpush1.bf16.msra.mxu0 %v3586
        %5542 = vmatprep.subr.bf16.mxu0 %v3591
        %5543 = vmatpush1.bf16.msra.mxu0 %v3590
        %5544 = vmatprep.subr.bf16.mxu0 %v3595
        %5545 = vmatpush1.bf16.msra.mxu0 %v3594
        %5546 = vmatprep.mubr.bf16.mxu0 %v291
        %5547 = vmatmul.mubr.bf16.gmra.mrb[0].mxu0 %v290
        %v5548 = vpop.f32.mrb[0].mxu0
        %v5549 = vadd.f32 %v5508, %v5548
        %v5550 = vpop.f32.mrb[0].mxu0
        %v5551 = vadd.f32 %v5510, %v5550
        %v5552 = vpop.f32.mrb[0].mxu0
        %v5553 = vpop.f32.mrb[0].mxu0
        %5554 = vdwg.mxu0
        %5555 = vmatprep.subr.bf16.mxu0 %v3599
        %5556 = vmatpush1.bf16.msra.mxu0 %v3598
        %5557 = vmatprep.subr.bf16.mxu0 %v3603
        %5558 = vmatpush1.bf16.msra.mxu0 %v3602
        %5559 = vmatprep.subr.bf16.mxu0 %v3607
        %5560 = vmatpush1.bf16.msra.mxu0 %v3606
        %5561 = vmatprep.subr.bf16.mxu0 %v3611
        %5562 = vmatpush1.bf16.msra.mxu0 %v3610
        %5563 = vmatprep.subr.bf16.mxu0 %v3615
        %5564 = vmatpush1.bf16.msra.mxu0 %v3614
        %5565 = vmatprep.subr.bf16.mxu0 %v3619
        %5566 = vmatpush1.bf16.msra.mxu0 %v3618
        %5567 = vmatprep.subr.bf16.mxu0 %v3623
        %5568 = vmatpush1.bf16.msra.mxu0 %v3622
        %5569 = vmatprep.subr.bf16.mxu0 %v3627
        %5570 = vmatpush1.bf16.msra.mxu0 %v3626
        %5571 = vmatprep.subr.bf16.mxu0 %v3631
        %5572 = vmatpush1.bf16.msra.mxu0 %v3630
        %5573 = vmatprep.subr.bf16.mxu0 %v3635
        %5574 = vmatpush1.bf16.msra.mxu0 %v3634
        %5575 = vmatprep.subr.bf16.mxu0 %v3639
        %5576 = vmatpush1.bf16.msra.mxu0 %v3638
        %5577 = vmatprep.subr.bf16.mxu0 %v3643
        %5578 = vmatpush1.bf16.msra.mxu0 %v3642
        %5579 = vmatprep.subr.bf16.mxu0 %v3647
        %5580 = vmatpush1.bf16.msra.mxu0 %v3646
        %5581 = vmatprep.subr.bf16.mxu0 %v3651
        %5582 = vmatpush1.bf16.msra.mxu0 %v3650
        %5583 = vmatprep.subr.bf16.mxu0 %v3655
        %5584 = vmatpush1.bf16.msra.mxu0 %v3654
        %5585 = vmatprep.subr.bf16.mxu0 %v3659
        %5586 = vmatpush1.bf16.msra.mxu0 %v3658
        %5587 = vmatprep.mubr.bf16.mxu0 %v293
        %5588 = vmatmul.mubr.bf16.gmra.mrb[0].mxu0 %v292
        %v5589 = vpop.f32.mrb[0].mxu0
        %v5590 = vadd.f32 %v5549, %v5589
        %v5591 = vpop.f32.mrb[0].mxu0
        %v5592 = vadd.f32 %v5551, %v5591
        %v5593 = vpop.f32.mrb[0].mxu0
        %v5594 = vpop.f32.mrb[0].mxu0
        %5595 = vdwg.mxu0
        %5596 = vmatprep.subr.bf16.mxu0 %v3663
        %5597 = vmatpush1.bf16.msra.mxu0 %v3662
        %5598 = vmatprep.subr.bf16.mxu0 %v3667
        %5599 = vmatpush1.bf16.msra.mxu0 %v3666
        %5600 = vmatprep.subr.bf16.mxu0 %v3671
        %5601 = vmatpush1.bf16.msra.mxu0 %v3670
        %5602 = vmatprep.subr.bf16.mxu0 %v3675
        %5603 = vmatpush1.bf16.msra.mxu0 %v3674
        %5604 = vmatprep.subr.bf16.mxu0 %v3679
        %5605 = vmatpush1.bf16.msra.mxu0 %v3678
        %5606 = vmatprep.subr.bf16.mxu0 %v3683
        %5607 = vmatpush1.bf16.msra.mxu0 %v3682
        %5608 = vmatprep.subr.bf16.mxu0 %v3687
        %5609 = vmatpush1.bf16.msra.mxu0 %v3686
        %5610 = vmatprep.subr.bf16.mxu0 %v3691
        %5611 = vmatpush1.bf16.msra.mxu0 %v3690
        %5612 = vmatprep.subr.bf16.mxu0 %v3695
        %5613 = vmatpush1.bf16.msra.mxu0 %v3694
        %5614 = vmatprep.subr.bf16.mxu0 %v3699
        %5615 = vmatpush1.bf16.msra.mxu0 %v3698
        %5616 = vmatprep.subr.bf16.mxu0 %v3703
        %5617 = vmatpush1.bf16.msra.mxu0 %v3702
        %5618 = vmatprep.subr.bf16.mxu0 %v3707
        %5619 = vmatpush1.bf16.msra.mxu0 %v3706
        %5620 = vmatprep.subr.bf16.mxu0 %v3711
        %5621 = vmatpush1.bf16.msra.mxu0 %v3710
        %5622 = vmatprep.subr.bf16.mxu0 %v3715
        %5623 = vmatpush1.bf16.msra.mxu0 %v3714
        %5624 = vmatprep.subr.bf16.mxu0 %v3719
        %5625 = vmatpush1.bf16.msra.mxu0 %v3718
        %5626 = vmatprep.subr.bf16.mxu0 %v3723
        %5627 = vmatpush1.bf16.msra.mxu0 %v3722
        %5628 = vmatprep.mubr.bf16.mxu0 %v295
        %5629 = vmatmul.mubr.bf16.gmra.mrb[0].mxu0 %v294
        %v5630 = vpop.f32.mrb[0].mxu0
        %v5631 = vadd.f32 %v5590, %v5630
        %v5632 = vpop.f32.mrb[0].mxu0
        %v5633 = vadd.f32 %v5592, %v5632
        %v5634 = vpop.f32.mrb[0].mxu0
        %v5635 = vpop.f32.mrb[0].mxu0
        %5636 = vdwg.mxu0
        %5637 = vmatprep.subr.bf16.mxu0 %v3727
        %5638 = vmatpush1.bf16.msra.mxu0 %v3726
        %5639 = vmatprep.subr.bf16.mxu0 %v3731
        %5640 = vmatpush1.bf16.msra.mxu0 %v3730
        %5641 = vmatprep.subr.bf16.mxu0 %v3735
        %5642 = vmatpush1.bf16.msra.mxu0 %v3734
        %5643 = vmatprep.subr.bf16.mxu0 %v3739
        %5644 = vmatpush1.bf16.msra.mxu0 %v3738
        %5645 = vmatprep.subr.bf16.mxu0 %v3743
        %5646 = vmatpush1.bf16.msra.mxu0 %v3742
        %5647 = vmatprep.subr.bf16.mxu0 %v3747
        %5648 = vmatpush1.bf16.msra.mxu0 %v3746
        %5649 = vmatprep.subr.bf16.mxu0 %v3751
        %5650 = vmatpush1.bf16.msra.mxu0 %v3750
        %5651 = vmatprep.subr.bf16.mxu0 %v3755
        %5652 = vmatpush1.bf16.msra.mxu0 %v3754
        %5653 = vmatprep.subr.bf16.mxu0 %v3759
        %5654 = vmatpush1.bf16.msra.mxu0 %v3758
        %5655 = vmatprep.subr.bf16.mxu0 %v3763
        %5656 = vmatpush1.bf16.msra.mxu0 %v3762
        %5657 = vmatprep.subr.bf16.mxu0 %v3767
        %5658 = vmatpush1.bf16.msra.mxu0 %v3766
        %5659 = vmatprep.subr.bf16.mxu0 %v3771
        %5660 = vmatpush1.bf16.msra.mxu0 %v3770
        %5661 = vmatprep.subr.bf16.mxu0 %v3775
        %5662 = vmatpush1.bf16.msra.mxu0 %v3774
        %5663 = vmatprep.subr.bf16.mxu0 %v3779
        %5664 = vmatpush1.bf16.msra.mxu0 %v3778
        %5665 = vmatprep.subr.bf16.mxu0 %v3783
        %5666 = vmatpush1.bf16.msra.mxu0 %v3782
        %5667 = vmatprep.subr.bf16.mxu0 %v3787
        %5668 = vmatpush1.bf16.msra.mxu0 %v3786
        %5669 = vmatprep.mubr.bf16.mxu0 %v297
        %5670 = vmatmul.mubr.bf16.gmra.mrb[0].mxu0 %v296
        %v5671 = vpop.f32.mrb[0].mxu0
        %v5672 = vadd.f32 %v5631, %v5671
        %v5673 = vpop.f32.mrb[0].mxu0
        %v5674 = vadd.f32 %v5633, %v5673
        %v5675 = vpop.f32.mrb[0].mxu0
        %v5676 = vpop.f32.mrb[0].mxu0
        %5677 = vdwg.mxu0
        %5678 = vmatprep.subr.bf16.mxu0 %v3791
        %5679 = vmatpush1.bf16.msra.mxu0 %v3790
        %5680 = vmatprep.subr.bf16.mxu0 %v3795
        %5681 = vmatpush1.bf16.msra.mxu0 %v3794
        %5682 = vmatprep.subr.bf16.mxu0 %v3799
        %5683 = vmatpush1.bf16.msra.mxu0 %v3798
        %5684 = vmatprep.subr.bf16.mxu0 %v3803
        %5685 = vmatpush1.bf16.msra.mxu0 %v3802
        %5686 = vmatprep.subr.bf16.mxu0 %v3807
        %5687 = vmatpush1.bf16.msra.mxu0 %v3806
        %5688 = vmatprep.subr.bf16.mxu0 %v3811
        %5689 = vmatpush1.bf16.msra.mxu0 %v3810
        %5690 = vmatprep.subr.bf16.mxu0 %v3815
        %5691 = vmatpush1.bf16.msra.mxu0 %v3814
        %5692 = vmatprep.subr.bf16.mxu0 %v3819
        %5693 = vmatpush1.bf16.msra.mxu0 %v3818
        %5694 = vmatprep.subr.bf16.mxu0 %v3823
        %5695 = vmatpush1.bf16.msra.mxu0 %v3822
        %5696 = vmatprep.subr.bf16.mxu0 %v3827
        %5697 = vmatpush1.bf16.msra.mxu0 %v3826
        %5698 = vmatprep.subr.bf16.mxu0 %v3831
        %5699 = vmatpush1.bf16.msra.mxu0 %v3830
        %5700 = vmatprep.subr.bf16.mxu0 %v3835
        %5701 = vmatpush1.bf16.msra.mxu0 %v3834
        %5702 = vmatprep.subr.bf16.mxu0 %v3839
        %5703 = vmatpush1.bf16.msra.mxu0 %v3838
        %5704 = vmatprep.subr.bf16.mxu0 %v3843
        %5705 = vmatpush1.bf16.msra.mxu0 %v3842
        %5706 = vmatprep.subr.bf16.mxu0 %v3847
        %5707 = vmatpush1.bf16.msra.mxu0 %v3846
        %5708 = vmatprep.subr.bf16.mxu0 %v3851
        %5709 = vmatpush1.bf16.msra.mxu0 %v3850
        %5710 = vmatprep.mubr.bf16.mxu0 %v299
        %5711 = vmatmul.mubr.bf16.gmra.mrb[0].mxu0 %v298
        %v5712 = vpop.f32.mrb[0].mxu0
        %v5713 = vadd.f32 %v5672, %v5712
        %v5714 = vpop.f32.mrb[0].mxu0
        %v5715 = vadd.f32 %v5674, %v5714
        %v5716 = vpop.f32.mrb[0].mxu0
        %v5717 = vpop.f32.mrb[0].mxu0
        %5718 = vdwg.mxu0
        %5719 = vmatprep.subr.bf16.mxu0 %v3855
        %5720 = vmatpush1.bf16.msra.mxu0 %v3854
        %5721 = vmatprep.subr.bf16.mxu0 %v3859
        %5722 = vmatpush1.bf16.msra.mxu0 %v3858
        %5723 = vmatprep.subr.bf16.mxu0 %v3863
        %5724 = vmatpush1.bf16.msra.mxu0 %v3862
        %5725 = vmatprep.subr.bf16.mxu0 %v3867
        %5726 = vmatpush1.bf16.msra.mxu0 %v3866
        %5727 = vmatprep.subr.bf16.mxu0 %v3871
        %5728 = vmatpush1.bf16.msra.mxu0 %v3870
        %5729 = vmatprep.subr.bf16.mxu0 %v3875
        %5730 = vmatpush1.bf16.msra.mxu0 %v3874
        %5731 = vmatprep.subr.bf16.mxu0 %v3879
        %5732 = vmatpush1.bf16.msra.mxu0 %v3878
        %5733 = vmatprep.subr.bf16.mxu0 %v3883
        %5734 = vmatpush1.bf16.msra.mxu0 %v3882
        %5735 = vmatprep.subr.bf16.mxu0 %v3887
        %5736 = vmatpush1.bf16.msra.mxu0 %v3886
        %5737 = vmatprep.subr.bf16.mxu0 %v3891
        %5738 = vmatpush1.bf16.msra.mxu0 %v3890
        %5739 = vmatprep.subr.bf16.mxu0 %v3895
        %5740 = vmatpush1.bf16.msra.mxu0 %v3894
        %5741 = vmatprep.subr.bf16.mxu0 %v3899
        %5742 = vmatpush1.bf16.msra.mxu0 %v3898
        %5743 = vmatprep.subr.bf16.mxu0 %v3903
        %5744 = vmatpush1.bf16.msra.mxu0 %v3902
        %5745 = vmatprep.subr.bf16.mxu0 %v3907
        %5746 = vmatpush1.bf16.msra.mxu0 %v3906
        %5747 = vmatprep.subr.bf16.mxu0 %v3911
        %5748 = vmatpush1.bf16.msra.mxu0 %v3910
        %5749 = vmatprep.subr.bf16.mxu0 %v3915
        %5750 = vmatpush1.bf16.msra.mxu0 %v3914
        %5751 = vmatprep.mubr.bf16.mxu0 %v301
        %5752 = vmatmul.mubr.bf16.gmra.mrb[0].mxu0 %v300
        %v5753 = vpop.f32.mrb[0].mxu0
        %v5754 = vadd.f32 %v5713, %v5753
        %v5755 = vpop.f32.mrb[0].mxu0
        %v5756 = vadd.f32 %v5715, %v5755
        %v5757 = vpop.f32.mrb[0].mxu0
        %v5758 = vpop.f32.mrb[0].mxu0
        %5759 = vdwg.mxu0
        %5760 = vmatprep.subr.bf16.mxu0 %v3919
        %5761 = vmatpush1.bf16.msra.mxu0 %v3918
        %5762 = vmatprep.subr.bf16.mxu0 %v3923
        %5763 = vmatpush1.bf16.msra.mxu0 %v3922
        %5764 = vmatprep.subr.bf16.mxu0 %v3927
        %5765 = vmatpush1.bf16.msra.mxu0 %v3926
        %5766 = vmatprep.subr.bf16.mxu0 %v3931
        %5767 = vmatpush1.bf16.msra.mxu0 %v3930
        %5768 = vmatprep.subr.bf16.mxu0 %v3935
        %5769 = vmatpush1.bf16.msra.mxu0 %v3934
        %5770 = vmatprep.subr.bf16.mxu0 %v3939
        %5771 = vmatpush1.bf16.msra.mxu0 %v3938
        %5772 = vmatprep.subr.bf16.mxu0 %v3943
        %5773 = vmatpush1.bf16.msra.mxu0 %v3942
        %5774 = vmatprep.subr.bf16.mxu0 %v3947
        %5775 = vmatpush1.bf16.msra.mxu0 %v3946
        %5776 = vmatprep.subr.bf16.mxu0 %v3951
        %5777 = vmatpush1.bf16.msra.mxu0 %v3950
        %5778 = vmatprep.subr.bf16.mxu0 %v3955
        %5779 = vmatpush1.bf16.msra.mxu0 %v3954
        %5780 = vmatprep.subr.bf16.mxu0 %v3959
        %5781 = vmatpush1.bf16.msra.mxu0 %v3958
        %5782 = vmatprep.subr.bf16.mxu0 %v3963
        %5783 = vmatpush1.bf16.msra.mxu0 %v3962
        %5784 = vmatprep.subr.bf16.mxu0 %v3967
        %5785 = vmatpush1.bf16.msra.mxu0 %v3966
        %5786 = vmatprep.subr.bf16.mxu0 %v3971
        %5787 = vmatpush1.bf16.msra.mxu0 %v3970
        %5788 = vmatprep.subr.bf16.mxu0 %v3975
        %5789 = vmatpush1.bf16.msra.mxu0 %v3974
        %5790 = vmatprep.subr.bf16.mxu0 %v3979
        %5791 = vmatpush1.bf16.msra.mxu0 %v3978
        %5792 = vmatprep.mubr.bf16.mxu0 %v303
        %5793 = vmatmul.mubr.bf16.gmra.mrb[0].mxu0 %v302
        %v5794 = vpop.f32.mrb[0].mxu0
        %v5795 = vadd.f32 %v5754, %v5794
        %v5796 = vpop.f32.mrb[0].mxu0
        %v5797 = vadd.f32 %v5756, %v5796
        %v5798 = vpop.f32.mrb[0].mxu0
        %v5799 = vpop.f32.mrb[0].mxu0
        %5800 = vdwg.mxu0
        %5801 = vmatprep.subr.bf16.mxu0 %v3983
        %5802 = vmatpush1.bf16.msra.mxu0 %v3982
        %5803 = vmatprep.subr.bf16.mxu0 %v3987
        %5804 = vmatpush1.bf16.msra.mxu0 %v3986
        %5805 = vmatprep.subr.bf16.mxu0 %v3991
        %5806 = vmatpush1.bf16.msra.mxu0 %v3990
        %5807 = vmatprep.subr.bf16.mxu0 %v3995
        %5808 = vmatpush1.bf16.msra.mxu0 %v3994
        %5809 = vmatprep.subr.bf16.mxu0 %v3999
        %5810 = vmatpush1.bf16.msra.mxu0 %v3998
        %5811 = vmatprep.subr.bf16.mxu0 %v4003
        %5812 = vmatpush1.bf16.msra.mxu0 %v4002
        %5813 = vmatprep.subr.bf16.mxu0 %v4007
        %5814 = vmatpush1.bf16.msra.mxu0 %v4006
        %5815 = vmatprep.subr.bf16.mxu0 %v4011
        %5816 = vmatpush1.bf16.msra.mxu0 %v4010
        %5817 = vmatprep.subr.bf16.mxu0 %v4015
        %5818 = vmatpush1.bf16.msra.mxu0 %v4014
        %5819 = vmatprep.subr.bf16.mxu0 %v4019
        %5820 = vmatpush1.bf16.msra.mxu0 %v4018
        %5821 = vmatprep.subr.bf16.mxu0 %v4023
        %5822 = vmatpush1.bf16.msra.mxu0 %v4022
        %5823 = vmatprep.subr.bf16.mxu0 %v4027
        %5824 = vmatpush1.bf16.msra.mxu0 %v4026
        %5825 = vmatprep.subr.bf16.mxu0 %v4031
        %5826 = vmatpush1.bf16.msra.mxu0 %v4030
        %5827 = vmatprep.subr.bf16.mxu0 %v4035
        %5828 = vmatpush1.bf16.msra.mxu0 %v4034
        %5829 = vmatprep.subr.bf16.mxu0 %v4039
        %5830 = vmatpush1.bf16.msra.mxu0 %v4038
        %5831 = vmatprep.subr.bf16.mxu0 %v4043
        %5832 = vmatpush1.bf16.msra.mxu0 %v4042
        %5833 = vmatprep.mubr.bf16.mxu0 %v305
        %5834 = vmatmul.mubr.bf16.gmra.mrb[0].mxu0 %v304
        %v5835 = vpop.f32.mrb[0].mxu0
        %v5836 = vadd.f32 %v5795, %v5835
        %v5837 = vpop.f32.mrb[0].mxu0
        %v5838 = vadd.f32 %v5797, %v5837
        %v5839 = vpop.f32.mrb[0].mxu0
        %v5840 = vpop.f32.mrb[0].mxu0
        %5841 = vdwg.mxu0
        %5842 = vmatprep.subr.bf16.mxu0 %v4047
        %5843 = vmatpush1.bf16.msra.mxu0 %v4046
        %5844 = vmatprep.subr.bf16.mxu0 %v4051
        %5845 = vmatpush1.bf16.msra.mxu0 %v4050
        %5846 = vmatprep.subr.bf16.mxu0 %v4055
        %5847 = vmatpush1.bf16.msra.mxu0 %v4054
        %5848 = vmatprep.subr.bf16.mxu0 %v4059
        %5849 = vmatpush1.bf16.msra.mxu0 %v4058
        %5850 = vmatprep.subr.bf16.mxu0 %v4063
        %5851 = vmatpush1.bf16.msra.mxu0 %v4062
        %5852 = vmatprep.subr.bf16.mxu0 %v4067
        %5853 = vmatpush1.bf16.msra.mxu0 %v4066
        %5854 = vmatprep.subr.bf16.mxu0 %v4071
        %5855 = vmatpush1.bf16.msra.mxu0 %v4070
        %5856 = vmatprep.subr.bf16.mxu0 %v4075
        %5857 = vmatpush1.bf16.msra.mxu0 %v4074
        %5858 = vmatprep.subr.bf16.mxu0 %v4079
        %5859 = vmatpush1.bf16.msra.mxu0 %v4078
        %5860 = vmatprep.subr.bf16.mxu0 %v4083
        %5861 = vmatpush1.bf16.msra.mxu0 %v4082
        %5862 = vmatprep.subr.bf16.mxu0 %v4087
        %5863 = vmatpush1.bf16.msra.mxu0 %v4086
        %5864 = vmatprep.subr.bf16.mxu0 %v4091
        %5865 = vmatpush1.bf16.msra.mxu0 %v4090
        %5866 = vmatprep.subr.bf16.mxu0 %v4095
        %5867 = vmatpush1.bf16.msra.mxu0 %v4094
        %5868 = vmatprep.subr.bf16.mxu0 %v4099
        %5869 = vmatpush1.bf16.msra.mxu0 %v4098
        %5870 = vmatprep.subr.bf16.mxu0 %v4103
        %5871 = vmatpush1.bf16.msra.mxu0 %v4102
        %5872 = vmatprep.subr.bf16.mxu0 %v4107
        %5873 = vmatpush1.bf16.msra.mxu0 %v4106
        %5874 = vmatprep.mubr.bf16.mxu0 %v307
        %5875 = vmatmul.mubr.bf16.gmra.mrb[0].mxu0 %v306
        %v5876 = vpop.f32.mrb[0].mxu0
        %v5877 = vadd.f32 %v5836, %v5876
        %v5878 = vpop.f32.mrb[0].mxu0
        %v5879 = vadd.f32 %v5838, %v5878
        %v5880 = vpop.f32.mrb[0].mxu0
        %v5881 = vpop.f32.mrb[0].mxu0
        %5882 = vdwg.mxu0
        %5883 = vmatprep.subr.bf16.mxu0 %v4111
        %5884 = vmatpush1.bf16.msra.mxu0 %v4110
        %5885 = vmatprep.subr.bf16.mxu0 %v4115
        %5886 = vmatpush1.bf16.msra.mxu0 %v4114
        %5887 = vmatprep.subr.bf16.mxu0 %v4119
        %5888 = vmatpush1.bf16.msra.mxu0 %v4118
        %5889 = vmatprep.subr.bf16.mxu0 %v4123
        %5890 = vmatpush1.bf16.msra.mxu0 %v4122
        %5891 = vmatprep.subr.bf16.mxu0 %v4127
        %5892 = vmatpush1.bf16.msra.mxu0 %v4126
        %5893 = vmatprep.subr.bf16.mxu0 %v4131
        %5894 = vmatpush1.bf16.msra.mxu0 %v4130
        %5895 = vmatprep.subr.bf16.mxu0 %v4135
        %5896 = vmatpush1.bf16.msra.mxu0 %v4134
        %5897 = vmatprep.subr.bf16.mxu0 %v4139
        %5898 = vmatpush1.bf16.msra.mxu0 %v4138
        %5899 = vmatprep.subr.bf16.mxu0 %v4143
        %5900 = vmatpush1.bf16.msra.mxu0 %v4142
        %5901 = vmatprep.subr.bf16.mxu0 %v4147
        %5902 = vmatpush1.bf16.msra.mxu0 %v4146
        %5903 = vmatprep.subr.bf16.mxu0 %v4151
        %5904 = vmatpush1.bf16.msra.mxu0 %v4150
        %5905 = vmatprep.subr.bf16.mxu0 %v4155
        %5906 = vmatpush1.bf16.msra.mxu0 %v4154
        %5907 = vmatprep.subr.bf16.mxu0 %v4159
        %5908 = vmatpush1.bf16.msra.mxu0 %v4158
        %5909 = vmatprep.subr.bf16.mxu0 %v4163
        %5910 = vmatpush1.bf16.msra.mxu0 %v4162
        %5911 = vmatprep.subr.bf16.mxu0 %v4167
        %5912 = vmatpush1.bf16.msra.mxu0 %v4166
        %5913 = vmatprep.subr.bf16.mxu0 %v4171
        %5914 = vmatpush1.bf16.msra.mxu0 %v4170
        %5915 = vmatprep.mubr.bf16.mxu0 %v309
        %5916 = vmatmul.mubr.bf16.gmra.mrb[0].mxu0 %v308
        %v5917 = vpop.f32.mrb[0].mxu0
        %v5918 = vadd.f32 %v5877, %v5917
        %v5919 = vpop.f32.mrb[0].mxu0
        %v5920 = vadd.f32 %v5879, %v5919
        %v5921 = vpop.f32.mrb[0].mxu0
        %v5922 = vpop.f32.mrb[0].mxu0
        %5923 = vdwg.mxu0
        %v5924 = vmax.f32 %v5426, 0.0
        %v5925 = vmax.f32 %v5428, 0.0
        %v5926 = vmax.f32 %v5918, 0.0
        %v5927 = vmax.f32 %v5920, 0.0
        %5928 = vst [vmem:[%s258] sm:$0xff] %v5924
        %5929 = vst [vmem:[%s258 + $0x8] sm:$0xff] %v5925
        %5930 = vst [vmem:[%s258 + $0x10] sm:$0xff] %v5926
        %5931 = vst [vmem:[%s258 + $0x18] sm:$0xff] %v5927
        %s5932 = sand.u32 %s121, 1
        %s5933 = scalar_lea.sflag [#allocation4], %s5932
        %s5934 = sand.u32 %s121, 1
        %s5935 = smul.addr %s5934, 32
        %s5936 = scalar_lea.vmem [#allocation8], %s5935
        // Predicated region
        $region45: #{tpu_custom_call.1} parent=31 // pred_check
          %p5937 = pneg %p131
        $region46: #{tpu_custom_call.1} parent=31 // pred_check_branch
          %5939 = sbr.rel (%p5937) target = $region48
        $region47: #{tpu_custom_call.1} parent=31 // pred_region
          %s5940 = smul.u32 4, %s26
          %s5942 = ssub.s32 512, 512
          %5943 = vsyncadd %s5933, %s5942
          %s5944 = smul.addr %s25, 16
          %s5945 = sadd.s32 %s5940, %s5944
          %s5946 = smul.addr %s5945, 128
          %s5947 = scalar_lea.hbm %s3, %s5946
          %s5949 = sshll.u32 %s5936, 4
          %s5950 = int_to_ptr.vmem [resolvable:$true] %s5949
          %5952 = dma.vmem_to_hbm [thread:$0]  %s5950, 512, %s5947, %s5933
        $region48: #{tpu_custom_call.1} parent=31 // pred_fallthru
          _
      $region32: #{tpu_custom_call.1} parent=5 // pred_fallthru
        _
      %p5953 = scmp.le.s32.totalorder 2, %s16
      // Predicated region
      $region49: #{tpu_custom_call.1} parent=5 // pred_check
        %p5954 = pneg %p5953
      $region50: #{tpu_custom_call.1} parent=5 // pred_check_branch
        %5956 = sbr.rel (%p5954) target = $region52
      $region51: #{tpu_custom_call.1} parent=5 // pred_region
        %s5957 = ssub.s32 %s16, 2
        // Predicated region
        $region53: #{tpu_custom_call.1} parent=51 // pred_check
          %p5958 = pneg %p137
        $region54: #{tpu_custom_call.1} parent=51 // pred_check_branch
          %5960 = sbr.rel (%p5958) target = $region56
        $region55: #{tpu_custom_call.1} parent=51 // pred_region
          %s5961 = sand.u32 %s122, 1
          %s5962 = scalar_lea.sflag [#allocation4], %s5961
          %s5963 = sand.u32 %s122, 1
          %s5964 = smul.addr %s5963, 32
          %s5965 = scalar_lea.vmem [#allocation8], %s5964
          %5966 = dma.done %s5962, 512
        $region56: #{tpu_custom_call.1} parent=51 // pred_fallthru
          _
      $region52: #{tpu_custom_call.1} parent=5 // pred_fallthru
        _
    $region6: #{tpu_custom_call.1} parent=1 // loop_footer
      %s20 = sadd.s32 1, %s16
    $region7: #{tpu_custom_call.1} parent=1 // loop_footer_branch
      %15 = sbr.rel target = $region3
    $region8: #{tpu_custom_call.1} parent=1 // loop_exit
      _
    %5967 = vsyncpa [#allocation3], 1
    %s5968 = scalar_lea.sflag [#allocation3], 1
    %5969 = vsyncpa %s5968, 1
    %5970 = vsyncpa [#allocation6], 1
    %s5971 = scalar_lea.sflag [#allocation6], 1
    %5972 = vsyncpa %s5971, 1
    %5973 = vsyncpa [#allocation4], 1
    %s5974 = scalar_lea.sflag [#allocation4], 1
    %5975 = vsyncpa %s5974, 1

</llo_original>
